<compile_context>
chip_gen: v5e
topology: v5e:2x2
jax: 0.10.0
libtpu: 0.0.40
codegen_flags: <defaults>
</compile_context>

<pallas_src>
import jax
import jax.numpy as jnp
from jax.experimental import pallas as pl
from jax.experimental.pallas import tpu as pltpu


# ------------------------------------------------------------------ helpers

def _round_up(x, m):
    return ((x + m - 1) // m) * m


def _pick_hidden_tile(H, E, Eo, vmem_budget_bytes=24 << 20):
    """Largest hidden tile whose double-buffered bf16 weight slices fit VMEM.

    Budget is conservative (24 MiB) so it is valid even on v7x's 32 MiB scoped
    default / 64 MiB physical VMEM; at default shapes (H=1024, E=Eo=512) this
    returns th == H and the reduction axis collapses to a single step.
    """
    def fits(th):
        return 2 * 2 * (E * th + th * Eo) <= vmem_budget_bytes  # 2 bufs x bf16
    if fits(H):
        return H
    for c in (4096, 2048, 1024, 512, 256, 128):
        if H % c == 0 and fits(c):
            return c
    return H  # tiny, non-128-aligned H: keep whole (full-array block is legal)


def _pick_eo_tile(Eo, n_batch_tiles):
    """Split output columns when the batch axis has a single tile so v7x's
    second TensorCore gets work (harmless on single-TC v5e/v6e)."""
    if n_batch_tiles == 1 and Eo % 256 == 0:
        return Eo // 2
    return Eo


# ------------------------------------------------------------------ kernel

def _predictor_kernel(e_ref, a_ref, w1e_ref, w1a_ref, b1_ref, w2_ref, b2_ref,
                      o_ref):
    """Grid step (i = batch tile, j = out-column tile, k = hidden tile).

    e:  (bm, E)   bf16     w1e: (E, th)   bf16     b1: (1, th)   f32
    a:  (bm, A)   bf16     w1a: (A, th)   bf16     w2: (th, teo) bf16
    b2: (1, teo)  f32      o:   (bm, teo) f32  (accumulated in place across k)
    """
    k = pl.program_id(2)

    @pl.when(k == 0)
    def _():
        o_ref[...] = jnp.zeros_like(o_ref)

    # linear1, embed part: MXU matmul with f32 accumulation.
    h = jnp.dot(e_ref[...], w1e_ref[...], preferred_element_type=jnp.float32)

    # linear1, action part: action_dim is tiny (2) -> unrolled VPU broadcast
    # instead of a degenerate K=2 matmul (this folds torch.cat into the kernel).
    a_f = a_ref[...].astype(jnp.float32)          # (bm, A)
    w1a_f = w1a_ref[...].astype(jnp.float32)      # (A, th)
    for t in range(a_f.shape[1]):
        h = h + a_f[:, t:t + 1] * w1a_f[t:t + 1, :]

    h = jnp.maximum(h + b1_ref[...], 0.0)         # bias + ReLU, f32 epilogue

    # linear2 partial product for this hidden tile, accumulated directly in the
    # output tile (VMEM-resident across k) -- no separate scratch accumulator.
    o_ref[...] += jnp.dot(h.astype(w2_ref.dtype), w2_ref[...],
                          preferred_element_type=jnp.float32)

    @pl.when(k == pl.num_programs(2) - 1)
    def _():
        o_ref[...] += b2_ref[...]


# ------------------------------------------------------------------ wrapper

def prepare_params(params, action_dim=2):
    """One-time re-layout of torch-style Linear params into kernel layout.

    Call once and cache the result; keeps the weight transpose / bf16 cast out
    of the per-call path.  torch layout: w1 (H, E+A), b1 (H,), w2 (Eo, H),
    b2 (Eo,).
    """
    w1, b1, w2, b2 = params['w1'], params['b1'], params['w2'], params['b2']
    H, EA = w1.shape
    E = EA - action_dim
    Eo = w2.shape[0]
    assert w2.shape[1] == H
    return {
        'w1e': jnp.transpose(w1[:, :E]).astype(jnp.bfloat16),   # (E, H)
        'w1a': jnp.transpose(w1[:, E:]).astype(jnp.bfloat16),   # (A, H)
        'b1': b1.reshape(1, H).astype(jnp.float32),
        'w2': jnp.transpose(w2).astype(jnp.bfloat16),            # (H, Eo)
        'b2': b2.reshape(1, Eo).astype(jnp.float32),
    }


def predictor_forward(prev_embed, action, kparams, *, batch_tile=256):
    """Predictorv2.forward: linear2(relu(linear1(cat(prev_embed, action))))."""
    w1e, w1a, b1 = kparams['w1e'], kparams['w1a'], kparams['b1']
    w2, b2 = kparams['w2'], kparams['b2']
    B, E = prev_embed.shape
    A = action.shape[1]
    H = w1e.shape[1]
    Eo = w2.shape[1]
    assert w1e.shape[0] == E and w1a.shape == (A, H) and w2.shape[0] == H

    # Batch tile: multiple of 16 sublanes (bf16 packs 16 rows per vreg), capped
    # at batch_tile (256 keeps the v6e/v7x 256x256 MXU full for large batches).
    bm = min(batch_tile, _round_up(B, 16))
    Bp = _round_up(B, bm)
    n_bt = Bp // bm

    th = _pick_hidden_tile(H, E, Eo)
    teo = _pick_eo_tile(Eo, n_bt)
    grid = (n_bt, Eo // teo, H // th)             # reduction (hidden) axis last

    e_p = jnp.zeros((Bp, E), jnp.bfloat16).at[:B].set(prev_embed.astype(jnp.bfloat16))
    a_p = jnp.zeros((Bp, A), jnp.bfloat16).at[:B].set(action.astype(jnp.bfloat16))

    cost = pl.CostEstimate(
        flops=2 * Bp * ((E + A) * H + H * Eo),
        transcendentals=0,
        bytes_accessed=(2 * (E * H + A * H + H * Eo)      # bf16 weights
                        + 4 * (H + Eo)                    # f32 biases
                        + 2 * Bp * (E + A)                # bf16 activations in
                        + 4 * Bp * Eo))                   # f32 output

    out = pl.pallas_call(
        _predictor_kernel,
        out_shape=jax.ShapeDtypeStruct((Bp, Eo), jnp.float32),
        grid_spec=pltpu.PrefetchScalarGridSpec(
            num_scalar_prefetch=0,
            grid=grid,
            in_specs=[
                pl.BlockSpec((bm, E), lambda i, j, k: (i, 0)),    # prev_embed tile
                pl.BlockSpec((bm, A), lambda i, j, k: (i, 0)),    # action tile
                pl.BlockSpec((E, th), lambda i, j, k: (0, k)),    # w1, embed part
                pl.BlockSpec((A, th), lambda i, j, k: (0, k)),    # w1, action part
                pl.BlockSpec((1, th), lambda i, j, k: (0, k)),    # b1 slice
                pl.BlockSpec((th, teo), lambda i, j, k: (k, j)),  # w2 block
                pl.BlockSpec((1, teo), lambda i, j, k: (0, j)),   # b2 slice
            ],
            out_specs=pl.BlockSpec((bm, teo), lambda i, j, k: (i, j)),
        ),
        compiler_params=pltpu.CompilerParams(
            dimension_semantics=("parallel", "parallel", "arbitrary")),
        cost_estimate=cost,
    )(e_p, a_p, w1e, w1a, b1, w2, b2)
    return out[:B]


# ------------------------------------------------------------------ params / demo

def init_params(key, hidden_dim=1024, embed_dim=512, action_dim=2):
    # torch nn.Linear default init (uniform +-1/sqrt(fan_in)), distinct keys.
    k1, k2, k3, k4 = jax.random.split(key, 4)
    in1 = embed_dim + action_dim
    lim1 = float(in1) ** -0.5
    lim2 = float(hidden_dim) ** -0.5
    return {
        'w1': jax.random.uniform(k1, (hidden_dim, in1), jnp.float32, -lim1, lim1),
        'b1': jax.random.uniform(k2, (hidden_dim,), jnp.float32, -lim1, lim1),
        'w2': jax.random.uniform(k3, (embed_dim, hidden_dim), jnp.float32, -lim2, lim2),
        'b2': jax.random.uniform(k4, (embed_dim,), jnp.float32, -lim2, lim2),
    }


if __name__ == "__main__":
    key = jax.random.PRNGKey(0)
    ke, ka, kp = jax.random.split(key, 3)

    # Module defaults: hidden_dim=1024, embed_dim=512, action_dim=2; small batch.
    B, H, E, A = 2, 1024, 512, 2
    params = init_params(kp, hidden_dim=H, embed_dim=E, action_dim=A)
    prev_embed = jax.random.normal(ke, (B, E), jnp.float32)   # set_init_embedding
    action = jax.random.normal(ka, (B, A), jnp.float32)

    # One-time weight re-layout, cached outside the per-call path.
    kparams = jax.block_until_ready(prepare_params(params, action_dim=A))

    fwd = jax.jit(predictor_forward)
    out = jax.block_until_ready(fwd(prev_embed, action, kparams))
    assert out.shape == (B, E) and out.dtype == jnp.float32

    # Pure-JAX f32 reference; tolerance accounts for bf16 matmul operands.
    x = jnp.concatenate([prev_embed, action], axis=1)
    h = jnp.maximum(x @ params['w1'].T + params['b1'], 0.0)
    ref = h @ params['w2'].T + params['b2']
    rel_err = jnp.max(jnp.abs(out - ref)) / (jnp.max(jnp.abs(ref)) + 1e-6)
    assert float(rel_err) < 2e-2, f"max relative error {float(rel_err)}"

    print("KERNEL_OK")
</pallas_src>

<mosaic_0001>
module attributes {stable_mosaic.version = 11 : i64} {
  func.func @_predictor_kernel(%arg0: i32, %arg1: i32, %arg2: i32, %arg3: memref<16x512xbf16, #tpu.memory_space<vmem>>, %arg4: memref<16x2xbf16, #tpu.memory_space<vmem>>, %arg5: memref<512x1024xbf16, #tpu.memory_space<vmem>>, %arg6: memref<2x1024xbf16, #tpu.memory_space<vmem>>, %arg7: memref<1x1024xf32, #tpu.memory_space<vmem>>, %arg8: memref<1024x256xbf16, #tpu.memory_space<vmem>>, %arg9: memref<1x256xf32, #tpu.memory_space<vmem>>, %arg10: memref<16x256xf32, #tpu.memory_space<vmem>>) attributes {dimension_semantics = [#tpu.dimension_semantics<parallel>, #tpu.dimension_semantics<parallel>, #tpu.dimension_semantics<arbitrary>], iteration_bounds = array<i64: 1, 2, 1>, scalar_prefetch = 0 : i64, scratch_operands = 0 : i64, tpu.core_type = #tpu.core_type<tc>, window_params = [{transform_indices = @transform_0, window_bounds = array<i64: 16, 512>}, {transform_indices = @transform_1, window_bounds = array<i64: 16, 2>}, {transform_indices = @transform_2, window_bounds = array<i64: 512, 1024>}, {transform_indices = @transform_3, window_bounds = array<i64: 2, 1024>}, {transform_indices = @transform_4, window_bounds = array<i64: 1, 1024>}, {transform_indices = @transform_5, window_bounds = array<i64: 1024, 256>}, {transform_indices = @transform_6, window_bounds = array<i64: 1, 256>}, {transform_indices = @transform_7, window_bounds = array<i64: 16, 256>}]} {
    %c0_i32 = arith.constant 0 : i32
    %0 = arith.cmpi eq, %arg2, %c0_i32 : i32
    %1 = arith.extui %0 : i1 to i32
    %c0_i32_0 = arith.constant 0 : i32
    %2 = arith.cmpi ne, %1, %c0_i32_0 : i32
    scf.if %2 {
      %cst_20 = arith.constant 0.000000e+00 : f32
      %36 = vector.broadcast %cst_20 : f32 to vector<16x256xf32>
      %c0_21 = arith.constant 0 : index
      %c0_22 = arith.constant 0 : index
      %37 = vector.load %arg10[%c0_21, %c0_22] : memref<16x256xf32, #tpu.memory_space<vmem>>, vector<16x256xf32>
      tpu.vector_store %arg10[%c0_21, %c0_22], %36 {strides = array<i32>} : memref<16x256xf32, #tpu.memory_space<vmem>>, vector<16x256xf32>,
    } else {
    }
    %c0 = arith.constant 0 : index
    %c0_1 = arith.constant 0 : index
    %3 = vector.load %arg3[%c0, %c0_1] : memref<16x512xbf16, #tpu.memory_space<vmem>>, vector<16x512xbf16>
    %c0_2 = arith.constant 0 : index
    %c0_3 = arith.constant 0 : index
    %4 = vector.load %arg5[%c0_2, %c0_3] : memref<512x1024xbf16, #tpu.memory_space<vmem>>, vector<512x1024xbf16>
    %cst = arith.constant dense<0.000000e+00> : vector<16x1024xf32>
    %5 = tpu.matmul %3, %4, %cst {dimension_numbers = #tpu.dot_dimension_numbers<[1], [0], [0], [1], [0, 0, 1, 1], [], []>} : vector<16x512xbf16>, vector<512x1024xbf16>, vector<16x1024xf32> -> vector<16x1024xf32>
    %c0_4 = arith.constant 0 : index
    %c0_5 = arith.constant 0 : index
    %6 = vector.load %arg4[%c0_4, %c0_5] : memref<16x2xbf16, #tpu.memory_space<vmem>>, vector<16x2xbf16>
    %7 = arith.extf %6 : vector<16x2xbf16> to vector<16x2xf32>
    %c0_6 = arith.constant 0 : index
    %c0_7 = arith.constant 0 : index
    %8 = vector.load %arg6[%c0_6, %c0_7] : memref<2x1024xbf16, #tpu.memory_space<vmem>>, vector<2x1024xbf16>
    %9 = arith.extf %8 : vector<2x1024xbf16> to vector<2x1024xf32>
    %10 = vector.extract_strided_slice %7 {offsets = [0, 0], sizes = [16, 1], strides = [1, 1]} : vector<16x2xf32> to vector<16x1xf32>
    %11 = vector.extract_strided_slice %9 {offsets = [0, 0], sizes = [1, 1024], strides = [1, 1]} : vector<2x1024xf32> to vector<1x1024xf32>
    %12 = vector.broadcast %10 : vector<16x1xf32> to vector<16x1024xf32>
    %13 = vector.broadcast %11 : vector<1x1024xf32> to vector<16x1024xf32>
    %14 = arith.mulf %12, %13 : vector<16x1024xf32>
    %15 = arith.addf %5, %14 : vector<16x1024xf32>
    %16 = vector.extract_strided_slice %7 {offsets = [0, 1], sizes = [16, 1], strides = [1, 1]} : vector<16x2xf32> to vector<16x1xf32>
    %17 = vector.extract_strided_slice %9 {offsets = [1, 0], sizes = [1, 1024], strides = [1, 1]} : vector<2x1024xf32> to vector<1x1024xf32>
    %18 = vector.broadcast %16 : vector<16x1xf32> to vector<16x1024xf32>
    %19 = vector.broadcast %17 : vector<1x1024xf32> to vector<16x1024xf32>
    %20 = arith.mulf %18, %19 : vector<16x1024xf32>
    %21 = arith.addf %15, %20 : vector<16x1024xf32>
    %c0_8 = arith.constant 0 : index
    %c0_9 = arith.constant 0 : index
    %22 = vector.load %arg7[%c0_8, %c0_9] : memref<1x1024xf32, #tpu.memory_space<vmem>>, vector<1x1024xf32>
    %23 = vector.broadcast %22 : vector<1x1024xf32> to vector<16x1024xf32>
    %24 = arith.addf %21, %23 : vector<16x1024xf32>
    %cst_10 = arith.constant 0.000000e+00 : f32
    %25 = vector.broadcast %cst_10 : f32 to vector<16x1024xf32>
    %26 = arith.maximumf %24, %25 : vector<16x1024xf32>
    %c0_11 = arith.constant 0 : index
    %c0_12 = arith.constant 0 : index
    %27 = vector.load %arg10[%c0_11, %c0_12] : memref<16x256xf32, #tpu.memory_space<vmem>>, vector<16x256xf32>
    %28 = arith.truncf %26 : vector<16x1024xf32> to vector<16x1024xbf16>
    %c0_13 = arith.constant 0 : index
    %c0_14 = arith.constant 0 : index
    %29 = vector.load %arg8[%c0_13, %c0_14] : memref<1024x256xbf16, #tpu.memory_space<vmem>>, vector<1024x256xbf16>
    %cst_15 = arith.constant dense<0.000000e+00> : vector<16x256xf32>
    %30 = tpu.matmul %28, %29, %cst_15 {dimension_numbers = #tpu.dot_dimension_numbers<[1], [0], [0], [1], [0, 0, 1, 1], [], []>} : vector<16x1024xbf16>, vector<1024x256xbf16>, vector<16x256xf32> -> vector<16x256xf32>
    %31 = arith.addf %27, %30 : vector<16x256xf32>
    %c0_16 = arith.constant 0 : index
    %c0_17 = arith.constant 0 : index
    %32 = vector.load %arg10[%c0_16, %c0_17] : memref<16x256xf32, #tpu.memory_space<vmem>>, vector<16x256xf32>
    tpu.vector_store %arg10[%c0_16, %c0_17], %31 {strides = array<i32>} : memref<16x256xf32, #tpu.memory_space<vmem>>, vector<16x256xf32>,
    %c0_i32_18 = arith.constant 0 : i32
    %33 = arith.cmpi eq, %arg2, %c0_i32_18 : i32
    %34 = arith.extui %33 : i1 to i32
    %c0_i32_19 = arith.constant 0 : i32
    %35 = arith.cmpi ne, %34, %c0_i32_19 : i32
    scf.if %35 {
      %c0_20 = arith.constant 0 : index
      %c0_21 = arith.constant 0 : index
      %36 = vector.load %arg10[%c0_20, %c0_21] : memref<16x256xf32, #tpu.memory_space<vmem>>, vector<16x256xf32>
      %c0_22 = arith.constant 0 : index
      %c0_23 = arith.constant 0 : index
      %37 = vector.load %arg9[%c0_22, %c0_23] : memref<1x256xf32, #tpu.memory_space<vmem>>, vector<1x256xf32>
      %38 = vector.broadcast %37 : vector<1x256xf32> to vector<16x256xf32>
      %39 = arith.addf %36, %38 : vector<16x256xf32>
      %c0_24 = arith.constant 0 : index
      %c0_25 = arith.constant 0 : index
      %40 = vector.load %arg10[%c0_24, %c0_25] : memref<16x256xf32, #tpu.memory_space<vmem>>, vector<16x256xf32>
      tpu.vector_store %arg10[%c0_24, %c0_25], %39 {strides = array<i32>} : memref<16x256xf32, #tpu.memory_space<vmem>>, vector<16x256xf32>,
    } else {
    }
    return
  }
  func.func @transform_0(%arg0: i32, %arg1: i32, %arg2: i32) -> (i32, i32) {
    %c0_i32 = arith.constant 0 : i32
    %c0_i32_0 = arith.constant 0 : i32
    return %arg0, %c0_i32 : i32, i32
  }
  func.func @transform_1(%arg0: i32, %arg1: i32, %arg2: i32) -> (i32, i32) {
    %c0_i32 = arith.constant 0 : i32
    %c0_i32_0 = arith.constant 0 : i32
    return %arg0, %c0_i32 : i32, i32
  }
  func.func @transform_2(%arg0: i32, %arg1: i32, %arg2: i32) -> (i32, i32) {
    %c0_i32 = arith.constant 0 : i32
    %c0_i32_0 = arith.constant 0 : i32
    return %c0_i32, %arg2 : i32, i32
  }
  func.func @transform_3(%arg0: i32, %arg1: i32, %arg2: i32) -> (i32, i32) {
    %c0_i32 = arith.constant 0 : i32
    %c0_i32_0 = arith.constant 0 : i32
    return %c0_i32, %arg2 : i32, i32
  }
  func.func @transform_4(%arg0: i32, %arg1: i32, %arg2: i32) -> (i32, i32) {
    %c0_i32 = arith.constant 0 : i32
    %c0_i32_0 = arith.constant 0 : i32
    return %c0_i32, %arg2 : i32, i32
  }
  func.func @transform_5(%arg0: i32, %arg1: i32, %arg2: i32) -> (i32, i32) {
    %c0_i32 = arith.constant 0 : i32
    return %arg2, %arg1 : i32, i32
  }
  func.func @transform_6(%arg0: i32, %arg1: i32, %arg2: i32) -> (i32, i32) {
    %c0_i32 = arith.constant 0 : i32
    %c0_i32_0 = arith.constant 0 : i32
    return %c0_i32, %arg1 : i32, i32
  }
  func.func @transform_7(%arg0: i32, %arg1: i32, %arg2: i32) -> (i32, i32) {
    %c0_i32 = arith.constant 0 : i32
    return %arg0, %arg1 : i32, i32
  }
}

</mosaic_0001>

<llo_original>
// kernel: predictor_forward.1
$region0: #{predictor_forward.1}
  #allocation0 [shape = 'u32[]', space=smem, size = 0x4, offset = 0x4, fixed_abs, tag = 'smem constant byte address 0x4 - core index']
  #allocation1 [shape = 'u32[72,128]{1,0:T(1,128)}', space=vmem, size = 0x9000, scoped, tag = 'internal scratch']
  %s0 = inlined_call_operand.vmem [shape: bf16[16,512], index: 0, kind: input, shape index: {}]
  %s1 = inlined_call_operand.vmem [shape: bf16[16,2], index: 1, kind: input, shape index: {}]
  %s2 = inlined_call_operand.hbm [shape: bf16[512,1024], index: 2, kind: input, shape index: {}]
  %s3 = inlined_call_operand.vmem [shape: bf16[2,1024], index: 3, kind: input, shape index: {}]
  %s4 = inlined_call_operand.vmem [shape: f32[1,1024], index: 4, kind: input, shape index: {}]
  %s5 = inlined_call_operand.hbm [shape: bf16[1024,512], index: 5, kind: input, shape index: {}]
  %s6 = inlined_call_operand.vmem [shape: f32[1,512], index: 6, kind: input, shape index: {}]
  %s7 = inlined_call_operand.vmem [shape: f32[16,512], index: 7, kind: output, shape index: {}]
  %s8 = sld [smem:[#allocation0]]
  $region96: #{predictor_forward.1} parent=0
    _
  %s10 = ssub.s32 1, %s8
  %s11 = scalar_select 0, %s10, %s8
  $region1: #{predictor_forward.1} parent=0
    #allocation2 [shape = 'u8[1048576]{0}', space=vmem, size = 0x100000, scoped, tag = 'input window, operand 2, single buffered']
    #allocation3 [shape = 's32[2]{0}', space=sflag, size = 0x8, scoped, tag = 'scoped memory for predictor_forward.1']
    #allocation4 [shape = 'u8[1048576]{0}', space=vmem, size = 0x100000, scoped, tag = 'input window, operand 5']
    #allocation5 [shape = 's32[2]{0}', space=sflag, size = 0x8, scoped, tag = 'scoped memory for predictor_forward.1']
    #allocation6 [shape = 'u8[32768]{0}', space=vmem, size = 0x8000, scoped, tag = 'output window, operand 0']
    %12 = vsyncpa [#allocation3], 0
    %13 = vsyncpa [#allocation5], 0
    %s14 = scalar_lea.sflag [#allocation5], 1
    %15 = vsyncpa %s14, 0
    loop: start=0, step=1, limit=4
    $region2: #{predictor_forward.1} parent=1 // loop_pre_header
      _
    $region3: #{predictor_forward.1} parent=1 // loop_header
      %s17 = sphi 0, %s21
      %p18 = scmp.ge.s32.totalorder %s17, 4
      %s24 = sphi 0, %s43
      %s25 = sphi 0, %s39
      %s26 = sphi 0, %s35
      %s27 = sphi 0, %s24
      %s28 = sphi 0, %s25
      %s29 = sphi 0, %s26
      %s30 = sphi 0, %s27
      %s31 = sphi 0, %s28
      %s32 = sphi 0, %s29
      %s46 = sphi 0, %s48
      %s49 = sphi 0, %s46
      %s50 = sphi 0, %s49
      %s66 = sphi 0, %s50
      %s72 = sphi 0, %s74
      %s75 = sphi 0, %s72
      %s76 = sphi 0, %s75
      %s92 = sphi 0, %s76
      %s98 = sphi 0, %s100
      %s101 = sphi 0, %s98
      %s102 = sphi 0, %s101
      %s118 = sphi 0, %s102
      %s124 = sphi 0, %s126
      %s127 = sphi 0, %s124
      %s128 = sphi 0, %s127
      %s144 = sphi 0, %s128
      %s150 = sphi 0, %s152
      %s153 = sphi 0, %s150
      %s154 = sphi 0, %s153
      %s170 = sphi 0, %s154
      %s178 = sphi 0, %s180
      %s181 = sphi 0, %s178
      %s182 = sphi 0, %s181
      %s198 = sphi 0, %s182
      %s204 = sphi 0, %s206
      %s207 = sphi 0, %s204
      %s208 = sphi 0, %s207
      %s224 = sphi 0, %s208
      %s232 = sphi 0, %s234
      %s235 = sphi 0, %s232
      %s236 = sphi 0, %s235
      %s252 = sphi 0, %s236
    $region4: #{predictor_forward.1} parent=1 // loop_header_branch
      %20 = sbr.rel (%p18) target = $region8
    $region5: #{predictor_forward.1} parent=1 // loop_body
      %s22 = ssub.s32 %s17, 1
      %s23 = ssub.s32 %s17, 2
      %s33 = sadd.s32 1, %s26
      %p34 = scmp.ge.s32.totalorder %s33, 1
      %s35 = scalar_select %p34, 0, %s33
      %s36 = sadd.s32 1, %s25
      %s37 = scalar_select %p34, %s36, %s25
      %p38 = scmp.ge.s32.totalorder %s37, 2
      %s39 = scalar_select %p38, 0, %s37
      %s40 = sadd.s32 1, %s24
      %s41 = scalar_select %p38, %s40, %s24
      %p42 = scmp.ge.s32.totalorder %s41, 1
      %s43 = scalar_select %p42, 0, %s41
      %s44 = ssub.s32 %s24, %s43
      %p45 = scmp.eq.s32.totalorder %s44, 0
      %s47 = sadd.s32 %s46, 1
      %s48 = scalar_select %p45, %s46, %s47
      %p51 = pneg %p45
      %p52 = scmp.eq.s32.totalorder %s17, 1
      %p53 = por %p51, %p52
      %p54 = scmp.ne.s32.totalorder %s46, %s49
      %p55 = scmp.eq.s32.totalorder %s17, 0
      %p56 = por %p54, %p55
      %p57 = scmp.ne.s32.totalorder %s46, %s49
      %p58 = scmp.eq.s32.totalorder %s22, 1
      %p59 = por %p57, %p58
      %p60 = scmp.ne.s32.totalorder %s49, %s50
      %p61 = scmp.eq.s32.totalorder %s22, 0
      %p62 = por %p60, %p61
      %p63 = scmp.ne.s32.totalorder %s49, %s50
      %p64 = scmp.eq.s32.totalorder %s23, 1
      %p65 = por %p63, %p64
      %p67 = scmp.ne.s32.totalorder %s50, %s66
      %p68 = scmp.eq.s32.totalorder %s23, 0
      %p69 = por %p67, %p68
      %s70 = ssub.s32 %s24, %s43
      %p71 = scmp.eq.s32.totalorder %s70, 0
      %s73 = sadd.s32 %s72, 1
      %s74 = scalar_select %p71, %s72, %s73
      %p77 = pneg %p71
      %p78 = scmp.eq.s32.totalorder %s17, 1
      %p79 = por %p77, %p78
      %p80 = scmp.ne.s32.totalorder %s72, %s75
      %p81 = scmp.eq.s32.totalorder %s17, 0
      %p82 = por %p80, %p81
      %p83 = scmp.ne.s32.totalorder %s72, %s75
      %p84 = scmp.eq.s32.totalorder %s22, 1
      %p85 = por %p83, %p84
      %p86 = scmp.ne.s32.totalorder %s75, %s76
      %p87 = scmp.eq.s32.totalorder %s22, 0
      %p88 = por %p86, %p87
      %p89 = scmp.ne.s32.totalorder %s75, %s76
      %p90 = scmp.eq.s32.totalorder %s23, 1
      %p91 = por %p89, %p90
      %p93 = scmp.ne.s32.totalorder %s76, %s92
      %p94 = scmp.eq.s32.totalorder %s23, 0
      %p95 = por %p93, %p94
      %s96 = ssub.s32 %s26, %s35
      %p97 = scmp.eq.s32.totalorder %s96, 0
      %s99 = sadd.s32 %s98, 1
      %s100 = scalar_select %p97, %s98, %s99
      %p103 = pneg %p97
      %p104 = scmp.eq.s32.totalorder %s17, 1
      %p105 = por %p103, %p104
      %p106 = scmp.ne.s32.totalorder %s98, %s101
      %p107 = scmp.eq.s32.totalorder %s17, 0
      %p108 = por %p106, %p107
      %p109 = scmp.ne.s32.totalorder %s98, %s101
      %p110 = scmp.eq.s32.totalorder %s22, 1
      %p111 = por %p109, %p110
      %p112 = scmp.ne.s32.totalorder %s101, %s102
      %p113 = scmp.eq.s32.totalorder %s22, 0
      %p114 = por %p112, %p113
      %p115 = scmp.ne.s32.totalorder %s101, %s102
      %p116 = scmp.eq.s32.totalorder %s23, 1
      %p117 = por %p115, %p116
      %p119 = scmp.ne.s32.totalorder %s102, %s118
      %p120 = scmp.eq.s32.totalorder %s23, 0
      %p121 = por %p119, %p120
      %s122 = ssub.s32 %s26, %s35
      %p123 = scmp.eq.s32.totalorder %s122, 0
      %s125 = sadd.s32 %s124, 1
      %s126 = scalar_select %p123, %s124, %s125
      %p129 = pneg %p123
      %p130 = scmp.eq.s32.totalorder %s17, 1
      %p131 = por %p129, %p130
      %p132 = scmp.ne.s32.totalorder %s124, %s127
      %p133 = scmp.eq.s32.totalorder %s17, 0
      %p134 = por %p132, %p133
      %p135 = scmp.ne.s32.totalorder %s124, %s127
      %p136 = scmp.eq.s32.totalorder %s22, 1
      %p137 = por %p135, %p136
      %p138 = scmp.ne.s32.totalorder %s127, %s128
      %p139 = scmp.eq.s32.totalorder %s22, 0
      %p140 = por %p138, %p139
      %p141 = scmp.ne.s32.totalorder %s127, %s128
      %p142 = scmp.eq.s32.totalorder %s23, 1
      %p143 = por %p141, %p142
      %p145 = scmp.ne.s32.totalorder %s128, %s144
      %p146 = scmp.eq.s32.totalorder %s23, 0
      %p147 = por %p145, %p146
      %s148 = ssub.s32 %s26, %s35
      %p149 = scmp.eq.s32.totalorder %s148, 0
      %s151 = sadd.s32 %s150, 1
      %s152 = scalar_select %p149, %s150, %s151
      %p155 = pneg %p149
      %p156 = scmp.eq.s32.totalorder %s17, 1
      %p157 = por %p155, %p156
      %p158 = scmp.ne.s32.totalorder %s150, %s153
      %p159 = scmp.eq.s32.totalorder %s17, 0
      %p160 = por %p158, %p159
      %p161 = scmp.ne.s32.totalorder %s150, %s153
      %p162 = scmp.eq.s32.totalorder %s22, 1
      %p163 = por %p161, %p162
      %p164 = scmp.ne.s32.totalorder %s153, %s154
      %p165 = scmp.eq.s32.totalorder %s22, 0
      %p166 = por %p164, %p165
      %p167 = scmp.ne.s32.totalorder %s153, %s154
      %p168 = scmp.eq.s32.totalorder %s23, 1
      %p169 = por %p167, %p168
      %p171 = scmp.ne.s32.totalorder %s154, %s170
      %p172 = scmp.eq.s32.totalorder %s23, 0
      %p173 = por %p171, %p172
      %s174 = ssub.s32 %s26, %s35
      %s175 = ssub.s32 %s25, %s39
      %s176 = sor.u32 %s174, %s175
      %p177 = scmp.eq.s32.totalorder %s176, 0
      %s179 = sadd.s32 %s178, 1
      %s180 = scalar_select %p177, %s178, %s179
      %p183 = pneg %p177
      %p184 = scmp.eq.s32.totalorder %s17, 1
      %p185 = por %p183, %p184
      %p186 = scmp.ne.s32.totalorder %s178, %s181
      %p187 = scmp.eq.s32.totalorder %s17, 0
      %p188 = por %p186, %p187
      %p189 = scmp.ne.s32.totalorder %s178, %s181
      %p190 = scmp.eq.s32.totalorder %s22, 1
      %p191 = por %p189, %p190
      %p192 = scmp.ne.s32.totalorder %s181, %s182
      %p193 = scmp.eq.s32.totalorder %s22, 0
      %p194 = por %p192, %p193
      %p195 = scmp.ne.s32.totalorder %s181, %s182
      %p196 = scmp.eq.s32.totalorder %s23, 1
      %p197 = por %p195, %p196
      %p199 = scmp.ne.s32.totalorder %s182, %s198
      %p200 = scmp.eq.s32.totalorder %s23, 0
      %p201 = por %p199, %p200
      %s202 = ssub.s32 %s25, %s39
      %p203 = scmp.eq.s32.totalorder %s202, 0
      %s205 = sadd.s32 %s204, 1
      %s206 = scalar_select %p203, %s204, %s205
      %p209 = pneg %p203
      %p210 = scmp.eq.s32.totalorder %s17, 1
      %p211 = por %p209, %p210
      %p212 = scmp.ne.s32.totalorder %s204, %s207
      %p213 = scmp.eq.s32.totalorder %s17, 0
      %p214 = por %p212, %p213
      %p215 = scmp.ne.s32.totalorder %s204, %s207
      %p216 = scmp.eq.s32.totalorder %s22, 1
      %p217 = por %p215, %p216
      %p218 = scmp.ne.s32.totalorder %s207, %s208
      %p219 = scmp.eq.s32.totalorder %s22, 0
      %p220 = por %p218, %p219
      %p221 = scmp.ne.s32.totalorder %s207, %s208
      %p222 = scmp.eq.s32.totalorder %s23, 1
      %p223 = por %p221, %p222
      %p225 = scmp.ne.s32.totalorder %s208, %s224
      %p226 = scmp.eq.s32.totalorder %s23, 0
      %p227 = por %p225, %p226
      %s228 = ssub.s32 %s24, %s43
      %s229 = ssub.s32 %s25, %s39
      %s230 = sor.u32 %s228, %s229
      %p231 = scmp.eq.s32.totalorder %s230, 0
      %s233 = sadd.s32 %s232, 1
      %s234 = scalar_select %p231, %s232, %s233
      %p237 = pneg %p231
      %p238 = scmp.eq.s32.totalorder %s17, 1
      %p239 = por %p237, %p238
      %p240 = scmp.ne.s32.totalorder %s232, %s235
      %p241 = scmp.eq.s32.totalorder %s17, 0
      %p242 = por %p240, %p241
      %p243 = scmp.ne.s32.totalorder %s232, %s235
      %p244 = scmp.eq.s32.totalorder %s22, 1
      %p245 = por %p243, %p244
      %p246 = scmp.ne.s32.totalorder %s235, %s236
      %p247 = scmp.eq.s32.totalorder %s22, 0
      %p248 = por %p246, %p247
      %p249 = scmp.ne.s32.totalorder %s235, %s236
      %p250 = scmp.eq.s32.totalorder %s23, 1
      %p251 = por %p249, %p250
      %p253 = scmp.ne.s32.totalorder %s236, %s252
      %p254 = scmp.eq.s32.totalorder %s23, 0
      %p255 = por %p253, %p254
      %p256 = scmp.le.s32.totalorder 1, %s17
      %p257 = scmp.lt.s32.totalorder %s17, 3
      %p258 = pnand %p256, %p257
      %p259 = pneg %p258
      // Predicated region
      $region9: #{predictor_forward.1} parent=5 // pred_check
        _
      $region10: #{predictor_forward.1} parent=5 // pred_check_branch
        %261 = sbr.rel (%p258) target = $region12
      $region11: #{predictor_forward.1} parent=5 // pred_region
        %s262 = ssub.s32 %s17, 1
        // Predicated region
        $region13: #{predictor_forward.1} parent=11 // pred_check
          %p263 = pneg %p62
        $region14: #{predictor_forward.1} parent=11 // pred_check_branch
          %265 = sbr.rel (%p263) target = $region16
        $region15: #{predictor_forward.1} parent=11 // pred_region
          %s266 = smul.u32 2, %s27
          %p267 = scmp.lt.s32.totalorder %s266, 1
          %s268 = scalar_select %p267, %s266, 1
          %s269 = smul.addr %s268, 4
          %s270 = smul.addr %s269, 4
          %s271 = scalar_lea.vmem %s0, %s270
          %s272 = smul.u32 2, %s27
        $region16: #{predictor_forward.1} parent=11 // pred_fallthru
          _
        // Predicated region
        $region17: #{predictor_forward.1} parent=11 // pred_check
          %p273 = pneg %p88
        $region18: #{predictor_forward.1} parent=11 // pred_check_branch
          %275 = sbr.rel (%p273) target = $region20
        $region19: #{predictor_forward.1} parent=11 // pred_region
          %s276 = smul.u32 2, %s27
          %p277 = scmp.lt.s32.totalorder %s276, 1
          %s278 = scalar_select %p277, %s276, 1
          %s279 = smul.addr %s278, 4
          %s280 = scalar_lea.vmem %s1, %s279
          %s281 = smul.u32 2, %s27
        $region20: #{predictor_forward.1} parent=11 // pred_fallthru
          _
        // Predicated region
        $region21: #{predictor_forward.1} parent=11 // pred_check
          %p282 = pneg %p114
        $region22: #{predictor_forward.1} parent=11 // pred_check_branch
          %284 = sbr.rel (%p282) target = $region24
        $region23: #{predictor_forward.1} parent=11 // pred_region
          %s285 = smul.u32 8, %s29
          %287 = vsyncadd [#allocation3], 0
          %s288 = smul.addr %s285, 4
          %s289 = scalar_lea.hbm %s2, %s288
          %s290 = sshll.u32 %s289, 4
          %s291 = int_to_ptr.hbm [resolvable:$true] %s290
          %s292 = sshll.u32 [#allocation2], 4
          %s293 = int_to_ptr.vmem [resolvable:$true] %s292
          %298 = dma.hbm_to_vmem [thread:$0]  %s291, 32768, %s293, [#allocation3], 512, 512, 32
        $region24: #{predictor_forward.1} parent=11 // pred_fallthru
          _
        // Predicated region
        $region25: #{predictor_forward.1} parent=11 // pred_check
          %p299 = pneg %p140
        $region26: #{predictor_forward.1} parent=11 // pred_check_branch
          %301 = sbr.rel (%p299) target = $region28
        $region27: #{predictor_forward.1} parent=11 // pred_region
          %s302 = smul.u32 8, %s29
          %p303 = scmp.lt.s32.totalorder %s302, 7
          %s304 = scalar_select %p303, %s302, 7
          %s305 = scalar_lea.vmem %s3, %s304
          %s306 = smul.u32 8, %s29
        $region28: #{predictor_forward.1} parent=11 // pred_fallthru
          _
        // Predicated region
        $region29: #{predictor_forward.1} parent=11 // pred_check
          %p307 = pneg %p166
        $region30: #{predictor_forward.1} parent=11 // pred_check_branch
          %309 = sbr.rel (%p307) target = $region32
        $region31: #{predictor_forward.1} parent=11 // pred_region
          %s310 = smul.u32 8, %s29
          %p311 = scmp.lt.s32.totalorder %s310, 7
          %s312 = scalar_select %p311, %s310, 7
          %s313 = scalar_lea.vmem %s4, %s312
          %s314 = smul.u32 8, %s29
        $region32: #{predictor_forward.1} parent=11 // pred_fallthru
          _
      $region12: #{predictor_forward.1} parent=5 // pred_fallthru
        _
      %p315 = scmp.lt.s32.totalorder %s17, 2
      // Predicated region
      $region33: #{predictor_forward.1} parent=5 // pred_check
        %p316 = pneg %p315
      $region34: #{predictor_forward.1} parent=5 // pred_check_branch
        %318 = sbr.rel (%p316) target = $region36
      $region35: #{predictor_forward.1} parent=5 // pred_region
        // Predicated region
        $region37: #{predictor_forward.1} parent=35 // pred_check
          %p319 = pneg %p188
        $region38: #{predictor_forward.1} parent=35 // pred_check_branch
          %321 = sbr.rel (%p319) target = $region40
        $region39: #{predictor_forward.1} parent=35 // pred_region
          %s322 = sand.u32 %s178, 1
          %s323 = scalar_lea.sflag [#allocation5], %s322
          %s324 = sand.u32 %s178, 1
          %s325 = smul.addr %s324, 1024
          %s326 = scalar_lea.vmem [#allocation4], %s325
          %s327 = smul.u32 128, %s26
          %s328 = smul.u32 2, %s25
          %330 = vsyncadd %s323, 0
          %s331 = smul.addr %s327, 4
          %s332 = sadd.s32 %s328, %s331
          %s333 = smul.addr %s332, 4
          %s334 = scalar_lea.hbm %s5, %s333
          %s335 = sshll.u32 %s334, 4
          %s336 = int_to_ptr.hbm [resolvable:$true] %s335
          %s337 = sshll.u32 %s326, 4
          %s338 = int_to_ptr.vmem [resolvable:$true] %s337
          %343 = dma.hbm_to_vmem [thread:$0]  %s336, 16384, %s338, %s323, 256, 128, 8
        $region40: #{predictor_forward.1} parent=35 // pred_fallthru
          _
        // Predicated region
        $region41: #{predictor_forward.1} parent=35 // pred_check
          %p344 = pneg %p214
        $region42: #{predictor_forward.1} parent=35 // pred_check_branch
          %346 = sbr.rel (%p344) target = $region44
        $region43: #{predictor_forward.1} parent=35 // pred_region
          %s347 = smul.u32 2, %s25
          %p348 = scmp.lt.s32.totalorder %s347, 3
          %s349 = scalar_select %p348, %s347, 3
          %s350 = scalar_lea.vmem %s6, %s349
          %s351 = smul.u32 2, %s25
        $region44: #{predictor_forward.1} parent=35 // pred_fallthru
          _
      $region36: #{predictor_forward.1} parent=5 // pred_fallthru
        _
      %p352 = scmp.le.s32.totalorder 1, %s17
      %p353 = scmp.lt.s32.totalorder %s17, 3
      %p354 = pnand %p352, %p353
      %p355 = pneg %p354
      // Predicated region
      $region45: #{predictor_forward.1} parent=5 // pred_check
        _
      $region46: #{predictor_forward.1} parent=5 // pred_check_branch
        %357 = sbr.rel (%p354) target = $region48
      $region47: #{predictor_forward.1} parent=5 // pred_region
        %s358 = ssub.s32 %s17, 1
        // Predicated region
        $region49: #{predictor_forward.1} parent=47 // pred_check
          %p359 = pneg %p114
        $region50: #{predictor_forward.1} parent=47 // pred_check_branch
          %361 = sbr.rel (%p359) target = $region52
        $region51: #{predictor_forward.1} parent=47 // pred_region
          %363 = dma.done [#allocation3], 32768
        $region52: #{predictor_forward.1} parent=47 // pred_fallthru
          _
        %s364 = sand.u32 %s181, 1
        %s365 = scalar_lea.sflag [#allocation5], %s364
        %s366 = sand.u32 %s181, 1
        %s367 = smul.addr %s366, 1024
        %s368 = scalar_lea.vmem [#allocation4], %s367
        // Predicated region
        $region53: #{predictor_forward.1} parent=47 // pred_check
          %p369 = pneg %p194
        $region54: #{predictor_forward.1} parent=47 // pred_check_branch
          %371 = sbr.rel (%p369) target = $region56
        $region55: #{predictor_forward.1} parent=47 // pred_region
          %373 = dma.done %s365, 16384
        $region56: #{predictor_forward.1} parent=47 // pred_fallthru
          _
        %s374 = smul.u32 2, %s27
        %p375 = scmp.lt.s32.totalorder %s374, 1
        %s376 = scalar_select %p375, %s374, 1
        %s377 = smul.addr %s376, 4
        %s378 = smul.addr %s377, 4
        %s379 = scalar_lea.vmem %s0, %s378
        %p380 = pneg %p62
        %p381 = pneg %p59
        %s382 = smul.u32 2, %s27
        %p383 = scmp.lt.s32.totalorder %s382, 1
        %s384 = scalar_select %p383, %s382, 1
        %s385 = smul.addr %s384, 4
        %s386 = scalar_lea.vmem %s1, %s385
        %p387 = pneg %p88
        %p388 = pneg %p85
        %p389 = pneg %p114
        %p390 = pneg %p111
        %s391 = smul.u32 8, %s29
        %p392 = scmp.lt.s32.totalorder %s391, 7
        %s393 = scalar_select %p392, %s391, 7
        %s394 = scalar_lea.vmem %s3, %s393
        %p395 = pneg %p140
        %p396 = pneg %p137
        %s397 = smul.u32 8, %s29
        %p398 = scmp.lt.s32.totalorder %s397, 7
        %s399 = scalar_select %p398, %s397, 7
        %s400 = scalar_lea.vmem %s4, %s399
        %p401 = pneg %p166
        %p402 = pneg %p163
        %s403 = sand.u32 %s181, 1
        %s404 = scalar_lea.sflag [#allocation5], %s403
        %s405 = sand.u32 %s181, 1
        %s406 = smul.addr %s405, 1024
        %s407 = scalar_lea.vmem [#allocation4], %s406
        %p408 = pneg %p194
        %p409 = pneg %p191
        %s410 = smul.u32 2, %s28
        %p411 = scmp.lt.s32.totalorder %s410, 3
        %s412 = scalar_select %p411, %s410, 3
        %s413 = scalar_lea.vmem %s6, %s412
        %p414 = pneg %p220
        %p415 = pneg %p217
        %p416 = pneg %p248
        %p417 = pneg %p245
        %s418 = sand.u32 %s235, 1
        %s419 = sand.u32 %s235, 1
        %s420 = smul.addr %s419, 32
        %s421 = scalar_lea.vmem [#allocation6], %s420
        %s422 = smul.u32 2, %s27
        %p423 = scmp.lt.s32.totalorder %s422, 1
        %s424 = scalar_select %p423, %s422, 1
        %s425 = smul.addr %s424, 4
        %s426 = smul.addr %s425, 4
        %s427 = scalar_lea.vmem %s0, %s426
        %s428 = smul.u32 2, %s27
        %s429 = smul.u32 2, %s27
        %p430 = scmp.lt.s32.totalorder %s429, 1
        %s431 = scalar_select %p430, %s429, 1
        %s432 = smul.addr %s431, 4
        %s433 = scalar_lea.vmem %s1, %s432
        %s434 = smul.u32 2, %s27
        %s435 = smul.u32 8, %s29
        %s436 = smul.u32 8, %s29
        %p437 = scmp.lt.s32.totalorder %s436, 7
        %s438 = scalar_select %p437, %s436, 7
        %s439 = scalar_lea.vmem %s3, %s438
        %s440 = smul.u32 8, %s29
        %s441 = smul.u32 8, %s29
        %p442 = scmp.lt.s32.totalorder %s441, 7
        %s443 = scalar_select %p442, %s441, 7
        %s444 = scalar_lea.vmem %s4, %s443
        %s445 = smul.u32 8, %s29
        %s446 = smul.u32 128, %s29
        %s447 = smul.u32 2, %s28
        %s448 = smul.u32 2, %s28
        %p449 = scmp.lt.s32.totalorder %s448, 3
        %s450 = scalar_select %p449, %s448, 3
        %s451 = scalar_lea.vmem %s6, %s450
        %s452 = smul.u32 2, %s28
        %s453 = smul.u32 2, %s27
        %s454 = smul.u32 2, %s28
        %p455 = scmp.eq.s32.totalorder %s29, 0
        // Predicated region
        $region57: #{predictor_forward.1} parent=47 // pred_check
          %p456 = pneg %p455
        $region58: #{predictor_forward.1} parent=47 // pred_check_branch
          %458 = sbr.rel (%p456) target = $region60
        $region59: #{predictor_forward.1} parent=47 // pred_region
          %459 = vst [vmem:[%s421] sm:$0xff] 0.0
          %460 = vst [vmem:[%s421 + $0x8] sm:$0xff] 0.0
          %461 = vst [vmem:[%s421 + $0x10] sm:$0xff] 0.0
          %462 = vst [vmem:[%s421 + $0x18] sm:$0xff] 0.0
        $region60: #{predictor_forward.1} parent=47 // pred_fallthru
          _
        %v463 = vld [vmem:[%s427] sm:$0xff]
        %v464 = vld [vmem:[%s427 + $0x8] sm:$0xff]
        %v465 = vld [vmem:[%s427 + $0x10] sm:$0xff]
        %v466 = vld [vmem:[%s427 + $0x18] sm:$0xff]
        %v467 = vld [vmem:[#allocation2] sm:$0xff]
        %v468 = vld [vmem:[#allocation2 + $0x8] sm:$0xff]
        %v469 = vld [vmem:[#allocation2 + $0x10] sm:$0xff]
        %v470 = vld [vmem:[#allocation2 + $0x18] sm:$0xff]
        %v471 = vld [vmem:[#allocation2 + $0x20] sm:$0xff]
        %v472 = vld [vmem:[#allocation2 + $0x28] sm:$0xff]
        %v473 = vld [vmem:[#allocation2 + $0x30] sm:$0xff]
        %v474 = vld [vmem:[#allocation2 + $0x38] sm:$0xff]
        %v475 = vld [vmem:[#allocation2 + $0x40] sm:$0xff]
        %v476 = vld [vmem:[#allocation2 + $0x48] sm:$0xff]
        %v477 = vld [vmem:[#allocation2 + $0x50] sm:$0xff]
        %v478 = vld [vmem:[#allocation2 + $0x58] sm:$0xff]
        %v479 = vld [vmem:[#allocation2 + $0x60] sm:$0xff]
        %v480 = vld [vmem:[#allocation2 + $0x68] sm:$0xff]
        %v481 = vld [vmem:[#allocation2 + $0x70] sm:$0xff]
        %v482 = vld [vmem:[#allocation2 + $0x78] sm:$0xff]
        %v483 = vld [vmem:[#allocation2 + $0x80] sm:$0xff]
        %v484 = vld [vmem:[#allocation2 + $0x88] sm:$0xff]
        %v485 = vld [vmem:[#allocation2 + $0x90] sm:$0xff]
        %v486 = vld [vmem:[#allocation2 + $0x98] sm:$0xff]
        %v487 = vld [vmem:[#allocation2 + $0xa0] sm:$0xff]
        %v488 = vld [vmem:[#allocation2 + $0xa8] sm:$0xff]
        %v489 = vld [vmem:[#allocation2 + $0xb0] sm:$0xff]
        %v490 = vld [vmem:[#allocation2 + $0xb8] sm:$0xff]
        %v491 = vld [vmem:[#allocation2 + $0xc0] sm:$0xff]
        %v492 = vld [vmem:[#allocation2 + $0xc8] sm:$0xff]
        %v493 = vld [vmem:[#allocation2 + $0xd0] sm:$0xff]
        %v494 = vld [vmem:[#allocation2 + $0xd8] sm:$0xff]
        %v495 = vld [vmem:[#allocation2 + $0xe0] sm:$0xff]
        %v496 = vld [vmem:[#allocation2 + $0xe8] sm:$0xff]
        %v497 = vld [vmem:[#allocation2 + $0xf0] sm:$0xff]
        %v498 = vld [vmem:[#allocation2 + $0xf8] sm:$0xff]
        %v499 = vld [vmem:[#allocation2 + $0x100] sm:$0xff]
        %v500 = vld [vmem:[#allocation2 + $0x108] sm:$0xff]
        %v501 = vld [vmem:[#allocation2 + $0x110] sm:$0xff]
        %v502 = vld [vmem:[#allocation2 + $0x118] sm:$0xff]
        %v503 = vld [vmem:[#allocation2 + $0x120] sm:$0xff]
        %v504 = vld [vmem:[#allocation2 + $0x128] sm:$0xff]
        %v505 = vld [vmem:[#allocation2 + $0x130] sm:$0xff]
        %v506 = vld [vmem:[#allocation2 + $0x138] sm:$0xff]
        %v507 = vld [vmem:[#allocation2 + $0x140] sm:$0xff]
        %v508 = vld [vmem:[#allocation2 + $0x148] sm:$0xff]
        %v509 = vld [vmem:[#allocation2 + $0x150] sm:$0xff]
        %v510 = vld [vmem:[#allocation2 + $0x158] sm:$0xff]
        %v511 = vld [vmem:[#allocation2 + $0x160] sm:$0xff]
        %v512 = vld [vmem:[#allocation2 + $0x168] sm:$0xff]
        %v513 = vld [vmem:[#allocation2 + $0x170] sm:$0xff]
        %v514 = vld [vmem:[#allocation2 + $0x178] sm:$0xff]
        %v515 = vld [vmem:[#allocation2 + $0x180] sm:$0xff]
        %v516 = vld [vmem:[#allocation2 + $0x188] sm:$0xff]
        %v517 = vld [vmem:[#allocation2 + $0x190] sm:$0xff]
        %v518 = vld [vmem:[#allocation2 + $0x198] sm:$0xff]
        %v519 = vld [vmem:[#allocation2 + $0x1a0] sm:$0xff]
        %v520 = vld [vmem:[#allocation2 + $0x1a8] sm:$0xff]
        %v521 = vld [vmem:[#allocation2 + $0x1b0] sm:$0xff]
        %v522 = vld [vmem:[#allocation2 + $0x1b8] sm:$0xff]
        %v523 = vld [vmem:[#allocation2 + $0x1c0] sm:$0xff]
        %v524 = vld [vmem:[#allocation2 + $0x1c8] sm:$0xff]
        %v525 = vld [vmem:[#allocation2 + $0x1d0] sm:$0xff]
        %v526 = vld [vmem:[#allocation2 + $0x1d8] sm:$0xff]
        %v527 = vld [vmem:[#allocation2 + $0x1e0] sm:$0xff]
        %v528 = vld [vmem:[#allocation2 + $0x1e8] sm:$0xff]
        %v529 = vld [vmem:[#allocation2 + $0x1f0] sm:$0xff]
        %v530 = vld [vmem:[#allocation2 + $0x1f8] sm:$0xff]
        %v531 = vld [vmem:[#allocation2 + $0x200] sm:$0xff]
        %v532 = vld [vmem:[#allocation2 + $0x208] sm:$0xff]
        %v533 = vld [vmem:[#allocation2 + $0x210] sm:$0xff]
        %v534 = vld [vmem:[#allocation2 + $0x218] sm:$0xff]
        %v535 = vld [vmem:[#allocation2 + $0x220] sm:$0xff]
        %v536 = vld [vmem:[#allocation2 + $0x228] sm:$0xff]
        %v537 = vld [vmem:[#allocation2 + $0x230] sm:$0xff]
        %v538 = vld [vmem:[#allocation2 + $0x238] sm:$0xff]
        %v539 = vld [vmem:[#allocation2 + $0x240] sm:$0xff]
        %v540 = vld [vmem:[#allocation2 + $0x248] sm:$0xff]
        %v541 = vld [vmem:[#allocation2 + $0x250] sm:$0xff]
        %v542 = vld [vmem:[#allocation2 + $0x258] sm:$0xff]
        %v543 = vld [vmem:[#allocation2 + $0x260] sm:$0xff]
        %v544 = vld [vmem:[#allocation2 + $0x268] sm:$0xff]
        %v545 = vld [vmem:[#allocation2 + $0x270] sm:$0xff]
        %v546 = vld [vmem:[#allocation2 + $0x278] sm:$0xff]
        %v547 = vld [vmem:[#allocation2 + $0x280] sm:$0xff]
        %v548 = vld [vmem:[#allocation2 + $0x288] sm:$0xff]
        %v549 = vld [vmem:[#allocation2 + $0x290] sm:$0xff]
        %v550 = vld [vmem:[#allocation2 + $0x298] sm:$0xff]
        %v551 = vld [vmem:[#allocation2 + $0x2a0] sm:$0xff]
        %v552 = vld [vmem:[#allocation2 + $0x2a8] sm:$0xff]
        %v553 = vld [vmem:[#allocation2 + $0x2b0] sm:$0xff]
        %v554 = vld [vmem:[#allocation2 + $0x2b8] sm:$0xff]
        %v555 = vld [vmem:[#allocation2 + $0x2c0] sm:$0xff]
        %v556 = vld [vmem:[#allocation2 + $0x2c8] sm:$0xff]
        %v557 = vld [vmem:[#allocation2 + $0x2d0] sm:$0xff]
        %v558 = vld [vmem:[#allocation2 + $0x2d8] sm:$0xff]
        %v559 = vld [vmem:[#allocation2 + $0x2e0] sm:$0xff]
        %v560 = vld [vmem:[#allocation2 + $0x2e8] sm:$0xff]
        %v561 = vld [vmem:[#allocation2 + $0x2f0] sm:$0xff]
        %v562 = vld [vmem:[#allocation2 + $0x2f8] sm:$0xff]
        %v563 = vld [vmem:[#allocation2 + $0x300] sm:$0xff]
        %v564 = vld [vmem:[#allocation2 + $0x308] sm:$0xff]
        %v565 = vld [vmem:[#allocation2 + $0x310] sm:$0xff]
        %v566 = vld [vmem:[#allocation2 + $0x318] sm:$0xff]
        %v567 = vld [vmem:[#allocation2 + $0x320] sm:$0xff]
        %v568 = vld [vmem:[#allocation2 + $0x328] sm:$0xff]
        %v569 = vld [vmem:[#allocation2 + $0x330] sm:$0xff]
        %v570 = vld [vmem:[#allocation2 + $0x338] sm:$0xff]
        %v571 = vld [vmem:[#allocation2 + $0x340] sm:$0xff]
        %v572 = vld [vmem:[#allocation2 + $0x348] sm:$0xff]
        %v573 = vld [vmem:[#allocation2 + $0x350] sm:$0xff]
        %v574 = vld [vmem:[#allocation2 + $0x358] sm:$0xff]
        %v575 = vld [vmem:[#allocation2 + $0x360] sm:$0xff]
        %v576 = vld [vmem:[#allocation2 + $0x368] sm:$0xff]
        %v577 = vld [vmem:[#allocation2 + $0x370] sm:$0xff]
        %v578 = vld [vmem:[#allocation2 + $0x378] sm:$0xff]
        %v579 = vld [vmem:[#allocation2 + $0x380] sm:$0xff]
        %v580 = vld [vmem:[#allocation2 + $0x388] sm:$0xff]
        %v581 = vld [vmem:[#allocation2 + $0x390] sm:$0xff]
        %v582 = vld [vmem:[#allocation2 + $0x398] sm:$0xff]
        %v583 = vld [vmem:[#allocation2 + $0x3a0] sm:$0xff]
        %v584 = vld [vmem:[#allocation2 + $0x3a8] sm:$0xff]
        %v585 = vld [vmem:[#allocation2 + $0x3b0] sm:$0xff]
        %v586 = vld [vmem:[#allocation2 + $0x3b8] sm:$0xff]
        %v587 = vld [vmem:[#allocation2 + $0x3c0] sm:$0xff]
        %v588 = vld [vmem:[#allocation2 + $0x3c8] sm:$0xff]
        %v589 = vld [vmem:[#allocation2 + $0x3d0] sm:$0xff]
        %v590 = vld [vmem:[#allocation2 + $0x3d8] sm:$0xff]
        %v591 = vld [vmem:[#allocation2 + $0x3e0] sm:$0xff]
        %v592 = vld [vmem:[#allocation2 + $0x3e8] sm:$0xff]
        %v593 = vld [vmem:[#allocation2 + $0x3f0] sm:$0xff]
        %v594 = vld [vmem:[#allocation2 + $0x3f8] sm:$0xff]
        %v595 = vld [vmem:[#allocation2 + $0x400] sm:$0xff]
        %v596 = vld [vmem:[#allocation2 + $0x408] sm:$0xff]
        %v597 = vld [vmem:[#allocation2 + $0x410] sm:$0xff]
        %v598 = vld [vmem:[#allocation2 + $0x418] sm:$0xff]
        %v599 = vld [vmem:[#allocation2 + $0x420] sm:$0xff]
        %v600 = vld [vmem:[#allocation2 + $0x428] sm:$0xff]
        %v601 = vld [vmem:[#allocation2 + $0x430] sm:$0xff]
        %v602 = vld [vmem:[#allocation2 + $0x438] sm:$0xff]
        %v603 = vld [vmem:[#allocation2 + $0x440] sm:$0xff]
        %v604 = vld [vmem:[#allocation2 + $0x448] sm:$0xff]
        %v605 = vld [vmem:[#allocation2 + $0x450] sm:$0xff]
        %v606 = vld [vmem:[#allocation2 + $0x458] sm:$0xff]
        %v607 = vld [vmem:[#allocation2 + $0x460] sm:$0xff]
        %v608 = vld [vmem:[#allocation2 + $0x468] sm:$0xff]
        %v609 = vld [vmem:[#allocation2 + $0x470] sm:$0xff]
        %v610 = vld [vmem:[#allocation2 + $0x478] sm:$0xff]
        %v611 = vld [vmem:[#allocation2 + $0x480] sm:$0xff]
        %v612 = vld [vmem:[#allocation2 + $0x488] sm:$0xff]
        %v613 = vld [vmem:[#allocation2 + $0x490] sm:$0xff]
        %v614 = vld [vmem:[#allocation2 + $0x498] sm:$0xff]
        %v615 = vld [vmem:[#allocation2 + $0x4a0] sm:$0xff]
        %v616 = vld [vmem:[#allocation2 + $0x4a8] sm:$0xff]
        %v617 = vld [vmem:[#allocation2 + $0x4b0] sm:$0xff]
        %v618 = vld [vmem:[#allocation2 + $0x4b8] sm:$0xff]
        %v619 = vld [vmem:[#allocation2 + $0x4c0] sm:$0xff]
        %v620 = vld [vmem:[#allocation2 + $0x4c8] sm:$0xff]
        %v621 = vld [vmem:[#allocation2 + $0x4d0] sm:$0xff]
        %v622 = vld [vmem:[#allocation2 + $0x4d8] sm:$0xff]
        %v623 = vld [vmem:[#allocation2 + $0x4e0] sm:$0xff]
        %v624 = vld [vmem:[#allocation2 + $0x4e8] sm:$0xff]
        %v625 = vld [vmem:[#allocation2 + $0x4f0] sm:$0xff]
        %v626 = vld [vmem:[#allocation2 + $0x4f8] sm:$0xff]
        %v627 = vld [vmem:[#allocation2 + $0x500] sm:$0xff]
        %v628 = vld [vmem:[#allocation2 + $0x508] sm:$0xff]
        %v629 = vld [vmem:[#allocation2 + $0x510] sm:$0xff]
        %v630 = vld [vmem:[#allocation2 + $0x518] sm:$0xff]
        %v631 = vld [vmem:[#allocation2 + $0x520] sm:$0xff]
        %v632 = vld [vmem:[#allocation2 + $0x528] sm:$0xff]
        %v633 = vld [vmem:[#allocation2 + $0x530] sm:$0xff]
        %v634 = vld [vmem:[#allocation2 + $0x538] sm:$0xff]
        %v635 = vld [vmem:[#allocation2 + $0x540] sm:$0xff]
        %v636 = vld [vmem:[#allocation2 + $0x548] sm:$0xff]
        %v637 = vld [vmem:[#allocation2 + $0x550] sm:$0xff]
        %v638 = vld [vmem:[#allocation2 + $0x558] sm:$0xff]
        %v639 = vld [vmem:[#allocation2 + $0x560] sm:$0xff]
        %v640 = vld [vmem:[#allocation2 + $0x568] sm:$0xff]
        %v641 = vld [vmem:[#allocation2 + $0x570] sm:$0xff]
        %v642 = vld [vmem:[#allocation2 + $0x578] sm:$0xff]
        %v643 = vld [vmem:[#allocation2 + $0x580] sm:$0xff]
        %v644 = vld [vmem:[#allocation2 + $0x588] sm:$0xff]
        %v645 = vld [vmem:[#allocation2 + $0x590] sm:$0xff]
        %v646 = vld [vmem:[#allocation2 + $0x598] sm:$0xff]
        %v647 = vld [vmem:[#allocation2 + $0x5a0] sm:$0xff]
        %v648 = vld [vmem:[#allocation2 + $0x5a8] sm:$0xff]
        %v649 = vld [vmem:[#allocation2 + $0x5b0] sm:$0xff]
        %v650 = vld [vmem:[#allocation2 + $0x5b8] sm:$0xff]
        %v651 = vld [vmem:[#allocation2 + $0x5c0] sm:$0xff]
        %v652 = vld [vmem:[#allocation2 + $0x5c8] sm:$0xff]
        %v653 = vld [vmem:[#allocation2 + $0x5d0] sm:$0xff]
        %v654 = vld [vmem:[#allocation2 + $0x5d8] sm:$0xff]
        %v655 = vld [vmem:[#allocation2 + $0x5e0] sm:$0xff]
        %v656 = vld [vmem:[#allocation2 + $0x5e8] sm:$0xff]
        %v657 = vld [vmem:[#allocation2 + $0x5f0] sm:$0xff]
        %v658 = vld [vmem:[#allocation2 + $0x5f8] sm:$0xff]
        %v659 = vld [vmem:[#allocation2 + $0x600] sm:$0xff]
        %v660 = vld [vmem:[#allocation2 + $0x608] sm:$0xff]
        %v661 = vld [vmem:[#allocation2 + $0x610] sm:$0xff]
        %v662 = vld [vmem:[#allocation2 + $0x618] sm:$0xff]
        %v663 = vld [vmem:[#allocation2 + $0x620] sm:$0xff]
        %v664 = vld [vmem:[#allocation2 + $0x628] sm:$0xff]
        %v665 = vld [vmem:[#allocation2 + $0x630] sm:$0xff]
        %v666 = vld [vmem:[#allocation2 + $0x638] sm:$0xff]
        %v667 = vld [vmem:[#allocation2 + $0x640] sm:$0xff]
        %v668 = vld [vmem:[#allocation2 + $0x648] sm:$0xff]
        %v669 = vld [vmem:[#allocation2 + $0x650] sm:$0xff]
        %v670 = vld [vmem:[#allocation2 + $0x658] sm:$0xff]
        %v671 = vld [vmem:[#allocation2 + $0x660] sm:$0xff]
        %v672 = vld [vmem:[#allocation2 + $0x668] sm:$0xff]
        %v673 = vld [vmem:[#allocation2 + $0x670] sm:$0xff]
        %v674 = vld [vmem:[#allocation2 + $0x678] sm:$0xff]
        %v675 = vld [vmem:[#allocation2 + $0x680] sm:$0xff]
        %v676 = vld [vmem:[#allocation2 + $0x688] sm:$0xff]
        %v677 = vld [vmem:[#allocation2 + $0x690] sm:$0xff]
        %v678 = vld [vmem:[#allocation2 + $0x698] sm:$0xff]
        %v679 = vld [vmem:[#allocation2 + $0x6a0] sm:$0xff]
        %v680 = vld [vmem:[#allocation2 + $0x6a8] sm:$0xff]
        %v681 = vld [vmem:[#allocation2 + $0x6b0] sm:$0xff]
        %v682 = vld [vmem:[#allocation2 + $0x6b8] sm:$0xff]
        %v683 = vld [vmem:[#allocation2 + $0x6c0] sm:$0xff]
        %v684 = vld [vmem:[#allocation2 + $0x6c8] sm:$0xff]
        %v685 = vld [vmem:[#allocation2 + $0x6d0] sm:$0xff]
        %v686 = vld [vmem:[#allocation2 + $0x6d8] sm:$0xff]
        %v687 = vld [vmem:[#allocation2 + $0x6e0] sm:$0xff]
        %v688 = vld [vmem:[#allocation2 + $0x6e8] sm:$0xff]
        %v689 = vld [vmem:[#allocation2 + $0x6f0] sm:$0xff]
        %v690 = vld [vmem:[#allocation2 + $0x6f8] sm:$0xff]
        %v691 = vld [vmem:[#allocation2 + $0x700] sm:$0xff]
        %v692 = vld [vmem:[#allocation2 + $0x708] sm:$0xff]
        %v693 = vld [vmem:[#allocation2 + $0x710] sm:$0xff]
        %v694 = vld [vmem:[#allocation2 + $0x718] sm:$0xff]
        %v695 = vld [vmem:[#allocation2 + $0x720] sm:$0xff]
        %v696 = vld [vmem:[#allocation2 + $0x728] sm:$0xff]
        %v697 = vld [vmem:[#allocation2 + $0x730] sm:$0xff]
        %v698 = vld [vmem:[#allocation2 + $0x738] sm:$0xff]
        %v699 = vld [vmem:[#allocation2 + $0x740] sm:$0xff]
        %v700 = vld [vmem:[#allocation2 + $0x748] sm:$0xff]
        %v701 = vld [vmem:[#allocation2 + $0x750] sm:$0xff]
        %v702 = vld [vmem:[#allocation2 + $0x758] sm:$0xff]
        %v703 = vld [vmem:[#allocation2 + $0x760] sm:$0xff]
        %v704 = vld [vmem:[#allocation2 + $0x768] sm:$0xff]
        %v705 = vld [vmem:[#allocation2 + $0x770] sm:$0xff]
        %v706 = vld [vmem:[#allocation2 + $0x778] sm:$0xff]
        %v707 = vld [vmem:[#allocation2 + $0x780] sm:$0xff]
        %v708 = vld [vmem:[#allocation2 + $0x788] sm:$0xff]
        %v709 = vld [vmem:[#allocation2 + $0x790] sm:$0xff]
        %v710 = vld [vmem:[#allocation2 + $0x798] sm:$0xff]
        %v711 = vld [vmem:[#allocation2 + $0x7a0] sm:$0xff]
        %v712 = vld [vmem:[#allocation2 + $0x7a8] sm:$0xff]
        %v713 = vld [vmem:[#allocation2 + $0x7b0] sm:$0xff]
        %v714 = vld [vmem:[#allocation2 + $0x7b8] sm:$0xff]
        %v715 = vld [vmem:[#allocation2 + $0x7c0] sm:$0xff]
        %v716 = vld [vmem:[#allocation2 + $0x7c8] sm:$0xff]
        %v717 = vld [vmem:[#allocation2 + $0x7d0] sm:$0xff]
        %v718 = vld [vmem:[#allocation2 + $0x7d8] sm:$0xff]
        %v719 = vld [vmem:[#allocation2 + $0x7e0] sm:$0xff]
        %v720 = vld [vmem:[#allocation2 + $0x7e8] sm:$0xff]
        %v721 = vld [vmem:[#allocation2 + $0x7f0] sm:$0xff]
        %v722 = vld [vmem:[#allocation2 + $0x7f8] sm:$0xff]
        %v723 = vld [vmem:[%s433] sm:$0xf]
        %v724 = vld [vmem:[%s433 + $0x4] sm:$0xf]
        %v725 = vunpack.c.l.bf16 %v723
        %v726 = vunpack.c.l.bf16 %v724
        %v727 = vld [vmem:[%s439] sm:$0xff]
        %v728 = vunpack.c.l.bf16 %v727
        %v729 = vunpack.c.h.bf16 %v727
        %731 = vset.pattern.permute.xlu0 0
        %732 = vperm.xlu0 %731, %v725
        %v733 = vpop.permute.xlu0 %732
        %736 = vset.pattern.permute.xlu0 0
        %737 = vperm.xlu0 %736, %v726
        %v738 = vpop.permute.xlu0 %737
        %v742 = vperm.slane %v728, 0
        %v743 = vperm.slane %v728, 2
        %v744 = vperm.slane %v728, 4
        %v745 = vperm.slane %v728, 6
        %v746 = vperm.slane %v729, 0
        %v747 = vperm.slane %v729, 2
        %v748 = vperm.slane %v729, 4
        %v749 = vperm.slane %v729, 6
        %v758 = vperm.slane %v742, 0
        %v759 = vperm.slane %v743, 0
        %v760 = vperm.slane %v744, 0
        %v761 = vperm.slane %v745, 0
        %v762 = vperm.slane %v746, 0
        %v763 = vperm.slane %v747, 0
        %v764 = vperm.slane %v748, 0
        %v765 = vperm.slane %v749, 0
        %v766 = vmul.f32 %v733, %v758
        %v767 = vmul.f32 %v733, %v759
        %v768 = vmul.f32 %v733, %v760
        %v769 = vmul.f32 %v733, %v761
        %v770 = vmul.f32 %v733, %v762
        %v771 = vmul.f32 %v733, %v763
        %v772 = vmul.f32 %v733, %v764
        %v773 = vmul.f32 %v733, %v765
        %v774 = vmul.f32 %v738, %v758
        %v775 = vmul.f32 %v738, %v759
        %v776 = vmul.f32 %v738, %v760
        %v777 = vmul.f32 %v738, %v761
        %v778 = vmul.f32 %v738, %v762
        %v779 = vmul.f32 %v738, %v763
        %v780 = vmul.f32 %v738, %v764
        %v781 = vmul.f32 %v738, %v765
        %v786 = vunpack.c.l.b16 %v463
        %v787 = vunpack.c.h.b16 %v463
        %v788 = vunpack.c.l.b16 %v464
        %v789 = vunpack.c.h.b16 %v464
        %v790 = vunpack.c.l.b16 %v465
        %v791 = vunpack.c.h.b16 %v465
        %v792 = vunpack.c.l.b16 %v466
        %v793 = vunpack.c.h.b16 %v466
        %v794 = vpack.c.b16 %v790, %v786
        %v795 = vpack.c.b16 %v791, %v787
        %v796 = vpack.c.b16 %v792, %v788
        %v797 = vpack.c.b16 %v793, %v789
        %v1058 = vunpack.c.l.b16 %v467
        %v1059 = vunpack.c.h.b16 %v467
        %v1060 = vunpack.c.l.b16 %v468
        %v1061 = vunpack.c.h.b16 %v468
        %v1062 = vunpack.c.l.b16 %v469
        %v1063 = vunpack.c.h.b16 %v469
        %v1064 = vunpack.c.l.b16 %v470
        %v1065 = vunpack.c.h.b16 %v470
        %v1066 = vunpack.c.l.b16 %v471
        %v1067 = vunpack.c.h.b16 %v471
        %v1068 = vunpack.c.l.b16 %v472
        %v1069 = vunpack.c.h.b16 %v472
        %v1070 = vunpack.c.l.b16 %v473
        %v1071 = vunpack.c.h.b16 %v473
        %v1072 = vunpack.c.l.b16 %v474
        %v1073 = vunpack.c.h.b16 %v474
        %v1074 = vunpack.c.l.b16 %v475
        %v1075 = vunpack.c.h.b16 %v475
        %v1076 = vunpack.c.l.b16 %v476
        %v1077 = vunpack.c.h.b16 %v476
        %v1078 = vunpack.c.l.b16 %v477
        %v1079 = vunpack.c.h.b16 %v477
        %v1080 = vunpack.c.l.b16 %v478
        %v1081 = vunpack.c.h.b16 %v478
        %v1082 = vunpack.c.l.b16 %v479
        %v1083 = vunpack.c.h.b16 %v479
        %v1084 = vunpack.c.l.b16 %v480
        %v1085 = vunpack.c.h.b16 %v480
        %v1086 = vunpack.c.l.b16 %v481
        %v1087 = vunpack.c.h.b16 %v481
        %v1088 = vunpack.c.l.b16 %v482
        %v1089 = vunpack.c.h.b16 %v482
        %v1090 = vunpack.c.l.b16 %v483
        %v1091 = vunpack.c.h.b16 %v483
        %v1092 = vunpack.c.l.b16 %v484
        %v1093 = vunpack.c.h.b16 %v484
        %v1094 = vunpack.c.l.b16 %v485
        %v1095 = vunpack.c.h.b16 %v485
        %v1096 = vunpack.c.l.b16 %v486
        %v1097 = vunpack.c.h.b16 %v486
        %v1098 = vunpack.c.l.b16 %v487
        %v1099 = vunpack.c.h.b16 %v487
        %v1100 = vunpack.c.l.b16 %v488
        %v1101 = vunpack.c.h.b16 %v488
        %v1102 = vunpack.c.l.b16 %v489
        %v1103 = vunpack.c.h.b16 %v489
        %v1104 = vunpack.c.l.b16 %v490
        %v1105 = vunpack.c.h.b16 %v490
        %v1106 = vunpack.c.l.b16 %v491
        %v1107 = vunpack.c.h.b16 %v491
        %v1108 = vunpack.c.l.b16 %v492
        %v1109 = vunpack.c.h.b16 %v492
        %v1110 = vunpack.c.l.b16 %v493
        %v1111 = vunpack.c.h.b16 %v493
        %v1112 = vunpack.c.l.b16 %v494
        %v1113 = vunpack.c.h.b16 %v494
        %v1114 = vunpack.c.l.b16 %v495
        %v1115 = vunpack.c.h.b16 %v495
        %v1116 = vunpack.c.l.b16 %v496
        %v1117 = vunpack.c.h.b16 %v496
        %v1118 = vunpack.c.l.b16 %v497
        %v1119 = vunpack.c.h.b16 %v497
        %v1120 = vunpack.c.l.b16 %v498
        %v1121 = vunpack.c.h.b16 %v498
        %v1122 = vunpack.c.l.b16 %v499
        %v1123 = vunpack.c.h.b16 %v499
        %v1124 = vunpack.c.l.b16 %v500
        %v1125 = vunpack.c.h.b16 %v500
        %v1126 = vunpack.c.l.b16 %v501
        %v1127 = vunpack.c.h.b16 %v501
        %v1128 = vunpack.c.l.b16 %v502
        %v1129 = vunpack.c.h.b16 %v502
        %v1130 = vunpack.c.l.b16 %v503
        %v1131 = vunpack.c.h.b16 %v503
        %v1132 = vunpack.c.l.b16 %v504
        %v1133 = vunpack.c.h.b16 %v504
        %v1134 = vunpack.c.l.b16 %v505
        %v1135 = vunpack.c.h.b16 %v505
        %v1136 = vunpack.c.l.b16 %v506
        %v1137 = vunpack.c.h.b16 %v506
        %v1138 = vunpack.c.l.b16 %v507
        %v1139 = vunpack.c.h.b16 %v507
        %v1140 = vunpack.c.l.b16 %v508
        %v1141 = vunpack.c.h.b16 %v508
        %v1142 = vunpack.c.l.b16 %v509
        %v1143 = vunpack.c.h.b16 %v509
        %v1144 = vunpack.c.l.b16 %v510
        %v1145 = vunpack.c.h.b16 %v510
        %v1146 = vunpack.c.l.b16 %v511
        %v1147 = vunpack.c.h.b16 %v511
        %v1148 = vunpack.c.l.b16 %v512
        %v1149 = vunpack.c.h.b16 %v512
        %v1150 = vunpack.c.l.b16 %v513
        %v1151 = vunpack.c.h.b16 %v513
        %v1152 = vunpack.c.l.b16 %v514
        %v1153 = vunpack.c.h.b16 %v514
        %v1154 = vunpack.c.l.b16 %v515
        %v1155 = vunpack.c.h.b16 %v515
        %v1156 = vunpack.c.l.b16 %v516
        %v1157 = vunpack.c.h.b16 %v516
        %v1158 = vunpack.c.l.b16 %v517
        %v1159 = vunpack.c.h.b16 %v517
        %v1160 = vunpack.c.l.b16 %v518
        %v1161 = vunpack.c.h.b16 %v518
        %v1162 = vunpack.c.l.b16 %v519
        %v1163 = vunpack.c.h.b16 %v519
        %v1164 = vunpack.c.l.b16 %v520
        %v1165 = vunpack.c.h.b16 %v520
        %v1166 = vunpack.c.l.b16 %v521
        %v1167 = vunpack.c.h.b16 %v521
        %v1168 = vunpack.c.l.b16 %v522
        %v1169 = vunpack.c.h.b16 %v522
        %v1170 = vunpack.c.l.b16 %v523
        %v1171 = vunpack.c.h.b16 %v523
        %v1172 = vunpack.c.l.b16 %v524
        %v1173 = vunpack.c.h.b16 %v524
        %v1174 = vunpack.c.l.b16 %v525
        %v1175 = vunpack.c.h.b16 %v525
        %v1176 = vunpack.c.l.b16 %v526
        %v1177 = vunpack.c.h.b16 %v526
        %v1178 = vunpack.c.l.b16 %v527
        %v1179 = vunpack.c.h.b16 %v527
        %v1180 = vunpack.c.l.b16 %v528
        %v1181 = vunpack.c.h.b16 %v528
        %v1182 = vunpack.c.l.b16 %v529
        %v1183 = vunpack.c.h.b16 %v529
        %v1184 = vunpack.c.l.b16 %v530
        %v1185 = vunpack.c.h.b16 %v530
        %v1186 = vunpack.c.l.b16 %v531
        %v1187 = vunpack.c.h.b16 %v531
        %v1188 = vunpack.c.l.b16 %v532
        %v1189 = vunpack.c.h.b16 %v532
        %v1190 = vunpack.c.l.b16 %v533
        %v1191 = vunpack.c.h.b16 %v533
        %v1192 = vunpack.c.l.b16 %v534
        %v1193 = vunpack.c.h.b16 %v534
        %v1194 = vunpack.c.l.b16 %v535
        %v1195 = vunpack.c.h.b16 %v535
        %v1196 = vunpack.c.l.b16 %v536
        %v1197 = vunpack.c.h.b16 %v536
        %v1198 = vunpack.c.l.b16 %v537
        %v1199 = vunpack.c.h.b16 %v537
        %v1200 = vunpack.c.l.b16 %v538
        %v1201 = vunpack.c.h.b16 %v538
        %v1202 = vunpack.c.l.b16 %v539
        %v1203 = vunpack.c.h.b16 %v539
        %v1204 = vunpack.c.l.b16 %v540
        %v1205 = vunpack.c.h.b16 %v540
        %v1206 = vunpack.c.l.b16 %v541
        %v1207 = vunpack.c.h.b16 %v541
        %v1208 = vunpack.c.l.b16 %v542
        %v1209 = vunpack.c.h.b16 %v542
        %v1210 = vunpack.c.l.b16 %v543
        %v1211 = vunpack.c.h.b16 %v543
        %v1212 = vunpack.c.l.b16 %v544
        %v1213 = vunpack.c.h.b16 %v544
        %v1214 = vunpack.c.l.b16 %v545
        %v1215 = vunpack.c.h.b16 %v545
        %v1216 = vunpack.c.l.b16 %v546
        %v1217 = vunpack.c.h.b16 %v546
        %v1218 = vunpack.c.l.b16 %v547
        %v1219 = vunpack.c.h.b16 %v547
        %v1220 = vunpack.c.l.b16 %v548
        %v1221 = vunpack.c.h.b16 %v548
        %v1222 = vunpack.c.l.b16 %v549
        %v1223 = vunpack.c.h.b16 %v549
        %v1224 = vunpack.c.l.b16 %v550
        %v1225 = vunpack.c.h.b16 %v550
        %v1226 = vunpack.c.l.b16 %v551
        %v1227 = vunpack.c.h.b16 %v551
        %v1228 = vunpack.c.l.b16 %v552
        %v1229 = vunpack.c.h.b16 %v552
        %v1230 = vunpack.c.l.b16 %v553
        %v1231 = vunpack.c.h.b16 %v553
        %v1232 = vunpack.c.l.b16 %v554
        %v1233 = vunpack.c.h.b16 %v554
        %v1234 = vunpack.c.l.b16 %v555
        %v1235 = vunpack.c.h.b16 %v555
        %v1236 = vunpack.c.l.b16 %v556
        %v1237 = vunpack.c.h.b16 %v556
        %v1238 = vunpack.c.l.b16 %v557
        %v1239 = vunpack.c.h.b16 %v557
        %v1240 = vunpack.c.l.b16 %v558
        %v1241 = vunpack.c.h.b16 %v558
        %v1242 = vunpack.c.l.b16 %v559
        %v1243 = vunpack.c.h.b16 %v559
        %v1244 = vunpack.c.l.b16 %v560
        %v1245 = vunpack.c.h.b16 %v560
        %v1246 = vunpack.c.l.b16 %v561
        %v1247 = vunpack.c.h.b16 %v561
        %v1248 = vunpack.c.l.b16 %v562
        %v1249 = vunpack.c.h.b16 %v562
        %v1250 = vunpack.c.l.b16 %v563
        %v1251 = vunpack.c.h.b16 %v563
        %v1252 = vunpack.c.l.b16 %v564
        %v1253 = vunpack.c.h.b16 %v564
        %v1254 = vunpack.c.l.b16 %v565
        %v1255 = vunpack.c.h.b16 %v565
        %v1256 = vunpack.c.l.b16 %v566
        %v1257 = vunpack.c.h.b16 %v566
        %v1258 = vunpack.c.l.b16 %v567
        %v1259 = vunpack.c.h.b16 %v567
        %v1260 = vunpack.c.l.b16 %v568
        %v1261 = vunpack.c.h.b16 %v568
        %v1262 = vunpack.c.l.b16 %v569
        %v1263 = vunpack.c.h.b16 %v569
        %v1264 = vunpack.c.l.b16 %v570
        %v1265 = vunpack.c.h.b16 %v570
        %v1266 = vunpack.c.l.b16 %v571
        %v1267 = vunpack.c.h.b16 %v571
        %v1268 = vunpack.c.l.b16 %v572
        %v1269 = vunpack.c.h.b16 %v572
        %v1270 = vunpack.c.l.b16 %v573
        %v1271 = vunpack.c.h.b16 %v573
        %v1272 = vunpack.c.l.b16 %v574
        %v1273 = vunpack.c.h.b16 %v574
        %v1274 = vunpack.c.l.b16 %v575
        %v1275 = vunpack.c.h.b16 %v575
        %v1276 = vunpack.c.l.b16 %v576
        %v1277 = vunpack.c.h.b16 %v576
        %v1278 = vunpack.c.l.b16 %v577
        %v1279 = vunpack.c.h.b16 %v577
        %v1280 = vunpack.c.l.b16 %v578
        %v1281 = vunpack.c.h.b16 %v578
        %v1282 = vunpack.c.l.b16 %v579
        %v1283 = vunpack.c.h.b16 %v579
        %v1284 = vunpack.c.l.b16 %v580
        %v1285 = vunpack.c.h.b16 %v580
        %v1286 = vunpack.c.l.b16 %v581
        %v1287 = vunpack.c.h.b16 %v581
        %v1288 = vunpack.c.l.b16 %v582
        %v1289 = vunpack.c.h.b16 %v582
        %v1290 = vunpack.c.l.b16 %v583
        %v1291 = vunpack.c.h.b16 %v583
        %v1292 = vunpack.c.l.b16 %v584
        %v1293 = vunpack.c.h.b16 %v584
        %v1294 = vunpack.c.l.b16 %v585
        %v1295 = vunpack.c.h.b16 %v585
        %v1296 = vunpack.c.l.b16 %v586
        %v1297 = vunpack.c.h.b16 %v586
        %v1298 = vunpack.c.l.b16 %v587
        %v1299 = vunpack.c.h.b16 %v587
        %v1300 = vunpack.c.l.b16 %v588
        %v1301 = vunpack.c.h.b16 %v588
        %v1302 = vunpack.c.l.b16 %v589
        %v1303 = vunpack.c.h.b16 %v589
        %v1304 = vunpack.c.l.b16 %v590
        %v1305 = vunpack.c.h.b16 %v590
        %v1306 = vunpack.c.l.b16 %v591
        %v1307 = vunpack.c.h.b16 %v591
        %v1308 = vunpack.c.l.b16 %v592
        %v1309 = vunpack.c.h.b16 %v592
        %v1310 = vunpack.c.l.b16 %v593
        %v1311 = vunpack.c.h.b16 %v593
        %v1312 = vunpack.c.l.b16 %v594
        %v1313 = vunpack.c.h.b16 %v594
        %v1314 = vunpack.c.l.b16 %v595
        %v1315 = vunpack.c.h.b16 %v595
        %v1316 = vunpack.c.l.b16 %v596
        %v1317 = vunpack.c.h.b16 %v596
        %v1318 = vunpack.c.l.b16 %v597
        %v1319 = vunpack.c.h.b16 %v597
        %v1320 = vunpack.c.l.b16 %v598
        %v1321 = vunpack.c.h.b16 %v598
        %v1322 = vunpack.c.l.b16 %v599
        %v1323 = vunpack.c.h.b16 %v599
        %v1324 = vunpack.c.l.b16 %v600
        %v1325 = vunpack.c.h.b16 %v600
        %v1326 = vunpack.c.l.b16 %v601
        %v1327 = vunpack.c.h.b16 %v601
        %v1328 = vunpack.c.l.b16 %v602
        %v1329 = vunpack.c.h.b16 %v602
        %v1330 = vunpack.c.l.b16 %v603
        %v1331 = vunpack.c.h.b16 %v603
        %v1332 = vunpack.c.l.b16 %v604
        %v1333 = vunpack.c.h.b16 %v604
        %v1334 = vunpack.c.l.b16 %v605
        %v1335 = vunpack.c.h.b16 %v605
        %v1336 = vunpack.c.l.b16 %v606
        %v1337 = vunpack.c.h.b16 %v606
        %v1338 = vunpack.c.l.b16 %v607
        %v1339 = vunpack.c.h.b16 %v607
        %v1340 = vunpack.c.l.b16 %v608
        %v1341 = vunpack.c.h.b16 %v608
        %v1342 = vunpack.c.l.b16 %v609
        %v1343 = vunpack.c.h.b16 %v609
        %v1344 = vunpack.c.l.b16 %v610
        %v1345 = vunpack.c.h.b16 %v610
        %v1346 = vunpack.c.l.b16 %v611
        %v1347 = vunpack.c.h.b16 %v611
        %v1348 = vunpack.c.l.b16 %v612
        %v1349 = vunpack.c.h.b16 %v612
        %v1350 = vunpack.c.l.b16 %v613
        %v1351 = vunpack.c.h.b16 %v613
        %v1352 = vunpack.c.l.b16 %v614
        %v1353 = vunpack.c.h.b16 %v614
        %v1354 = vunpack.c.l.b16 %v615
        %v1355 = vunpack.c.h.b16 %v615
        %v1356 = vunpack.c.l.b16 %v616
        %v1357 = vunpack.c.h.b16 %v616
        %v1358 = vunpack.c.l.b16 %v617
        %v1359 = vunpack.c.h.b16 %v617
        %v1360 = vunpack.c.l.b16 %v618
        %v1361 = vunpack.c.h.b16 %v618
        %v1362 = vunpack.c.l.b16 %v619
        %v1363 = vunpack.c.h.b16 %v619
        %v1364 = vunpack.c.l.b16 %v620
        %v1365 = vunpack.c.h.b16 %v620
        %v1366 = vunpack.c.l.b16 %v621
        %v1367 = vunpack.c.h.b16 %v621
        %v1368 = vunpack.c.l.b16 %v622
        %v1369 = vunpack.c.h.b16 %v622
        %v1370 = vunpack.c.l.b16 %v623
        %v1371 = vunpack.c.h.b16 %v623
        %v1372 = vunpack.c.l.b16 %v624
        %v1373 = vunpack.c.h.b16 %v624
        %v1374 = vunpack.c.l.b16 %v625
        %v1375 = vunpack.c.h.b16 %v625
        %v1376 = vunpack.c.l.b16 %v626
        %v1377 = vunpack.c.h.b16 %v626
        %v1378 = vunpack.c.l.b16 %v627
        %v1379 = vunpack.c.h.b16 %v627
        %v1380 = vunpack.c.l.b16 %v628
        %v1381 = vunpack.c.h.b16 %v628
        %v1382 = vunpack.c.l.b16 %v629
        %v1383 = vunpack.c.h.b16 %v629
        %v1384 = vunpack.c.l.b16 %v630
        %v1385 = vunpack.c.h.b16 %v630
        %v1386 = vunpack.c.l.b16 %v631
        %v1387 = vunpack.c.h.b16 %v631
        %v1388 = vunpack.c.l.b16 %v632
        %v1389 = vunpack.c.h.b16 %v632
        %v1390 = vunpack.c.l.b16 %v633
        %v1391 = vunpack.c.h.b16 %v633
        %v1392 = vunpack.c.l.b16 %v634
        %v1393 = vunpack.c.h.b16 %v634
        %v1394 = vunpack.c.l.b16 %v635
        %v1395 = vunpack.c.h.b16 %v635
        %v1396 = vunpack.c.l.b16 %v636
        %v1397 = vunpack.c.h.b16 %v636
        %v1398 = vunpack.c.l.b16 %v637
        %v1399 = vunpack.c.h.b16 %v637
        %v1400 = vunpack.c.l.b16 %v638
        %v1401 = vunpack.c.h.b16 %v638
        %v1402 = vunpack.c.l.b16 %v639
        %v1403 = vunpack.c.h.b16 %v639
        %v1404 = vunpack.c.l.b16 %v640
        %v1405 = vunpack.c.h.b16 %v640
        %v1406 = vunpack.c.l.b16 %v641
        %v1407 = vunpack.c.h.b16 %v641
        %v1408 = vunpack.c.l.b16 %v642
        %v1409 = vunpack.c.h.b16 %v642
        %v1410 = vunpack.c.l.b16 %v643
        %v1411 = vunpack.c.h.b16 %v643
        %v1412 = vunpack.c.l.b16 %v644
        %v1413 = vunpack.c.h.b16 %v644
        %v1414 = vunpack.c.l.b16 %v645
        %v1415 = vunpack.c.h.b16 %v645
        %v1416 = vunpack.c.l.b16 %v646
        %v1417 = vunpack.c.h.b16 %v646
        %v1418 = vunpack.c.l.b16 %v647
        %v1419 = vunpack.c.h.b16 %v647
        %v1420 = vunpack.c.l.b16 %v648
        %v1421 = vunpack.c.h.b16 %v648
        %v1422 = vunpack.c.l.b16 %v649
        %v1423 = vunpack.c.h.b16 %v649
        %v1424 = vunpack.c.l.b16 %v650
        %v1425 = vunpack.c.h.b16 %v650
        %v1426 = vunpack.c.l.b16 %v651
        %v1427 = vunpack.c.h.b16 %v651
        %v1428 = vunpack.c.l.b16 %v652
        %v1429 = vunpack.c.h.b16 %v652
        %v1430 = vunpack.c.l.b16 %v653
        %v1431 = vunpack.c.h.b16 %v653
        %v1432 = vunpack.c.l.b16 %v654
        %v1433 = vunpack.c.h.b16 %v654
        %v1434 = vunpack.c.l.b16 %v655
        %v1435 = vunpack.c.h.b16 %v655
        %v1436 = vunpack.c.l.b16 %v656
        %v1437 = vunpack.c.h.b16 %v656
        %v1438 = vunpack.c.l.b16 %v657
        %v1439 = vunpack.c.h.b16 %v657
        %v1440 = vunpack.c.l.b16 %v658
        %v1441 = vunpack.c.h.b16 %v658
        %v1442 = vunpack.c.l.b16 %v659
        %v1443 = vunpack.c.h.b16 %v659
        %v1444 = vunpack.c.l.b16 %v660
        %v1445 = vunpack.c.h.b16 %v660
        %v1446 = vunpack.c.l.b16 %v661
        %v1447 = vunpack.c.h.b16 %v661
        %v1448 = vunpack.c.l.b16 %v662
        %v1449 = vunpack.c.h.b16 %v662
        %v1450 = vunpack.c.l.b16 %v663
        %v1451 = vunpack.c.h.b16 %v663
        %v1452 = vunpack.c.l.b16 %v664
        %v1453 = vunpack.c.h.b16 %v664
        %v1454 = vunpack.c.l.b16 %v665
        %v1455 = vunpack.c.h.b16 %v665
        %v1456 = vunpack.c.l.b16 %v666
        %v1457 = vunpack.c.h.b16 %v666
        %v1458 = vunpack.c.l.b16 %v667
        %v1459 = vunpack.c.h.b16 %v667
        %v1460 = vunpack.c.l.b16 %v668
        %v1461 = vunpack.c.h.b16 %v668
        %v1462 = vunpack.c.l.b16 %v669
        %v1463 = vunpack.c.h.b16 %v669
        %v1464 = vunpack.c.l.b16 %v670
        %v1465 = vunpack.c.h.b16 %v670
        %v1466 = vunpack.c.l.b16 %v671
        %v1467 = vunpack.c.h.b16 %v671
        %v1468 = vunpack.c.l.b16 %v672
        %v1469 = vunpack.c.h.b16 %v672
        %v1470 = vunpack.c.l.b16 %v673
        %v1471 = vunpack.c.h.b16 %v673
        %v1472 = vunpack.c.l.b16 %v674
        %v1473 = vunpack.c.h.b16 %v674
        %v1474 = vunpack.c.l.b16 %v675
        %v1475 = vunpack.c.h.b16 %v675
        %v1476 = vunpack.c.l.b16 %v676
        %v1477 = vunpack.c.h.b16 %v676
        %v1478 = vunpack.c.l.b16 %v677
        %v1479 = vunpack.c.h.b16 %v677
        %v1480 = vunpack.c.l.b16 %v678
        %v1481 = vunpack.c.h.b16 %v678
        %v1482 = vunpack.c.l.b16 %v679
        %v1483 = vunpack.c.h.b16 %v679
        %v1484 = vunpack.c.l.b16 %v680
        %v1485 = vunpack.c.h.b16 %v680
        %v1486 = vunpack.c.l.b16 %v681
        %v1487 = vunpack.c.h.b16 %v681
        %v1488 = vunpack.c.l.b16 %v682
        %v1489 = vunpack.c.h.b16 %v682
        %v1490 = vunpack.c.l.b16 %v683
        %v1491 = vunpack.c.h.b16 %v683
        %v1492 = vunpack.c.l.b16 %v684
        %v1493 = vunpack.c.h.b16 %v684
        %v1494 = vunpack.c.l.b16 %v685
        %v1495 = vunpack.c.h.b16 %v685
        %v1496 = vunpack.c.l.b16 %v686
        %v1497 = vunpack.c.h.b16 %v686
        %v1498 = vunpack.c.l.b16 %v687
        %v1499 = vunpack.c.h.b16 %v687
        %v1500 = vunpack.c.l.b16 %v688
        %v1501 = vunpack.c.h.b16 %v688
        %v1502 = vunpack.c.l.b16 %v689
        %v1503 = vunpack.c.h.b16 %v689
        %v1504 = vunpack.c.l.b16 %v690
        %v1505 = vunpack.c.h.b16 %v690
        %v1506 = vunpack.c.l.b16 %v691
        %v1507 = vunpack.c.h.b16 %v691
        %v1508 = vunpack.c.l.b16 %v692
        %v1509 = vunpack.c.h.b16 %v692
        %v1510 = vunpack.c.l.b16 %v693
        %v1511 = vunpack.c.h.b16 %v693
        %v1512 = vunpack.c.l.b16 %v694
        %v1513 = vunpack.c.h.b16 %v694
        %v1514 = vunpack.c.l.b16 %v695
        %v1515 = vunpack.c.h.b16 %v695
        %v1516 = vunpack.c.l.b16 %v696
        %v1517 = vunpack.c.h.b16 %v696
        %v1518 = vunpack.c.l.b16 %v697
        %v1519 = vunpack.c.h.b16 %v697
        %v1520 = vunpack.c.l.b16 %v698
        %v1521 = vunpack.c.h.b16 %v698
        %v1522 = vunpack.c.l.b16 %v699
        %v1523 = vunpack.c.h.b16 %v699
        %v1524 = vunpack.c.l.b16 %v700
        %v1525 = vunpack.c.h.b16 %v700
        %v1526 = vunpack.c.l.b16 %v701
        %v1527 = vunpack.c.h.b16 %v701
        %v1528 = vunpack.c.l.b16 %v702
        %v1529 = vunpack.c.h.b16 %v702
        %v1530 = vunpack.c.l.b16 %v703
        %v1531 = vunpack.c.h.b16 %v703
        %v1532 = vunpack.c.l.b16 %v704
        %v1533 = vunpack.c.h.b16 %v704
        %v1534 = vunpack.c.l.b16 %v705
        %v1535 = vunpack.c.h.b16 %v705
        %v1536 = vunpack.c.l.b16 %v706
        %v1537 = vunpack.c.h.b16 %v706
        %v1538 = vunpack.c.l.b16 %v707
        %v1539 = vunpack.c.h.b16 %v707
        %v1540 = vunpack.c.l.b16 %v708
        %v1541 = vunpack.c.h.b16 %v708
        %v1542 = vunpack.c.l.b16 %v709
        %v1543 = vunpack.c.h.b16 %v709
        %v1544 = vunpack.c.l.b16 %v710
        %v1545 = vunpack.c.h.b16 %v710
        %v1546 = vunpack.c.l.b16 %v711
        %v1547 = vunpack.c.h.b16 %v711
        %v1548 = vunpack.c.l.b16 %v712
        %v1549 = vunpack.c.h.b16 %v712
        %v1550 = vunpack.c.l.b16 %v713
        %v1551 = vunpack.c.h.b16 %v713
        %v1552 = vunpack.c.l.b16 %v714
        %v1553 = vunpack.c.h.b16 %v714
        %v1554 = vunpack.c.l.b16 %v715
        %v1555 = vunpack.c.h.b16 %v715
        %v1556 = vunpack.c.l.b16 %v716
        %v1557 = vunpack.c.h.b16 %v716
        %v1558 = vunpack.c.l.b16 %v717
        %v1559 = vunpack.c.h.b16 %v717
        %v1560 = vunpack.c.l.b16 %v718
        %v1561 = vunpack.c.h.b16 %v718
        %v1562 = vunpack.c.l.b16 %v719
        %v1563 = vunpack.c.h.b16 %v719
        %v1564 = vunpack.c.l.b16 %v720
        %v1565 = vunpack.c.h.b16 %v720
        %v1566 = vunpack.c.l.b16 %v721
        %v1567 = vunpack.c.h.b16 %v721
        %v1568 = vunpack.c.l.b16 %v722
        %v1569 = vunpack.c.h.b16 %v722
        %v1570 = vpack.c.b16 %v1066, %v1058
        %v1571 = vpack.c.b16 %v1067, %v1059
        %v1572 = vpack.c.b16 %v1068, %v1060
        %v1573 = vpack.c.b16 %v1069, %v1061
        %v1574 = vpack.c.b16 %v1070, %v1062
        %v1575 = vpack.c.b16 %v1071, %v1063
        %v1576 = vpack.c.b16 %v1072, %v1064
        %v1577 = vpack.c.b16 %v1073, %v1065
        %v1578 = vpack.c.b16 %v1082, %v1074
        %v1579 = vpack.c.b16 %v1083, %v1075
        %v1580 = vpack.c.b16 %v1084, %v1076
        %v1581 = vpack.c.b16 %v1085, %v1077
        %v1582 = vpack.c.b16 %v1086, %v1078
        %v1583 = vpack.c.b16 %v1087, %v1079
        %v1584 = vpack.c.b16 %v1088, %v1080
        %v1585 = vpack.c.b16 %v1089, %v1081
        %v1586 = vpack.c.b16 %v1098, %v1090
        %v1587 = vpack.c.b16 %v1099, %v1091
        %v1588 = vpack.c.b16 %v1100, %v1092
        %v1589 = vpack.c.b16 %v1101, %v1093
        %v1590 = vpack.c.b16 %v1102, %v1094
        %v1591 = vpack.c.b16 %v1103, %v1095
        %v1592 = vpack.c.b16 %v1104, %v1096
        %v1593 = vpack.c.b16 %v1105, %v1097
        %v1594 = vpack.c.b16 %v1114, %v1106
        %v1595 = vpack.c.b16 %v1115, %v1107
        %v1596 = vpack.c.b16 %v1116, %v1108
        %v1597 = vpack.c.b16 %v1117, %v1109
        %v1598 = vpack.c.b16 %v1118, %v1110
        %v1599 = vpack.c.b16 %v1119, %v1111
        %v1600 = vpack.c.b16 %v1120, %v1112
        %v1601 = vpack.c.b16 %v1121, %v1113
        %v1602 = vpack.c.b16 %v1130, %v1122
        %v1603 = vpack.c.b16 %v1131, %v1123
        %v1604 = vpack.c.b16 %v1132, %v1124
        %v1605 = vpack.c.b16 %v1133, %v1125
        %v1606 = vpack.c.b16 %v1134, %v1126
        %v1607 = vpack.c.b16 %v1135, %v1127
        %v1608 = vpack.c.b16 %v1136, %v1128
        %v1609 = vpack.c.b16 %v1137, %v1129
        %v1610 = vpack.c.b16 %v1146, %v1138
        %v1611 = vpack.c.b16 %v1147, %v1139
        %v1612 = vpack.c.b16 %v1148, %v1140
        %v1613 = vpack.c.b16 %v1149, %v1141
        %v1614 = vpack.c.b16 %v1150, %v1142
        %v1615 = vpack.c.b16 %v1151, %v1143
        %v1616 = vpack.c.b16 %v1152, %v1144
        %v1617 = vpack.c.b16 %v1153, %v1145
        %v1618 = vpack.c.b16 %v1162, %v1154
        %v1619 = vpack.c.b16 %v1163, %v1155
        %v1620 = vpack.c.b16 %v1164, %v1156
        %v1621 = vpack.c.b16 %v1165, %v1157
        %v1622 = vpack.c.b16 %v1166, %v1158
        %v1623 = vpack.c.b16 %v1167, %v1159
        %v1624 = vpack.c.b16 %v1168, %v1160
        %v1625 = vpack.c.b16 %v1169, %v1161
        %v1626 = vpack.c.b16 %v1178, %v1170
        %v1627 = vpack.c.b16 %v1179, %v1171
        %v1628 = vpack.c.b16 %v1180, %v1172
        %v1629 = vpack.c.b16 %v1181, %v1173
        %v1630 = vpack.c.b16 %v1182, %v1174
        %v1631 = vpack.c.b16 %v1183, %v1175
        %v1632 = vpack.c.b16 %v1184, %v1176
        %v1633 = vpack.c.b16 %v1185, %v1177
        %v1634 = vpack.c.b16 %v1194, %v1186
        %v1635 = vpack.c.b16 %v1195, %v1187
        %v1636 = vpack.c.b16 %v1196, %v1188
        %v1637 = vpack.c.b16 %v1197, %v1189
        %v1638 = vpack.c.b16 %v1198, %v1190
        %v1639 = vpack.c.b16 %v1199, %v1191
        %v1640 = vpack.c.b16 %v1200, %v1192
        %v1641 = vpack.c.b16 %v1201, %v1193
        %v1642 = vpack.c.b16 %v1210, %v1202
        %v1643 = vpack.c.b16 %v1211, %v1203
        %v1644 = vpack.c.b16 %v1212, %v1204
        %v1645 = vpack.c.b16 %v1213, %v1205
        %v1646 = vpack.c.b16 %v1214, %v1206
        %v1647 = vpack.c.b16 %v1215, %v1207
        %v1648 = vpack.c.b16 %v1216, %v1208
        %v1649 = vpack.c.b16 %v1217, %v1209
        %v1650 = vpack.c.b16 %v1226, %v1218
        %v1651 = vpack.c.b16 %v1227, %v1219
        %v1652 = vpack.c.b16 %v1228, %v1220
        %v1653 = vpack.c.b16 %v1229, %v1221
        %v1654 = vpack.c.b16 %v1230, %v1222
        %v1655 = vpack.c.b16 %v1231, %v1223
        %v1656 = vpack.c.b16 %v1232, %v1224
        %v1657 = vpack.c.b16 %v1233, %v1225
        %v1658 = vpack.c.b16 %v1242, %v1234
        %v1659 = vpack.c.b16 %v1243, %v1235
        %v1660 = vpack.c.b16 %v1244, %v1236
        %v1661 = vpack.c.b16 %v1245, %v1237
        %v1662 = vpack.c.b16 %v1246, %v1238
        %v1663 = vpack.c.b16 %v1247, %v1239
        %v1664 = vpack.c.b16 %v1248, %v1240
        %v1665 = vpack.c.b16 %v1249, %v1241
        %v1666 = vpack.c.b16 %v1258, %v1250
        %v1667 = vpack.c.b16 %v1259, %v1251
        %v1668 = vpack.c.b16 %v1260, %v1252
        %v1669 = vpack.c.b16 %v1261, %v1253
        %v1670 = vpack.c.b16 %v1262, %v1254
        %v1671 = vpack.c.b16 %v1263, %v1255
        %v1672 = vpack.c.b16 %v1264, %v1256
        %v1673 = vpack.c.b16 %v1265, %v1257
        %v1674 = vpack.c.b16 %v1274, %v1266
        %v1675 = vpack.c.b16 %v1275, %v1267
        %v1676 = vpack.c.b16 %v1276, %v1268
        %v1677 = vpack.c.b16 %v1277, %v1269
        %v1678 = vpack.c.b16 %v1278, %v1270
        %v1679 = vpack.c.b16 %v1279, %v1271
        %v1680 = vpack.c.b16 %v1280, %v1272
        %v1681 = vpack.c.b16 %v1281, %v1273
        %v1682 = vpack.c.b16 %v1290, %v1282
        %v1683 = vpack.c.b16 %v1291, %v1283
        %v1684 = vpack.c.b16 %v1292, %v1284
        %v1685 = vpack.c.b16 %v1293, %v1285
        %v1686 = vpack.c.b16 %v1294, %v1286
        %v1687 = vpack.c.b16 %v1295, %v1287
        %v1688 = vpack.c.b16 %v1296, %v1288
        %v1689 = vpack.c.b16 %v1297, %v1289
        %v1690 = vpack.c.b16 %v1306, %v1298
        %v1691 = vpack.c.b16 %v1307, %v1299
        %v1692 = vpack.c.b16 %v1308, %v1300
        %v1693 = vpack.c.b16 %v1309, %v1301
        %v1694 = vpack.c.b16 %v1310, %v1302
        %v1695 = vpack.c.b16 %v1311, %v1303
        %v1696 = vpack.c.b16 %v1312, %v1304
        %v1697 = vpack.c.b16 %v1313, %v1305
        %v1698 = vpack.c.b16 %v1322, %v1314
        %v1699 = vpack.c.b16 %v1323, %v1315
        %v1700 = vpack.c.b16 %v1324, %v1316
        %v1701 = vpack.c.b16 %v1325, %v1317
        %v1702 = vpack.c.b16 %v1326, %v1318
        %v1703 = vpack.c.b16 %v1327, %v1319
        %v1704 = vpack.c.b16 %v1328, %v1320
        %v1705 = vpack.c.b16 %v1329, %v1321
        %v1706 = vpack.c.b16 %v1338, %v1330
        %v1707 = vpack.c.b16 %v1339, %v1331
        %v1708 = vpack.c.b16 %v1340, %v1332
        %v1709 = vpack.c.b16 %v1341, %v1333
        %v1710 = vpack.c.b16 %v1342, %v1334
        %v1711 = vpack.c.b16 %v1343, %v1335
        %v1712 = vpack.c.b16 %v1344, %v1336
        %v1713 = vpack.c.b16 %v1345, %v1337
        %v1714 = vpack.c.b16 %v1354, %v1346
        %v1715 = vpack.c.b16 %v1355, %v1347
        %v1716 = vpack.c.b16 %v1356, %v1348
        %v1717 = vpack.c.b16 %v1357, %v1349
        %v1718 = vpack.c.b16 %v1358, %v1350
        %v1719 = vpack.c.b16 %v1359, %v1351
        %v1720 = vpack.c.b16 %v1360, %v1352
        %v1721 = vpack.c.b16 %v1361, %v1353
        %v1722 = vpack.c.b16 %v1370, %v1362
        %v1723 = vpack.c.b16 %v1371, %v1363
        %v1724 = vpack.c.b16 %v1372, %v1364
        %v1725 = vpack.c.b16 %v1373, %v1365
        %v1726 = vpack.c.b16 %v1374, %v1366
        %v1727 = vpack.c.b16 %v1375, %v1367
        %v1728 = vpack.c.b16 %v1376, %v1368
        %v1729 = vpack.c.b16 %v1377, %v1369
        %v1730 = vpack.c.b16 %v1386, %v1378
        %v1731 = vpack.c.b16 %v1387, %v1379
        %v1732 = vpack.c.b16 %v1388, %v1380
        %v1733 = vpack.c.b16 %v1389, %v1381
        %v1734 = vpack.c.b16 %v1390, %v1382
        %v1735 = vpack.c.b16 %v1391, %v1383
        %v1736 = vpack.c.b16 %v1392, %v1384
        %v1737 = vpack.c.b16 %v1393, %v1385
        %v1738 = vpack.c.b16 %v1402, %v1394
        %v1739 = vpack.c.b16 %v1403, %v1395
        %v1740 = vpack.c.b16 %v1404, %v1396
        %v1741 = vpack.c.b16 %v1405, %v1397
        %v1742 = vpack.c.b16 %v1406, %v1398
        %v1743 = vpack.c.b16 %v1407, %v1399
        %v1744 = vpack.c.b16 %v1408, %v1400
        %v1745 = vpack.c.b16 %v1409, %v1401
        %v1746 = vpack.c.b16 %v1418, %v1410
        %v1747 = vpack.c.b16 %v1419, %v1411
        %v1748 = vpack.c.b16 %v1420, %v1412
        %v1749 = vpack.c.b16 %v1421, %v1413
        %v1750 = vpack.c.b16 %v1422, %v1414
        %v1751 = vpack.c.b16 %v1423, %v1415
        %v1752 = vpack.c.b16 %v1424, %v1416
        %v1753 = vpack.c.b16 %v1425, %v1417
        %v1754 = vpack.c.b16 %v1434, %v1426
        %v1755 = vpack.c.b16 %v1435, %v1427
        %v1756 = vpack.c.b16 %v1436, %v1428
        %v1757 = vpack.c.b16 %v1437, %v1429
        %v1758 = vpack.c.b16 %v1438, %v1430
        %v1759 = vpack.c.b16 %v1439, %v1431
        %v1760 = vpack.c.b16 %v1440, %v1432
        %v1761 = vpack.c.b16 %v1441, %v1433
        %v1762 = vpack.c.b16 %v1450, %v1442
        %v1763 = vpack.c.b16 %v1451, %v1443
        %v1764 = vpack.c.b16 %v1452, %v1444
        %v1765 = vpack.c.b16 %v1453, %v1445
        %v1766 = vpack.c.b16 %v1454, %v1446
        %v1767 = vpack.c.b16 %v1455, %v1447
        %v1768 = vpack.c.b16 %v1456, %v1448
        %v1769 = vpack.c.b16 %v1457, %v1449
        %v1770 = vpack.c.b16 %v1466, %v1458
        %v1771 = vpack.c.b16 %v1467, %v1459
        %v1772 = vpack.c.b16 %v1468, %v1460
        %v1773 = vpack.c.b16 %v1469, %v1461
        %v1774 = vpack.c.b16 %v1470, %v1462
        %v1775 = vpack.c.b16 %v1471, %v1463
        %v1776 = vpack.c.b16 %v1472, %v1464
        %v1777 = vpack.c.b16 %v1473, %v1465
        %v1778 = vpack.c.b16 %v1482, %v1474
        %v1779 = vpack.c.b16 %v1483, %v1475
        %v1780 = vpack.c.b16 %v1484, %v1476
        %v1781 = vpack.c.b16 %v1485, %v1477
        %v1782 = vpack.c.b16 %v1486, %v1478
        %v1783 = vpack.c.b16 %v1487, %v1479
        %v1784 = vpack.c.b16 %v1488, %v1480
        %v1785 = vpack.c.b16 %v1489, %v1481
        %v1786 = vpack.c.b16 %v1498, %v1490
        %v1787 = vpack.c.b16 %v1499, %v1491
        %v1788 = vpack.c.b16 %v1500, %v1492
        %v1789 = vpack.c.b16 %v1501, %v1493
        %v1790 = vpack.c.b16 %v1502, %v1494
        %v1791 = vpack.c.b16 %v1503, %v1495
        %v1792 = vpack.c.b16 %v1504, %v1496
        %v1793 = vpack.c.b16 %v1505, %v1497
        %v1794 = vpack.c.b16 %v1514, %v1506
        %v1795 = vpack.c.b16 %v1515, %v1507
        %v1796 = vpack.c.b16 %v1516, %v1508
        %v1797 = vpack.c.b16 %v1517, %v1509
        %v1798 = vpack.c.b16 %v1518, %v1510
        %v1799 = vpack.c.b16 %v1519, %v1511
        %v1800 = vpack.c.b16 %v1520, %v1512
        %v1801 = vpack.c.b16 %v1521, %v1513
        %v1802 = vpack.c.b16 %v1530, %v1522
        %v1803 = vpack.c.b16 %v1531, %v1523
        %v1804 = vpack.c.b16 %v1532, %v1524
        %v1805 = vpack.c.b16 %v1533, %v1525
        %v1806 = vpack.c.b16 %v1534, %v1526
        %v1807 = vpack.c.b16 %v1535, %v1527
        %v1808 = vpack.c.b16 %v1536, %v1528
        %v1809 = vpack.c.b16 %v1537, %v1529
        %v1810 = vpack.c.b16 %v1546, %v1538
        %v1811 = vpack.c.b16 %v1547, %v1539
        %v1812 = vpack.c.b16 %v1548, %v1540
        %v1813 = vpack.c.b16 %v1549, %v1541
        %v1814 = vpack.c.b16 %v1550, %v1542
        %v1815 = vpack.c.b16 %v1551, %v1543
        %v1816 = vpack.c.b16 %v1552, %v1544
        %v1817 = vpack.c.b16 %v1553, %v1545
        %v1818 = vpack.c.b16 %v1562, %v1554
        %v1819 = vpack.c.b16 %v1563, %v1555
        %v1820 = vpack.c.b16 %v1564, %v1556
        %v1821 = vpack.c.b16 %v1565, %v1557
        %v1822 = vpack.c.b16 %v1566, %v1558
        %v1823 = vpack.c.b16 %v1567, %v1559
        %v1824 = vpack.c.b16 %v1568, %v1560
        %v1825 = vpack.c.b16 %v1569, %v1561
        %2082 = vmatpush.bf16.msra.mxu0 %v1626
        %2083 = vmatpush.bf16.msra.mxu0 %v1618
        %2084 = vmatpush.bf16.msra.mxu0 %v1610
        %2085 = vmatpush.bf16.msra.mxu0 %v1602
        %2086 = vmatpush.bf16.msra.mxu0 %v1594
        %2087 = vmatpush.bf16.msra.mxu0 %v1586
        %2088 = vmatpush.bf16.msra.mxu0 %v1578
        %2089 = vmatpush.bf16.msra.mxu0 %v1570
        %2090 = vmatmul.bf16.gmra.mxu0 %v794
        %v2091 = vpop.f32.mrf.mxu0
        %v2092 = vadd.f32 %v766, %v2091
        %v2093 = vpop.f32.mrf.mxu0
        %v2094 = vadd.f32 %v774, %v2093
        %2095 = vdwg.mxu0
        %2096 = vmatpush.bf16.msra.mxu0 %v1690
        %2097 = vmatpush.bf16.msra.mxu0 %v1682
        %2098 = vmatpush.bf16.msra.mxu0 %v1674
        %2099 = vmatpush.bf16.msra.mxu0 %v1666
        %2100 = vmatpush.bf16.msra.mxu0 %v1658
        %2101 = vmatpush.bf16.msra.mxu0 %v1650
        %2102 = vmatpush.bf16.msra.mxu0 %v1642
        %2103 = vmatpush.bf16.msra.mxu0 %v1634
        %2104 = vmatmul.bf16.gmra.mxu0 %v795
        %v2105 = vpop.f32.mrf.mxu0
        %v2106 = vadd.f32 %v2092, %v2105
        %v2107 = vpop.f32.mrf.mxu0
        %v2108 = vadd.f32 %v2094, %v2107
        %2109 = vdwg.mxu0
        %2110 = vmatpush.bf16.msra.mxu0 %v1754
        %2111 = vmatpush.bf16.msra.mxu0 %v1746
        %2112 = vmatpush.bf16.msra.mxu0 %v1738
        %2113 = vmatpush.bf16.msra.mxu0 %v1730
        %2114 = vmatpush.bf16.msra.mxu0 %v1722
        %2115 = vmatpush.bf16.msra.mxu0 %v1714
        %2116 = vmatpush.bf16.msra.mxu0 %v1706
        %2117 = vmatpush.bf16.msra.mxu0 %v1698
        %2118 = vmatmul.bf16.gmra.mxu0 %v796
        %v2119 = vpop.f32.mrf.mxu0
        %v2120 = vadd.f32 %v2106, %v2119
        %v2121 = vpop.f32.mrf.mxu0
        %v2122 = vadd.f32 %v2108, %v2121
        %2123 = vdwg.mxu0
        %2124 = vmatpush.bf16.msra.mxu0 %v1818
        %2125 = vmatpush.bf16.msra.mxu0 %v1810
        %2126 = vmatpush.bf16.msra.mxu0 %v1802
        %2127 = vmatpush.bf16.msra.mxu0 %v1794
        %2128 = vmatpush.bf16.msra.mxu0 %v1786
        %2129 = vmatpush.bf16.msra.mxu0 %v1778
        %2130 = vmatpush.bf16.msra.mxu0 %v1770
        %2131 = vmatpush.bf16.msra.mxu0 %v1762
        %2132 = vmatmul.bf16.gmra.mxu0 %v797
        %v2133 = vpop.f32.mrf.mxu0
        %v2134 = vadd.f32 %v2120, %v2133
        %v2135 = vpop.f32.mrf.mxu0
        %v2136 = vadd.f32 %v2122, %v2135
        %2137 = vdwg.mxu0
        %2138 = vmatpush.bf16.msra.mxu0 %v1627
        %2139 = vmatpush.bf16.msra.mxu0 %v1619
        %2140 = vmatpush.bf16.msra.mxu0 %v1611
        %2141 = vmatpush.bf16.msra.mxu0 %v1603
        %2142 = vmatpush.bf16.msra.mxu0 %v1595
        %2143 = vmatpush.bf16.msra.mxu0 %v1587
        %2144 = vmatpush.bf16.msra.mxu0 %v1579
        %2145 = vmatpush.bf16.msra.mxu0 %v1571
        %2146 = vmatmul.bf16.gmra.mxu0 %v794
        %v2147 = vpop.f32.mrf.mxu0
        %v2148 = vadd.f32 %v767, %v2147
        %v2149 = vpop.f32.mrf.mxu0
        %v2150 = vadd.f32 %v775, %v2149
        %2151 = vdwg.mxu0
        %2152 = vmatpush.bf16.msra.mxu0 %v1691
        %2153 = vmatpush.bf16.msra.mxu0 %v1683
        %2154 = vmatpush.bf16.msra.mxu0 %v1675
        %2155 = vmatpush.bf16.msra.mxu0 %v1667
        %2156 = vmatpush.bf16.msra.mxu0 %v1659
        %2157 = vmatpush.bf16.msra.mxu0 %v1651
        %2158 = vmatpush.bf16.msra.mxu0 %v1643
        %2159 = vmatpush.bf16.msra.mxu0 %v1635
        %2160 = vmatmul.bf16.gmra.mxu0 %v795
        %v2161 = vpop.f32.mrf.mxu0
        %v2162 = vadd.f32 %v2148, %v2161
        %v2163 = vpop.f32.mrf.mxu0
        %v2164 = vadd.f32 %v2150, %v2163
        %2165 = vdwg.mxu0
        %2166 = vmatpush.bf16.msra.mxu0 %v1755
        %2167 = vmatpush.bf16.msra.mxu0 %v1747
        %2168 = vmatpush.bf16.msra.mxu0 %v1739
        %2169 = vmatpush.bf16.msra.mxu0 %v1731
        %2170 = vmatpush.bf16.msra.mxu0 %v1723
        %2171 = vmatpush.bf16.msra.mxu0 %v1715
        %2172 = vmatpush.bf16.msra.mxu0 %v1707
        %2173 = vmatpush.bf16.msra.mxu0 %v1699
        %2174 = vmatmul.bf16.gmra.mxu0 %v796
        %v2175 = vpop.f32.mrf.mxu0
        %v2176 = vadd.f32 %v2162, %v2175
        %v2177 = vpop.f32.mrf.mxu0
        %v2178 = vadd.f32 %v2164, %v2177
        %2179 = vdwg.mxu0
        %2180 = vmatpush.bf16.msra.mxu0 %v1819
        %2181 = vmatpush.bf16.msra.mxu0 %v1811
        %2182 = vmatpush.bf16.msra.mxu0 %v1803
        %2183 = vmatpush.bf16.msra.mxu0 %v1795
        %2184 = vmatpush.bf16.msra.mxu0 %v1787
        %2185 = vmatpush.bf16.msra.mxu0 %v1779
        %2186 = vmatpush.bf16.msra.mxu0 %v1771
        %2187 = vmatpush.bf16.msra.mxu0 %v1763
        %2188 = vmatmul.bf16.gmra.mxu0 %v797
        %v2189 = vpop.f32.mrf.mxu0
        %v2190 = vadd.f32 %v2176, %v2189
        %v2191 = vpop.f32.mrf.mxu0
        %v2192 = vadd.f32 %v2178, %v2191
        %2193 = vdwg.mxu0
        %2194 = vmatpush.bf16.msra.mxu0 %v1628
        %2195 = vmatpush.bf16.msra.mxu0 %v1620
        %2196 = vmatpush.bf16.msra.mxu0 %v1612
        %2197 = vmatpush.bf16.msra.mxu0 %v1604
        %2198 = vmatpush.bf16.msra.mxu0 %v1596
        %2199 = vmatpush.bf16.msra.mxu0 %v1588
        %2200 = vmatpush.bf16.msra.mxu0 %v1580
        %2201 = vmatpush.bf16.msra.mxu0 %v1572
        %2202 = vmatmul.bf16.gmra.mxu0 %v794
        %v2203 = vpop.f32.mrf.mxu0
        %v2204 = vadd.f32 %v768, %v2203
        %v2205 = vpop.f32.mrf.mxu0
        %v2206 = vadd.f32 %v776, %v2205
        %2207 = vdwg.mxu0
        %2208 = vmatpush.bf16.msra.mxu0 %v1692
        %2209 = vmatpush.bf16.msra.mxu0 %v1684
        %2210 = vmatpush.bf16.msra.mxu0 %v1676
        %2211 = vmatpush.bf16.msra.mxu0 %v1668
        %2212 = vmatpush.bf16.msra.mxu0 %v1660
        %2213 = vmatpush.bf16.msra.mxu0 %v1652
        %2214 = vmatpush.bf16.msra.mxu0 %v1644
        %2215 = vmatpush.bf16.msra.mxu0 %v1636
        %2216 = vmatmul.bf16.gmra.mxu0 %v795
        %v2217 = vpop.f32.mrf.mxu0
        %v2218 = vadd.f32 %v2204, %v2217
        %v2219 = vpop.f32.mrf.mxu0
        %v2220 = vadd.f32 %v2206, %v2219
        %2221 = vdwg.mxu0
        %2222 = vmatpush.bf16.msra.mxu0 %v1756
        %2223 = vmatpush.bf16.msra.mxu0 %v1748
        %2224 = vmatpush.bf16.msra.mxu0 %v1740
        %2225 = vmatpush.bf16.msra.mxu0 %v1732
        %2226 = vmatpush.bf16.msra.mxu0 %v1724
        %2227 = vmatpush.bf16.msra.mxu0 %v1716
        %2228 = vmatpush.bf16.msra.mxu0 %v1708
        %2229 = vmatpush.bf16.msra.mxu0 %v1700
        %2230 = vmatmul.bf16.gmra.mxu0 %v796
        %v2231 = vpop.f32.mrf.mxu0
        %v2232 = vadd.f32 %v2218, %v2231
        %v2233 = vpop.f32.mrf.mxu0
        %v2234 = vadd.f32 %v2220, %v2233
        %2235 = vdwg.mxu0
        %2236 = vmatpush.bf16.msra.mxu0 %v1820
        %2237 = vmatpush.bf16.msra.mxu0 %v1812
        %2238 = vmatpush.bf16.msra.mxu0 %v1804
        %2239 = vmatpush.bf16.msra.mxu0 %v1796
        %2240 = vmatpush.bf16.msra.mxu0 %v1788
        %2241 = vmatpush.bf16.msra.mxu0 %v1780
        %2242 = vmatpush.bf16.msra.mxu0 %v1772
        %2243 = vmatpush.bf16.msra.mxu0 %v1764
        %2244 = vmatmul.bf16.gmra.mxu0 %v797
        %v2245 = vpop.f32.mrf.mxu0
        %v2246 = vadd.f32 %v2232, %v2245
        %v2247 = vpop.f32.mrf.mxu0
        %v2248 = vadd.f32 %v2234, %v2247
        %2249 = vdwg.mxu0
        %2250 = vmatpush.bf16.msra.mxu0 %v1629
        %2251 = vmatpush.bf16.msra.mxu0 %v1621
        %2252 = vmatpush.bf16.msra.mxu0 %v1613
        %2253 = vmatpush.bf16.msra.mxu0 %v1605
        %2254 = vmatpush.bf16.msra.mxu0 %v1597
        %2255 = vmatpush.bf16.msra.mxu0 %v1589
        %2256 = vmatpush.bf16.msra.mxu0 %v1581
        %2257 = vmatpush.bf16.msra.mxu0 %v1573
        %2258 = vmatmul.bf16.gmra.mxu0 %v794
        %v2259 = vpop.f32.mrf.mxu0
        %v2260 = vadd.f32 %v769, %v2259
        %v2261 = vpop.f32.mrf.mxu0
        %v2262 = vadd.f32 %v777, %v2261
        %2263 = vdwg.mxu0
        %2264 = vmatpush.bf16.msra.mxu0 %v1693
        %2265 = vmatpush.bf16.msra.mxu0 %v1685
        %2266 = vmatpush.bf16.msra.mxu0 %v1677
        %2267 = vmatpush.bf16.msra.mxu0 %v1669
        %2268 = vmatpush.bf16.msra.mxu0 %v1661
        %2269 = vmatpush.bf16.msra.mxu0 %v1653
        %2270 = vmatpush.bf16.msra.mxu0 %v1645
        %2271 = vmatpush.bf16.msra.mxu0 %v1637
        %2272 = vmatmul.bf16.gmra.mxu0 %v795
        %v2273 = vpop.f32.mrf.mxu0
        %v2274 = vadd.f32 %v2260, %v2273
        %v2275 = vpop.f32.mrf.mxu0
        %v2276 = vadd.f32 %v2262, %v2275
        %2277 = vdwg.mxu0
        %2278 = vmatpush.bf16.msra.mxu0 %v1757
        %2279 = vmatpush.bf16.msra.mxu0 %v1749
        %2280 = vmatpush.bf16.msra.mxu0 %v1741
        %2281 = vmatpush.bf16.msra.mxu0 %v1733
        %2282 = vmatpush.bf16.msra.mxu0 %v1725
        %2283 = vmatpush.bf16.msra.mxu0 %v1717
        %2284 = vmatpush.bf16.msra.mxu0 %v1709
        %2285 = vmatpush.bf16.msra.mxu0 %v1701
        %2286 = vmatmul.bf16.gmra.mxu0 %v796
        %v2287 = vpop.f32.mrf.mxu0
        %v2288 = vadd.f32 %v2274, %v2287
        %v2289 = vpop.f32.mrf.mxu0
        %v2290 = vadd.f32 %v2276, %v2289
        %2291 = vdwg.mxu0
        %2292 = vmatpush.bf16.msra.mxu0 %v1821
        %2293 = vmatpush.bf16.msra.mxu0 %v1813
        %2294 = vmatpush.bf16.msra.mxu0 %v1805
        %2295 = vmatpush.bf16.msra.mxu0 %v1797
        %2296 = vmatpush.bf16.msra.mxu0 %v1789
        %2297 = vmatpush.bf16.msra.mxu0 %v1781
        %2298 = vmatpush.bf16.msra.mxu0 %v1773
        %2299 = vmatpush.bf16.msra.mxu0 %v1765
        %2300 = vmatmul.bf16.gmra.mxu0 %v797
        %v2301 = vpop.f32.mrf.mxu0
        %v2302 = vadd.f32 %v2288, %v2301
        %v2303 = vpop.f32.mrf.mxu0
        %v2304 = vadd.f32 %v2290, %v2303
        %2305 = vdwg.mxu0
        %2306 = vmatpush.bf16.msra.mxu0 %v1630
        %2307 = vmatpush.bf16.msra.mxu0 %v1622
        %2308 = vmatpush.bf16.msra.mxu0 %v1614
        %2309 = vmatpush.bf16.msra.mxu0 %v1606
        %2310 = vmatpush.bf16.msra.mxu0 %v1598
        %2311 = vmatpush.bf16.msra.mxu0 %v1590
        %2312 = vmatpush.bf16.msra.mxu0 %v1582
        %2313 = vmatpush.bf16.msra.mxu0 %v1574
        %2314 = vmatmul.bf16.gmra.mxu0 %v794
        %v2315 = vpop.f32.mrf.mxu0
        %v2316 = vadd.f32 %v770, %v2315
        %v2317 = vpop.f32.mrf.mxu0
        %v2318 = vadd.f32 %v778, %v2317
        %2319 = vdwg.mxu0
        %2320 = vmatpush.bf16.msra.mxu0 %v1694
        %2321 = vmatpush.bf16.msra.mxu0 %v1686
        %2322 = vmatpush.bf16.msra.mxu0 %v1678
        %2323 = vmatpush.bf16.msra.mxu0 %v1670
        %2324 = vmatpush.bf16.msra.mxu0 %v1662
        %2325 = vmatpush.bf16.msra.mxu0 %v1654
        %2326 = vmatpush.bf16.msra.mxu0 %v1646
        %2327 = vmatpush.bf16.msra.mxu0 %v1638
        %2328 = vmatmul.bf16.gmra.mxu0 %v795
        %v2329 = vpop.f32.mrf.mxu0
        %v2330 = vadd.f32 %v2316, %v2329
        %v2331 = vpop.f32.mrf.mxu0
        %v2332 = vadd.f32 %v2318, %v2331
        %2333 = vdwg.mxu0
        %2334 = vmatpush.bf16.msra.mxu0 %v1758
        %2335 = vmatpush.bf16.msra.mxu0 %v1750
        %2336 = vmatpush.bf16.msra.mxu0 %v1742
        %2337 = vmatpush.bf16.msra.mxu0 %v1734
        %2338 = vmatpush.bf16.msra.mxu0 %v1726
        %2339 = vmatpush.bf16.msra.mxu0 %v1718
        %2340 = vmatpush.bf16.msra.mxu0 %v1710
        %2341 = vmatpush.bf16.msra.mxu0 %v1702
        %2342 = vmatmul.bf16.gmra.mxu0 %v796
        %v2343 = vpop.f32.mrf.mxu0
        %v2344 = vadd.f32 %v2330, %v2343
        %v2345 = vpop.f32.mrf.mxu0
        %v2346 = vadd.f32 %v2332, %v2345
        %2347 = vdwg.mxu0
        %2348 = vmatpush.bf16.msra.mxu0 %v1822
        %2349 = vmatpush.bf16.msra.mxu0 %v1814
        %2350 = vmatpush.bf16.msra.mxu0 %v1806
        %2351 = vmatpush.bf16.msra.mxu0 %v1798
        %2352 = vmatpush.bf16.msra.mxu0 %v1790
        %2353 = vmatpush.bf16.msra.mxu0 %v1782
        %2354 = vmatpush.bf16.msra.mxu0 %v1774
        %2355 = vmatpush.bf16.msra.mxu0 %v1766
        %2356 = vmatmul.bf16.gmra.mxu0 %v797
        %v2357 = vpop.f32.mrf.mxu0
        %v2358 = vadd.f32 %v2344, %v2357
        %v2359 = vpop.f32.mrf.mxu0
        %v2360 = vadd.f32 %v2346, %v2359
        %2361 = vdwg.mxu0
        %2362 = vmatpush.bf16.msra.mxu0 %v1631
        %2363 = vmatpush.bf16.msra.mxu0 %v1623
        %2364 = vmatpush.bf16.msra.mxu0 %v1615
        %2365 = vmatpush.bf16.msra.mxu0 %v1607
        %2366 = vmatpush.bf16.msra.mxu0 %v1599
        %2367 = vmatpush.bf16.msra.mxu0 %v1591
        %2368 = vmatpush.bf16.msra.mxu0 %v1583
        %2369 = vmatpush.bf16.msra.mxu0 %v1575
        %2370 = vmatmul.bf16.gmra.mxu0 %v794
        %v2371 = vpop.f32.mrf.mxu0
        %v2372 = vadd.f32 %v771, %v2371
        %v2373 = vpop.f32.mrf.mxu0
        %v2374 = vadd.f32 %v779, %v2373
        %2375 = vdwg.mxu0
        %2376 = vmatpush.bf16.msra.mxu0 %v1695
        %2377 = vmatpush.bf16.msra.mxu0 %v1687
        %2378 = vmatpush.bf16.msra.mxu0 %v1679
        %2379 = vmatpush.bf16.msra.mxu0 %v1671
        %2380 = vmatpush.bf16.msra.mxu0 %v1663
        %2381 = vmatpush.bf16.msra.mxu0 %v1655
        %2382 = vmatpush.bf16.msra.mxu0 %v1647
        %2383 = vmatpush.bf16.msra.mxu0 %v1639
        %2384 = vmatmul.bf16.gmra.mxu0 %v795
        %v2385 = vpop.f32.mrf.mxu0
        %v2386 = vadd.f32 %v2372, %v2385
        %v2387 = vpop.f32.mrf.mxu0
        %v2388 = vadd.f32 %v2374, %v2387
        %2389 = vdwg.mxu0
        %2390 = vmatpush.bf16.msra.mxu0 %v1759
        %2391 = vmatpush.bf16.msra.mxu0 %v1751
        %2392 = vmatpush.bf16.msra.mxu0 %v1743
        %2393 = vmatpush.bf16.msra.mxu0 %v1735
        %2394 = vmatpush.bf16.msra.mxu0 %v1727
        %2395 = vmatpush.bf16.msra.mxu0 %v1719
        %2396 = vmatpush.bf16.msra.mxu0 %v1711
        %2397 = vmatpush.bf16.msra.mxu0 %v1703
        %2398 = vmatmul.bf16.gmra.mxu0 %v796
        %v2399 = vpop.f32.mrf.mxu0
        %v2400 = vadd.f32 %v2386, %v2399
        %v2401 = vpop.f32.mrf.mxu0
        %v2402 = vadd.f32 %v2388, %v2401
        %2403 = vdwg.mxu0
        %2404 = vmatpush.bf16.msra.mxu0 %v1823
        %2405 = vmatpush.bf16.msra.mxu0 %v1815
        %2406 = vmatpush.bf16.msra.mxu0 %v1807
        %2407 = vmatpush.bf16.msra.mxu0 %v1799
        %2408 = vmatpush.bf16.msra.mxu0 %v1791
        %2409 = vmatpush.bf16.msra.mxu0 %v1783
        %2410 = vmatpush.bf16.msra.mxu0 %v1775
        %2411 = vmatpush.bf16.msra.mxu0 %v1767
        %2412 = vmatmul.bf16.gmra.mxu0 %v797
        %v2413 = vpop.f32.mrf.mxu0
        %v2414 = vadd.f32 %v2400, %v2413
        %v2415 = vpop.f32.mrf.mxu0
        %v2416 = vadd.f32 %v2402, %v2415
        %2417 = vdwg.mxu0
        %2418 = vmatpush.bf16.msra.mxu0 %v1632
        %2419 = vmatpush.bf16.msra.mxu0 %v1624
        %2420 = vmatpush.bf16.msra.mxu0 %v1616
        %2421 = vmatpush.bf16.msra.mxu0 %v1608
        %2422 = vmatpush.bf16.msra.mxu0 %v1600
        %2423 = vmatpush.bf16.msra.mxu0 %v1592
        %2424 = vmatpush.bf16.msra.mxu0 %v1584
        %2425 = vmatpush.bf16.msra.mxu0 %v1576
        %2426 = vmatmul.bf16.gmra.mxu0 %v794
        %v2427 = vpop.f32.mrf.mxu0
        %v2428 = vadd.f32 %v772, %v2427
        %v2429 = vpop.f32.mrf.mxu0
        %v2430 = vadd.f32 %v780, %v2429
        %2431 = vdwg.mxu0
        %2432 = vmatpush.bf16.msra.mxu0 %v1696
        %2433 = vmatpush.bf16.msra.mxu0 %v1688
        %2434 = vmatpush.bf16.msra.mxu0 %v1680
        %2435 = vmatpush.bf16.msra.mxu0 %v1672
        %2436 = vmatpush.bf16.msra.mxu0 %v1664
        %2437 = vmatpush.bf16.msra.mxu0 %v1656
        %2438 = vmatpush.bf16.msra.mxu0 %v1648
        %2439 = vmatpush.bf16.msra.mxu0 %v1640
        %2440 = vmatmul.bf16.gmra.mxu0 %v795
        %v2441 = vpop.f32.mrf.mxu0
        %v2442 = vadd.f32 %v2428, %v2441
        %v2443 = vpop.f32.mrf.mxu0
        %v2444 = vadd.f32 %v2430, %v2443
        %2445 = vdwg.mxu0
        %2446 = vmatpush.bf16.msra.mxu0 %v1760
        %2447 = vmatpush.bf16.msra.mxu0 %v1752
        %2448 = vmatpush.bf16.msra.mxu0 %v1744
        %2449 = vmatpush.bf16.msra.mxu0 %v1736
        %2450 = vmatpush.bf16.msra.mxu0 %v1728
        %2451 = vmatpush.bf16.msra.mxu0 %v1720
        %2452 = vmatpush.bf16.msra.mxu0 %v1712
        %2453 = vmatpush.bf16.msra.mxu0 %v1704
        %2454 = vmatmul.bf16.gmra.mxu0 %v796
        %v2455 = vpop.f32.mrf.mxu0
        %v2456 = vadd.f32 %v2442, %v2455
        %v2457 = vpop.f32.mrf.mxu0
        %v2458 = vadd.f32 %v2444, %v2457
        %2459 = vdwg.mxu0
        %2460 = vmatpush.bf16.msra.mxu0 %v1824
        %2461 = vmatpush.bf16.msra.mxu0 %v1816
        %2462 = vmatpush.bf16.msra.mxu0 %v1808
        %2463 = vmatpush.bf16.msra.mxu0 %v1800
        %2464 = vmatpush.bf16.msra.mxu0 %v1792
        %2465 = vmatpush.bf16.msra.mxu0 %v1784
        %2466 = vmatpush.bf16.msra.mxu0 %v1776
        %2467 = vmatpush.bf16.msra.mxu0 %v1768
        %2468 = vmatmul.bf16.gmra.mxu0 %v797
        %v2469 = vpop.f32.mrf.mxu0
        %v2470 = vadd.f32 %v2456, %v2469
        %v2471 = vpop.f32.mrf.mxu0
        %v2472 = vadd.f32 %v2458, %v2471
        %2473 = vdwg.mxu0
        %2474 = vmatpush.bf16.msra.mxu0 %v1633
        %2475 = vmatpush.bf16.msra.mxu0 %v1625
        %2476 = vmatpush.bf16.msra.mxu0 %v1617
        %2477 = vmatpush.bf16.msra.mxu0 %v1609
        %2478 = vmatpush.bf16.msra.mxu0 %v1601
        %2479 = vmatpush.bf16.msra.mxu0 %v1593
        %2480 = vmatpush.bf16.msra.mxu0 %v1585
        %2481 = vmatpush.bf16.msra.mxu0 %v1577
        %2482 = vmatmul.bf16.gmra.mxu0 %v794
        %v2483 = vpop.f32.mrf.mxu0
        %v2484 = vadd.f32 %v773, %v2483
        %v2485 = vpop.f32.mrf.mxu0
        %v2486 = vadd.f32 %v781, %v2485
        %2487 = vdwg.mxu0
        %2488 = vmatpush.bf16.msra.mxu0 %v1697
        %2489 = vmatpush.bf16.msra.mxu0 %v1689
        %2490 = vmatpush.bf16.msra.mxu0 %v1681
        %2491 = vmatpush.bf16.msra.mxu0 %v1673
        %2492 = vmatpush.bf16.msra.mxu0 %v1665
        %2493 = vmatpush.bf16.msra.mxu0 %v1657
        %2494 = vmatpush.bf16.msra.mxu0 %v1649
        %2495 = vmatpush.bf16.msra.mxu0 %v1641
        %2496 = vmatmul.bf16.gmra.mxu0 %v795
        %v2497 = vpop.f32.mrf.mxu0
        %v2498 = vadd.f32 %v2484, %v2497
        %v2499 = vpop.f32.mrf.mxu0
        %v2500 = vadd.f32 %v2486, %v2499
        %2501 = vdwg.mxu0
        %2502 = vmatpush.bf16.msra.mxu0 %v1761
        %2503 = vmatpush.bf16.msra.mxu0 %v1753
        %2504 = vmatpush.bf16.msra.mxu0 %v1745
        %2505 = vmatpush.bf16.msra.mxu0 %v1737
        %2506 = vmatpush.bf16.msra.mxu0 %v1729
        %2507 = vmatpush.bf16.msra.mxu0 %v1721
        %2508 = vmatpush.bf16.msra.mxu0 %v1713
        %2509 = vmatpush.bf16.msra.mxu0 %v1705
        %2510 = vmatmul.bf16.gmra.mxu0 %v796
        %v2511 = vpop.f32.mrf.mxu0
        %v2512 = vadd.f32 %v2498, %v2511
        %v2513 = vpop.f32.mrf.mxu0
        %v2514 = vadd.f32 %v2500, %v2513
        %2515 = vdwg.mxu0
        %2516 = vmatpush.bf16.msra.mxu0 %v1825
        %2517 = vmatpush.bf16.msra.mxu0 %v1817
        %2518 = vmatpush.bf16.msra.mxu0 %v1809
        %2519 = vmatpush.bf16.msra.mxu0 %v1801
        %2520 = vmatpush.bf16.msra.mxu0 %v1793
        %2521 = vmatpush.bf16.msra.mxu0 %v1785
        %2522 = vmatpush.bf16.msra.mxu0 %v1777
        %2523 = vmatpush.bf16.msra.mxu0 %v1769
        %2524 = vmatmul.bf16.gmra.mxu0 %v797
        %v2525 = vpop.f32.mrf.mxu0
        %v2526 = vadd.f32 %v2512, %v2525
        %v2527 = vpop.f32.mrf.mxu0
        %v2528 = vadd.f32 %v2514, %v2527
        %2529 = vdwg.mxu0
        %2530 = vset.pattern.permute.xlu0 1
        %2531 = vperm.xlu0 %2530, %v725
        %v2532 = vpop.permute.xlu0 %2531
        %2534 = vset.pattern.permute.xlu0 1
        %2535 = vperm.xlu0 %2534, %v726
        %v2536 = vpop.permute.xlu0 %2535
        %v2538 = vperm.slane %v728, 1
        %v2539 = vperm.slane %v728, 3
        %v2540 = vperm.slane %v728, 5
        %v2541 = vperm.slane %v728, 7
        %v2542 = vperm.slane %v729, 1
        %v2543 = vperm.slane %v729, 3
        %v2544 = vperm.slane %v729, 5
        %v2545 = vperm.slane %v729, 7
        %v2554 = vperm.slane %v2538, 1
        %v2555 = vperm.slane %v2539, 1
        %v2556 = vperm.slane %v2540, 1
        %v2557 = vperm.slane %v2541, 1
        %v2558 = vperm.slane %v2542, 1
        %v2559 = vperm.slane %v2543, 1
        %v2560 = vperm.slane %v2544, 1
        %v2561 = vperm.slane %v2545, 1
        %v2562 = vmul.f32 %v2532, %v2554
        %v2563 = vmul.f32 %v2532, %v2555
        %v2564 = vmul.f32 %v2532, %v2556
        %v2565 = vmul.f32 %v2532, %v2557
        %v2566 = vmul.f32 %v2532, %v2558
        %v2567 = vmul.f32 %v2532, %v2559
        %v2568 = vmul.f32 %v2532, %v2560
        %v2569 = vmul.f32 %v2532, %v2561
        %v2570 = vmul.f32 %v2536, %v2554
        %v2571 = vmul.f32 %v2536, %v2555
        %v2572 = vmul.f32 %v2536, %v2556
        %v2573 = vmul.f32 %v2536, %v2557
        %v2574 = vmul.f32 %v2536, %v2558
        %v2575 = vmul.f32 %v2536, %v2559
        %v2576 = vmul.f32 %v2536, %v2560
        %v2577 = vmul.f32 %v2536, %v2561
        %v2578 = vadd.f32 %v2134, %v2562
        %v2579 = vadd.f32 %v2190, %v2563
        %v2580 = vadd.f32 %v2246, %v2564
        %v2581 = vadd.f32 %v2302, %v2565
        %v2582 = vadd.f32 %v2358, %v2566
        %v2583 = vadd.f32 %v2414, %v2567
        %v2584 = vadd.f32 %v2470, %v2568
        %v2585 = vadd.f32 %v2526, %v2569
        %v2586 = vadd.f32 %v2136, %v2570
        %v2587 = vadd.f32 %v2192, %v2571
        %v2588 = vadd.f32 %v2248, %v2572
        %v2589 = vadd.f32 %v2304, %v2573
        %v2590 = vadd.f32 %v2360, %v2574
        %v2591 = vadd.f32 %v2416, %v2575
        %v2592 = vadd.f32 %v2472, %v2576
        %v2593 = vadd.f32 %v2528, %v2577
        %v2594 = vld [vmem:[%s444] sm:$0xff]
        %v2596 = vperm.slane %v2594, 0
        %v2597 = vperm.slane %v2594, 1
        %v2598 = vperm.slane %v2594, 2
        %v2599 = vperm.slane %v2594, 3
        %v2600 = vperm.slane %v2594, 4
        %v2601 = vperm.slane %v2594, 5
        %v2602 = vperm.slane %v2594, 6
        %v2603 = vperm.slane %v2594, 7
        %v2612 = vadd.f32 %v2578, %v2596
        %v2613 = vadd.f32 %v2579, %v2597
        %v2614 = vadd.f32 %v2580, %v2598
        %v2615 = vadd.f32 %v2581, %v2599
        %v2616 = vadd.f32 %v2582, %v2600
        %v2617 = vadd.f32 %v2583, %v2601
        %v2618 = vadd.f32 %v2584, %v2602
        %v2619 = vadd.f32 %v2585, %v2603
        %v2620 = vadd.f32 %v2586, %v2596
        %v2621 = vadd.f32 %v2587, %v2597
        %v2622 = vadd.f32 %v2588, %v2598
        %v2623 = vadd.f32 %v2589, %v2599
        %v2624 = vadd.f32 %v2590, %v2600
        %v2625 = vadd.f32 %v2591, %v2601
        %v2626 = vadd.f32 %v2592, %v2602
        %v2627 = vadd.f32 %v2593, %v2603
        %v2628 = vmax.f32 %v2612, 0.0
        %v2629 = vmax.f32 %v2613, 0.0
        %v2630 = vmax.f32 %v2614, 0.0
        %v2631 = vmax.f32 %v2615, 0.0
        %v2632 = vmax.f32 %v2616, 0.0
        %v2633 = vmax.f32 %v2617, 0.0
        %v2634 = vmax.f32 %v2618, 0.0
        %v2635 = vmax.f32 %v2619, 0.0
        %v2636 = vmax.f32 %v2620, 0.0
        %v2637 = vmax.f32 %v2621, 0.0
        %v2638 = vmax.f32 %v2622, 0.0
        %v2639 = vmax.f32 %v2623, 0.0
        %v2640 = vmax.f32 %v2624, 0.0
        %v2641 = vmax.f32 %v2625, 0.0
        %v2642 = vmax.f32 %v2626, 0.0
        %v2643 = vmax.f32 %v2627, 0.0
        %v2644 = vld [vmem:[%s421] sm:$0xff]
        %v2645 = vld [vmem:[%s421 + $0x8] sm:$0xff]
        %v2646 = vld [vmem:[%s421 + $0x10] sm:$0xff]
        %v2647 = vld [vmem:[%s421 + $0x18] sm:$0xff]
        %v2648 = vpack.c.bf16 %v2636, %v2628
        %v2649 = vpack.c.bf16 %v2637, %v2629
        %v2650 = vpack.c.bf16 %v2638, %v2630
        %v2651 = vpack.c.bf16 %v2639, %v2631
        %v2652 = vpack.c.bf16 %v2640, %v2632
        %v2653 = vpack.c.bf16 %v2641, %v2633
        %v2654 = vpack.c.bf16 %v2642, %v2634
        %v2655 = vpack.c.bf16 %v2643, %v2635
        %v2656 = vld [vmem:[%s368] sm:$0xff]
        %v2657 = vld [vmem:[%s368 + $0x8] sm:$0xff]
        %v2658 = vld [vmem:[%s368 + $0x10] sm:$0xff]
        %v2659 = vld [vmem:[%s368 + $0x18] sm:$0xff]
        %v2660 = vld [vmem:[%s368 + $0x20] sm:$0xff]
        %v2661 = vld [vmem:[%s368 + $0x28] sm:$0xff]
        %v2662 = vld [vmem:[%s368 + $0x30] sm:$0xff]
        %v2663 = vld [vmem:[%s368 + $0x38] sm:$0xff]
        %v2664 = vld [vmem:[%s368 + $0x40] sm:$0xff]
        %v2665 = vld [vmem:[%s368 + $0x48] sm:$0xff]
        %v2666 = vld [vmem:[%s368 + $0x50] sm:$0xff]
        %v2667 = vld [vmem:[%s368 + $0x58] sm:$0xff]
        %v2668 = vld [vmem:[%s368 + $0x60] sm:$0xff]
        %v2669 = vld [vmem:[%s368 + $0x68] sm:$0xff]
        %v2670 = vld [vmem:[%s368 + $0x70] sm:$0xff]
        %v2671 = vld [vmem:[%s368 + $0x78] sm:$0xff]
        %v2672 = vld [vmem:[%s368 + $0x80] sm:$0xff]
        %v2673 = vld [vmem:[%s368 + $0x88] sm:$0xff]
        %v2674 = vld [vmem:[%s368 + $0x90] sm:$0xff]
        %v2675 = vld [vmem:[%s368 + $0x98] sm:$0xff]
        %v2676 = vld [vmem:[%s368 + $0xa0] sm:$0xff]
        %v2677 = vld [vmem:[%s368 + $0xa8] sm:$0xff]
        %v2678 = vld [vmem:[%s368 + $0xb0] sm:$0xff]
        %v2679 = vld [vmem:[%s368 + $0xb8] sm:$0xff]
        %v2680 = vld [vmem:[%s368 + $0xc0] sm:$0xff]
        %v2681 = vld [vmem:[%s368 + $0xc8] sm:$0xff]
        %v2682 = vld [vmem:[%s368 + $0xd0] sm:$0xff]
        %v2683 = vld [vmem:[%s368 + $0xd8] sm:$0xff]
        %v2684 = vld [vmem:[%s368 + $0xe0] sm:$0xff]
        %v2685 = vld [vmem:[%s368 + $0xe8] sm:$0xff]
        %v2686 = vld [vmem:[%s368 + $0xf0] sm:$0xff]
        %v2687 = vld [vmem:[%s368 + $0xf8] sm:$0xff]
        %v2688 = vld [vmem:[%s368 + $0x100] sm:$0xff]
        %v2689 = vld [vmem:[%s368 + $0x108] sm:$0xff]
        %v2690 = vld [vmem:[%s368 + $0x110] sm:$0xff]
        %v2691 = vld [vmem:[%s368 + $0x118] sm:$0xff]
        %v2692 = vld [vmem:[%s368 + $0x120] sm:$0xff]
        %v2693 = vld [vmem:[%s368 + $0x128] sm:$0xff]
        %v2694 = vld [vmem:[%s368 + $0x130] sm:$0xff]
        %v2695 = vld [vmem:[%s368 + $0x138] sm:$0xff]
        %v2696 = vld [vmem:[%s368 + $0x140] sm:$0xff]
        %v2697 = vld [vmem:[%s368 + $0x148] sm:$0xff]
        %v2698 = vld [vmem:[%s368 + $0x150] sm:$0xff]
        %v2699 = vld [vmem:[%s368 + $0x158] sm:$0xff]
        %v2700 = vld [vmem:[%s368 + $0x160] sm:$0xff]
        %v2701 = vld [vmem:[%s368 + $0x168] sm:$0xff]
        %v2702 = vld [vmem:[%s368 + $0x170] sm:$0xff]
        %v2703 = vld [vmem:[%s368 + $0x178] sm:$0xff]
        %v2704 = vld [vmem:[%s368 + $0x180] sm:$0xff]
        %v2705 = vld [vmem:[%s368 + $0x188] sm:$0xff]
        %v2706 = vld [vmem:[%s368 + $0x190] sm:$0xff]
        %v2707 = vld [vmem:[%s368 + $0x198] sm:$0xff]
        %v2708 = vld [vmem:[%s368 + $0x1a0] sm:$0xff]
        %v2709 = vld [vmem:[%s368 + $0x1a8] sm:$0xff]
        %v2710 = vld [vmem:[%s368 + $0x1b0] sm:$0xff]
        %v2711 = vld [vmem:[%s368 + $0x1b8] sm:$0xff]
        %v2712 = vld [vmem:[%s368 + $0x1c0] sm:$0xff]
        %v2713 = vld [vmem:[%s368 + $0x1c8] sm:$0xff]
        %v2714 = vld [vmem:[%s368 + $0x1d0] sm:$0xff]
        %v2715 = vld [vmem:[%s368 + $0x1d8] sm:$0xff]
        %v2716 = vld [vmem:[%s368 + $0x1e0] sm:$0xff]
        %v2717 = vld [vmem:[%s368 + $0x1e8] sm:$0xff]
        %v2718 = vld [vmem:[%s368 + $0x1f0] sm:$0xff]
        %v2719 = vld [vmem:[%s368 + $0x1f8] sm:$0xff]
        %v2720 = vld [vmem:[%s368 + $0x200] sm:$0xff]
        %v2721 = vld [vmem:[%s368 + $0x208] sm:$0xff]
        %v2722 = vld [vmem:[%s368 + $0x210] sm:$0xff]
        %v2723 = vld [vmem:[%s368 + $0x218] sm:$0xff]
        %v2724 = vld [vmem:[%s368 + $0x220] sm:$0xff]
        %v2725 = vld [vmem:[%s368 + $0x228] sm:$0xff]
        %v2726 = vld [vmem:[%s368 + $0x230] sm:$0xff]
        %v2727 = vld [vmem:[%s368 + $0x238] sm:$0xff]
        %v2728 = vld [vmem:[%s368 + $0x240] sm:$0xff]
        %v2729 = vld [vmem:[%s368 + $0x248] sm:$0xff]
        %v2730 = vld [vmem:[%s368 + $0x250] sm:$0xff]
        %v2731 = vld [vmem:[%s368 + $0x258] sm:$0xff]
        %v2732 = vld [vmem:[%s368 + $0x260] sm:$0xff]
        %v2733 = vld [vmem:[%s368 + $0x268] sm:$0xff]
        %v2734 = vld [vmem:[%s368 + $0x270] sm:$0xff]
        %v2735 = vld [vmem:[%s368 + $0x278] sm:$0xff]
        %v2736 = vld [vmem:[%s368 + $0x280] sm:$0xff]
        %v2737 = vld [vmem:[%s368 + $0x288] sm:$0xff]
        %v2738 = vld [vmem:[%s368 + $0x290] sm:$0xff]
        %v2739 = vld [vmem:[%s368 + $0x298] sm:$0xff]
        %v2740 = vld [vmem:[%s368 + $0x2a0] sm:$0xff]
        %v2741 = vld [vmem:[%s368 + $0x2a8] sm:$0xff]
        %v2742 = vld [vmem:[%s368 + $0x2b0] sm:$0xff]
        %v2743 = vld [vmem:[%s368 + $0x2b8] sm:$0xff]
        %v2744 = vld [vmem:[%s368 + $0x2c0] sm:$0xff]
        %v2745 = vld [vmem:[%s368 + $0x2c8] sm:$0xff]
        %v2746 = vld [vmem:[%s368 + $0x2d0] sm:$0xff]
        %v2747 = vld [vmem:[%s368 + $0x2d8] sm:$0xff]
        %v2748 = vld [vmem:[%s368 + $0x2e0] sm:$0xff]
        %v2749 = vld [vmem:[%s368 + $0x2e8] sm:$0xff]
        %v2750 = vld [vmem:[%s368 + $0x2f0] sm:$0xff]
        %v2751 = vld [vmem:[%s368 + $0x2f8] sm:$0xff]
        %v2752 = vld [vmem:[%s368 + $0x300] sm:$0xff]
        %v2753 = vld [vmem:[%s368 + $0x308] sm:$0xff]
        %v2754 = vld [vmem:[%s368 + $0x310] sm:$0xff]
        %v2755 = vld [vmem:[%s368 + $0x318] sm:$0xff]
        %v2756 = vld [vmem:[%s368 + $0x320] sm:$0xff]
        %v2757 = vld [vmem:[%s368 + $0x328] sm:$0xff]
        %v2758 = vld [vmem:[%s368 + $0x330] sm:$0xff]
        %v2759 = vld [vmem:[%s368 + $0x338] sm:$0xff]
        %v2760 = vld [vmem:[%s368 + $0x340] sm:$0xff]
        %v2761 = vld [vmem:[%s368 + $0x348] sm:$0xff]
        %v2762 = vld [vmem:[%s368 + $0x350] sm:$0xff]
        %v2763 = vld [vmem:[%s368 + $0x358] sm:$0xff]
        %v2764 = vld [vmem:[%s368 + $0x360] sm:$0xff]
        %v2765 = vld [vmem:[%s368 + $0x368] sm:$0xff]
        %v2766 = vld [vmem:[%s368 + $0x370] sm:$0xff]
        %v2767 = vld [vmem:[%s368 + $0x378] sm:$0xff]
        %v2768 = vld [vmem:[%s368 + $0x380] sm:$0xff]
        %v2769 = vld [vmem:[%s368 + $0x388] sm:$0xff]
        %v2770 = vld [vmem:[%s368 + $0x390] sm:$0xff]
        %v2771 = vld [vmem:[%s368 + $0x398] sm:$0xff]
        %v2772 = vld [vmem:[%s368 + $0x3a0] sm:$0xff]
        %v2773 = vld [vmem:[%s368 + $0x3a8] sm:$0xff]
        %v2774 = vld [vmem:[%s368 + $0x3b0] sm:$0xff]
        %v2775 = vld [vmem:[%s368 + $0x3b8] sm:$0xff]
        %v2776 = vld [vmem:[%s368 + $0x3c0] sm:$0xff]
        %v2777 = vld [vmem:[%s368 + $0x3c8] sm:$0xff]
        %v2778 = vld [vmem:[%s368 + $0x3d0] sm:$0xff]
        %v2779 = vld [vmem:[%s368 + $0x3d8] sm:$0xff]
        %v2780 = vld [vmem:[%s368 + $0x3e0] sm:$0xff]
        %v2781 = vld [vmem:[%s368 + $0x3e8] sm:$0xff]
        %v2782 = vld [vmem:[%s368 + $0x3f0] sm:$0xff]
        %v2783 = vld [vmem:[%s368 + $0x3f8] sm:$0xff]
        %v2912 = vunpack.c.l.b16 %v2656
        %v2913 = vunpack.c.h.b16 %v2656
        %v2914 = vunpack.c.l.b16 %v2657
        %v2915 = vunpack.c.h.b16 %v2657
        %v2916 = vunpack.c.l.b16 %v2658
        %v2917 = vunpack.c.h.b16 %v2658
        %v2918 = vunpack.c.l.b16 %v2659
        %v2919 = vunpack.c.h.b16 %v2659
        %v2920 = vunpack.c.l.b16 %v2660
        %v2921 = vunpack.c.h.b16 %v2660
        %v2922 = vunpack.c.l.b16 %v2661
        %v2923 = vunpack.c.h.b16 %v2661
        %v2924 = vunpack.c.l.b16 %v2662
        %v2925 = vunpack.c.h.b16 %v2662
        %v2926 = vunpack.c.l.b16 %v2663
        %v2927 = vunpack.c.h.b16 %v2663
        %v2928 = vunpack.c.l.b16 %v2664
        %v2929 = vunpack.c.h.b16 %v2664
        %v2930 = vunpack.c.l.b16 %v2665
        %v2931 = vunpack.c.h.b16 %v2665
        %v2932 = vunpack.c.l.b16 %v2666
        %v2933 = vunpack.c.h.b16 %v2666
        %v2934 = vunpack.c.l.b16 %v2667
        %v2935 = vunpack.c.h.b16 %v2667
        %v2936 = vunpack.c.l.b16 %v2668
        %v2937 = vunpack.c.h.b16 %v2668
        %v2938 = vunpack.c.l.b16 %v2669
        %v2939 = vunpack.c.h.b16 %v2669
        %v2940 = vunpack.c.l.b16 %v2670
        %v2941 = vunpack.c.h.b16 %v2670
        %v2942 = vunpack.c.l.b16 %v2671
        %v2943 = vunpack.c.h.b16 %v2671
        %v2944 = vunpack.c.l.b16 %v2672
        %v2945 = vunpack.c.h.b16 %v2672
        %v2946 = vunpack.c.l.b16 %v2673
        %v2947 = vunpack.c.h.b16 %v2673
        %v2948 = vunpack.c.l.b16 %v2674
        %v2949 = vunpack.c.h.b16 %v2674
        %v2950 = vunpack.c.l.b16 %v2675
        %v2951 = vunpack.c.h.b16 %v2675
        %v2952 = vunpack.c.l.b16 %v2676
        %v2953 = vunpack.c.h.b16 %v2676
        %v2954 = vunpack.c.l.b16 %v2677
        %v2955 = vunpack.c.h.b16 %v2677
        %v2956 = vunpack.c.l.b16 %v2678
        %v2957 = vunpack.c.h.b16 %v2678
        %v2958 = vunpack.c.l.b16 %v2679
        %v2959 = vunpack.c.h.b16 %v2679
        %v2960 = vunpack.c.l.b16 %v2680
        %v2961 = vunpack.c.h.b16 %v2680
        %v2962 = vunpack.c.l.b16 %v2681
        %v2963 = vunpack.c.h.b16 %v2681
        %v2964 = vunpack.c.l.b16 %v2682
        %v2965 = vunpack.c.h.b16 %v2682
        %v2966 = vunpack.c.l.b16 %v2683
        %v2967 = vunpack.c.h.b16 %v2683
        %v2968 = vunpack.c.l.b16 %v2684
        %v2969 = vunpack.c.h.b16 %v2684
        %v2970 = vunpack.c.l.b16 %v2685
        %v2971 = vunpack.c.h.b16 %v2685
        %v2972 = vunpack.c.l.b16 %v2686
        %v2973 = vunpack.c.h.b16 %v2686
        %v2974 = vunpack.c.l.b16 %v2687
        %v2975 = vunpack.c.h.b16 %v2687
        %v2976 = vunpack.c.l.b16 %v2688
        %v2977 = vunpack.c.h.b16 %v2688
        %v2978 = vunpack.c.l.b16 %v2689
        %v2979 = vunpack.c.h.b16 %v2689
        %v2980 = vunpack.c.l.b16 %v2690
        %v2981 = vunpack.c.h.b16 %v2690
        %v2982 = vunpack.c.l.b16 %v2691
        %v2983 = vunpack.c.h.b16 %v2691
        %v2984 = vunpack.c.l.b16 %v2692
        %v2985 = vunpack.c.h.b16 %v2692
        %v2986 = vunpack.c.l.b16 %v2693
        %v2987 = vunpack.c.h.b16 %v2693
        %v2988 = vunpack.c.l.b16 %v2694
        %v2989 = vunpack.c.h.b16 %v2694
        %v2990 = vunpack.c.l.b16 %v2695
        %v2991 = vunpack.c.h.b16 %v2695
        %v2992 = vunpack.c.l.b16 %v2696
        %v2993 = vunpack.c.h.b16 %v2696
        %v2994 = vunpack.c.l.b16 %v2697
        %v2995 = vunpack.c.h.b16 %v2697
        %v2996 = vunpack.c.l.b16 %v2698
        %v2997 = vunpack.c.h.b16 %v2698
        %v2998 = vunpack.c.l.b16 %v2699
        %v2999 = vunpack.c.h.b16 %v2699
        %v3000 = vunpack.c.l.b16 %v2700
        %v3001 = vunpack.c.h.b16 %v2700
        %v3002 = vunpack.c.l.b16 %v2701
        %v3003 = vunpack.c.h.b16 %v2701
        %v3004 = vunpack.c.l.b16 %v2702
        %v3005 = vunpack.c.h.b16 %v2702
        %v3006 = vunpack.c.l.b16 %v2703
        %v3007 = vunpack.c.h.b16 %v2703
        %v3008 = vunpack.c.l.b16 %v2704
        %v3009 = vunpack.c.h.b16 %v2704
        %v3010 = vunpack.c.l.b16 %v2705
        %v3011 = vunpack.c.h.b16 %v2705
        %v3012 = vunpack.c.l.b16 %v2706
        %v3013 = vunpack.c.h.b16 %v2706
        %v3014 = vunpack.c.l.b16 %v2707
        %v3015 = vunpack.c.h.b16 %v2707
        %v3016 = vunpack.c.l.b16 %v2708
        %v3017 = vunpack.c.h.b16 %v2708
        %v3018 = vunpack.c.l.b16 %v2709
        %v3019 = vunpack.c.h.b16 %v2709
        %v3020 = vunpack.c.l.b16 %v2710
        %v3021 = vunpack.c.h.b16 %v2710
        %v3022 = vunpack.c.l.b16 %v2711
        %v3023 = vunpack.c.h.b16 %v2711
        %v3024 = vunpack.c.l.b16 %v2712
        %v3025 = vunpack.c.h.b16 %v2712
        %v3026 = vunpack.c.l.b16 %v2713
        %v3027 = vunpack.c.h.b16 %v2713
        %v3028 = vunpack.c.l.b16 %v2714
        %v3029 = vunpack.c.h.b16 %v2714
        %v3030 = vunpack.c.l.b16 %v2715
        %v3031 = vunpack.c.h.b16 %v2715
        %v3032 = vunpack.c.l.b16 %v2716
        %v3033 = vunpack.c.h.b16 %v2716
        %v3034 = vunpack.c.l.b16 %v2717
        %v3035 = vunpack.c.h.b16 %v2717
        %v3036 = vunpack.c.l.b16 %v2718
        %v3037 = vunpack.c.h.b16 %v2718
        %v3038 = vunpack.c.l.b16 %v2719
        %v3039 = vunpack.c.h.b16 %v2719
        %v3040 = vunpack.c.l.b16 %v2720
        %v3041 = vunpack.c.h.b16 %v2720
        %v3042 = vunpack.c.l.b16 %v2721
        %v3043 = vunpack.c.h.b16 %v2721
        %v3044 = vunpack.c.l.b16 %v2722
        %v3045 = vunpack.c.h.b16 %v2722
        %v3046 = vunpack.c.l.b16 %v2723
        %v3047 = vunpack.c.h.b16 %v2723
        %v3048 = vunpack.c.l.b16 %v2724
        %v3049 = vunpack.c.h.b16 %v2724
        %v3050 = vunpack.c.l.b16 %v2725
        %v3051 = vunpack.c.h.b16 %v2725
        %v3052 = vunpack.c.l.b16 %v2726
        %v3053 = vunpack.c.h.b16 %v2726
        %v3054 = vunpack.c.l.b16 %v2727
        %v3055 = vunpack.c.h.b16 %v2727
        %v3056 = vunpack.c.l.b16 %v2728
        %v3057 = vunpack.c.h.b16 %v2728
        %v3058 = vunpack.c.l.b16 %v2729
        %v3059 = vunpack.c.h.b16 %v2729
        %v3060 = vunpack.c.l.b16 %v2730
        %v3061 = vunpack.c.h.b16 %v2730
        %v3062 = vunpack.c.l.b16 %v2731
        %v3063 = vunpack.c.h.b16 %v2731
        %v3064 = vunpack.c.l.b16 %v2732
        %v3065 = vunpack.c.h.b16 %v2732
        %v3066 = vunpack.c.l.b16 %v2733
        %v3067 = vunpack.c.h.b16 %v2733
        %v3068 = vunpack.c.l.b16 %v2734
        %v3069 = vunpack.c.h.b16 %v2734
        %v3070 = vunpack.c.l.b16 %v2735
        %v3071 = vunpack.c.h.b16 %v2735
        %v3072 = vunpack.c.l.b16 %v2736
        %v3073 = vunpack.c.h.b16 %v2736
        %v3074 = vunpack.c.l.b16 %v2737
        %v3075 = vunpack.c.h.b16 %v2737
        %v3076 = vunpack.c.l.b16 %v2738
        %v3077 = vunpack.c.h.b16 %v2738
        %v3078 = vunpack.c.l.b16 %v2739
        %v3079 = vunpack.c.h.b16 %v2739
        %v3080 = vunpack.c.l.b16 %v2740
        %v3081 = vunpack.c.h.b16 %v2740
        %v3082 = vunpack.c.l.b16 %v2741
        %v3083 = vunpack.c.h.b16 %v2741
        %v3084 = vunpack.c.l.b16 %v2742
        %v3085 = vunpack.c.h.b16 %v2742
        %v3086 = vunpack.c.l.b16 %v2743
        %v3087 = vunpack.c.h.b16 %v2743
        %v3088 = vunpack.c.l.b16 %v2744
        %v3089 = vunpack.c.h.b16 %v2744
        %v3090 = vunpack.c.l.b16 %v2745
        %v3091 = vunpack.c.h.b16 %v2745
        %v3092 = vunpack.c.l.b16 %v2746
        %v3093 = vunpack.c.h.b16 %v2746
        %v3094 = vunpack.c.l.b16 %v2747
        %v3095 = vunpack.c.h.b16 %v2747
        %v3096 = vunpack.c.l.b16 %v2748
        %v3097 = vunpack.c.h.b16 %v2748
        %v3098 = vunpack.c.l.b16 %v2749
        %v3099 = vunpack.c.h.b16 %v2749
        %v3100 = vunpack.c.l.b16 %v2750
        %v3101 = vunpack.c.h.b16 %v2750
        %v3102 = vunpack.c.l.b16 %v2751
        %v3103 = vunpack.c.h.b16 %v2751
        %v3104 = vunpack.c.l.b16 %v2752
        %v3105 = vunpack.c.h.b16 %v2752
        %v3106 = vunpack.c.l.b16 %v2753
        %v3107 = vunpack.c.h.b16 %v2753
        %v3108 = vunpack.c.l.b16 %v2754
        %v3109 = vunpack.c.h.b16 %v2754
        %v3110 = vunpack.c.l.b16 %v2755
        %v3111 = vunpack.c.h.b16 %v2755
        %v3112 = vunpack.c.l.b16 %v2756
        %v3113 = vunpack.c.h.b16 %v2756
        %v3114 = vunpack.c.l.b16 %v2757
        %v3115 = vunpack.c.h.b16 %v2757
        %v3116 = vunpack.c.l.b16 %v2758
        %v3117 = vunpack.c.h.b16 %v2758
        %v3118 = vunpack.c.l.b16 %v2759
        %v3119 = vunpack.c.h.b16 %v2759
        %v3120 = vunpack.c.l.b16 %v2760
        %v3121 = vunpack.c.h.b16 %v2760
        %v3122 = vunpack.c.l.b16 %v2761
        %v3123 = vunpack.c.h.b16 %v2761
        %v3124 = vunpack.c.l.b16 %v2762
        %v3125 = vunpack.c.h.b16 %v2762
        %v3126 = vunpack.c.l.b16 %v2763
        %v3127 = vunpack.c.h.b16 %v2763
        %v3128 = vunpack.c.l.b16 %v2764
        %v3129 = vunpack.c.h.b16 %v2764
        %v3130 = vunpack.c.l.b16 %v2765
        %v3131 = vunpack.c.h.b16 %v2765
        %v3132 = vunpack.c.l.b16 %v2766
        %v3133 = vunpack.c.h.b16 %v2766
        %v3134 = vunpack.c.l.b16 %v2767
        %v3135 = vunpack.c.h.b16 %v2767
        %v3136 = vunpack.c.l.b16 %v2768
        %v3137 = vunpack.c.h.b16 %v2768
        %v3138 = vunpack.c.l.b16 %v2769
        %v3139 = vunpack.c.h.b16 %v2769
        %v3140 = vunpack.c.l.b16 %v2770
        %v3141 = vunpack.c.h.b16 %v2770
        %v3142 = vunpack.c.l.b16 %v2771
        %v3143 = vunpack.c.h.b16 %v2771
        %v3144 = vunpack.c.l.b16 %v2772
        %v3145 = vunpack.c.h.b16 %v2772
        %v3146 = vunpack.c.l.b16 %v2773
        %v3147 = vunpack.c.h.b16 %v2773
        %v3148 = vunpack.c.l.b16 %v2774
        %v3149 = vunpack.c.h.b16 %v2774
        %v3150 = vunpack.c.l.b16 %v2775
        %v3151 = vunpack.c.h.b16 %v2775
        %v3152 = vunpack.c.l.b16 %v2776
        %v3153 = vunpack.c.h.b16 %v2776
        %v3154 = vunpack.c.l.b16 %v2777
        %v3155 = vunpack.c.h.b16 %v2777
        %v3156 = vunpack.c.l.b16 %v2778
        %v3157 = vunpack.c.h.b16 %v2778
        %v3158 = vunpack.c.l.b16 %v2779
        %v3159 = vunpack.c.h.b16 %v2779
        %v3160 = vunpack.c.l.b16 %v2780
        %v3161 = vunpack.c.h.b16 %v2780
        %v3162 = vunpack.c.l.b16 %v2781
        %v3163 = vunpack.c.h.b16 %v2781
        %v3164 = vunpack.c.l.b16 %v2782
        %v3165 = vunpack.c.h.b16 %v2782
        %v3166 = vunpack.c.l.b16 %v2783
        %v3167 = vunpack.c.h.b16 %v2783
        %v3168 = vpack.c.b16 %v2914, %v2912
        %v3169 = vpack.c.b16 %v2915, %v2913
        %v3170 = vpack.c.b16 %v2918, %v2916
        %v3171 = vpack.c.b16 %v2919, %v2917
        %v3172 = vpack.c.b16 %v2922, %v2920
        %v3173 = vpack.c.b16 %v2923, %v2921
        %v3174 = vpack.c.b16 %v2926, %v2924
        %v3175 = vpack.c.b16 %v2927, %v2925
        %v3176 = vpack.c.b16 %v2930, %v2928
        %v3177 = vpack.c.b16 %v2931, %v2929
        %v3178 = vpack.c.b16 %v2934, %v2932
        %v3179 = vpack.c.b16 %v2935, %v2933
        %v3180 = vpack.c.b16 %v2938, %v2936
        %v3181 = vpack.c.b16 %v2939, %v2937
        %v3182 = vpack.c.b16 %v2942, %v2940
        %v3183 = vpack.c.b16 %v2943, %v2941
        %v3184 = vpack.c.b16 %v2946, %v2944
        %v3185 = vpack.c.b16 %v2947, %v2945
        %v3186 = vpack.c.b16 %v2950, %v2948
        %v3187 = vpack.c.b16 %v2951, %v2949
        %v3188 = vpack.c.b16 %v2954, %v2952
        %v3189 = vpack.c.b16 %v2955, %v2953
        %v3190 = vpack.c.b16 %v2958, %v2956
        %v3191 = vpack.c.b16 %v2959, %v2957
        %v3192 = vpack.c.b16 %v2962, %v2960
        %v3193 = vpack.c.b16 %v2963, %v2961
        %v3194 = vpack.c.b16 %v2966, %v2964
        %v3195 = vpack.c.b16 %v2967, %v2965
        %v3196 = vpack.c.b16 %v2970, %v2968
        %v3197 = vpack.c.b16 %v2971, %v2969
        %v3198 = vpack.c.b16 %v2974, %v2972
        %v3199 = vpack.c.b16 %v2975, %v2973
        %v3200 = vpack.c.b16 %v2978, %v2976
        %v3201 = vpack.c.b16 %v2979, %v2977
        %v3202 = vpack.c.b16 %v2982, %v2980
        %v3203 = vpack.c.b16 %v2983, %v2981
        %v3204 = vpack.c.b16 %v2986, %v2984
        %v3205 = vpack.c.b16 %v2987, %v2985
        %v3206 = vpack.c.b16 %v2990, %v2988
        %v3207 = vpack.c.b16 %v2991, %v2989
        %v3208 = vpack.c.b16 %v2994, %v2992
        %v3209 = vpack.c.b16 %v2995, %v2993
        %v3210 = vpack.c.b16 %v2998, %v2996
        %v3211 = vpack.c.b16 %v2999, %v2997
        %v3212 = vpack.c.b16 %v3002, %v3000
        %v3213 = vpack.c.b16 %v3003, %v3001
        %v3214 = vpack.c.b16 %v3006, %v3004
        %v3215 = vpack.c.b16 %v3007, %v3005
        %v3216 = vpack.c.b16 %v3010, %v3008
        %v3217 = vpack.c.b16 %v3011, %v3009
        %v3218 = vpack.c.b16 %v3014, %v3012
        %v3219 = vpack.c.b16 %v3015, %v3013
        %v3220 = vpack.c.b16 %v3018, %v3016
        %v3221 = vpack.c.b16 %v3019, %v3017
        %v3222 = vpack.c.b16 %v3022, %v3020
        %v3223 = vpack.c.b16 %v3023, %v3021
        %v3224 = vpack.c.b16 %v3026, %v3024
        %v3225 = vpack.c.b16 %v3027, %v3025
        %v3226 = vpack.c.b16 %v3030, %v3028
        %v3227 = vpack.c.b16 %v3031, %v3029
        %v3228 = vpack.c.b16 %v3034, %v3032
        %v3229 = vpack.c.b16 %v3035, %v3033
        %v3230 = vpack.c.b16 %v3038, %v3036
        %v3231 = vpack.c.b16 %v3039, %v3037
        %v3232 = vpack.c.b16 %v3042, %v3040
        %v3233 = vpack.c.b16 %v3043, %v3041
        %v3234 = vpack.c.b16 %v3046, %v3044
        %v3235 = vpack.c.b16 %v3047, %v3045
        %v3236 = vpack.c.b16 %v3050, %v3048
        %v3237 = vpack.c.b16 %v3051, %v3049
        %v3238 = vpack.c.b16 %v3054, %v3052
        %v3239 = vpack.c.b16 %v3055, %v3053
        %v3240 = vpack.c.b16 %v3058, %v3056
        %v3241 = vpack.c.b16 %v3059, %v3057
        %v3242 = vpack.c.b16 %v3062, %v3060
        %v3243 = vpack.c.b16 %v3063, %v3061
        %v3244 = vpack.c.b16 %v3066, %v3064
        %v3245 = vpack.c.b16 %v3067, %v3065
        %v3246 = vpack.c.b16 %v3070, %v3068
        %v3247 = vpack.c.b16 %v3071, %v3069
        %v3248 = vpack.c.b16 %v3074, %v3072
        %v3249 = vpack.c.b16 %v3075, %v3073
        %v3250 = vpack.c.b16 %v3078, %v3076
        %v3251 = vpack.c.b16 %v3079, %v3077
        %v3252 = vpack.c.b16 %v3082, %v3080
        %v3253 = vpack.c.b16 %v3083, %v3081
        %v3254 = vpack.c.b16 %v3086, %v3084
        %v3255 = vpack.c.b16 %v3087, %v3085
        %v3256 = vpack.c.b16 %v3090, %v3088
        %v3257 = vpack.c.b16 %v3091, %v3089
        %v3258 = vpack.c.b16 %v3094, %v3092
        %v3259 = vpack.c.b16 %v3095, %v3093
        %v3260 = vpack.c.b16 %v3098, %v3096
        %v3261 = vpack.c.b16 %v3099, %v3097
        %v3262 = vpack.c.b16 %v3102, %v3100
        %v3263 = vpack.c.b16 %v3103, %v3101
        %v3264 = vpack.c.b16 %v3106, %v3104
        %v3265 = vpack.c.b16 %v3107, %v3105
        %v3266 = vpack.c.b16 %v3110, %v3108
        %v3267 = vpack.c.b16 %v3111, %v3109
        %v3268 = vpack.c.b16 %v3114, %v3112
        %v3269 = vpack.c.b16 %v3115, %v3113
        %v3270 = vpack.c.b16 %v3118, %v3116
        %v3271 = vpack.c.b16 %v3119, %v3117
        %v3272 = vpack.c.b16 %v3122, %v3120
        %v3273 = vpack.c.b16 %v3123, %v3121
        %v3274 = vpack.c.b16 %v3126, %v3124
        %v3275 = vpack.c.b16 %v3127, %v3125
        %v3276 = vpack.c.b16 %v3130, %v3128
        %v3277 = vpack.c.b16 %v3131, %v3129
        %v3278 = vpack.c.b16 %v3134, %v3132
        %v3279 = vpack.c.b16 %v3135, %v3133
        %v3280 = vpack.c.b16 %v3138, %v3136
        %v3281 = vpack.c.b16 %v3139, %v3137
        %v3282 = vpack.c.b16 %v3142, %v3140
        %v3283 = vpack.c.b16 %v3143, %v3141
        %v3284 = vpack.c.b16 %v3146, %v3144
        %v3285 = vpack.c.b16 %v3147, %v3145
        %v3286 = vpack.c.b16 %v3150, %v3148
        %v3287 = vpack.c.b16 %v3151, %v3149
        %v3288 = vpack.c.b16 %v3154, %v3152
        %v3289 = vpack.c.b16 %v3155, %v3153
        %v3290 = vpack.c.b16 %v3158, %v3156
        %v3291 = vpack.c.b16 %v3159, %v3157
        %v3292 = vpack.c.b16 %v3162, %v3160
        %v3293 = vpack.c.b16 %v3163, %v3161
        %v3294 = vpack.c.b16 %v3166, %v3164
        %v3295 = vpack.c.b16 %v3167, %v3165
        %3424 = vmatpush.bf16.msra.mxu0 %v3182
        %3425 = vmatpush.bf16.msra.mxu0 %v3180
        %3426 = vmatpush.bf16.msra.mxu0 %v3178
        %3427 = vmatpush.bf16.msra.mxu0 %v3176
        %3428 = vmatpush.bf16.msra.mxu0 %v3174
        %3429 = vmatpush.bf16.msra.mxu0 %v3172
        %3430 = vmatpush.bf16.msra.mxu0 %v3170
        %3431 = vmatpush.bf16.msra.mxu0 %v3168
        %3432 = vmatmul.bf16.gmra.mxu0 %v2648
        %v3433 = vpop.f32.mrf.mxu0
        %v3434 = vadd.f32 0.0, %v3433
        %v3435 = vpop.f32.mrf.mxu0
        %v3436 = vadd.f32 0.0, %v3435
        %3437 = vdwg.mxu0
        %3438 = vmatpush.bf16.msra.mxu0 %v3198
        %3439 = vmatpush.bf16.msra.mxu0 %v3196
        %3440 = vmatpush.bf16.msra.mxu0 %v3194
        %3441 = vmatpush.bf16.msra.mxu0 %v3192
        %3442 = vmatpush.bf16.msra.mxu0 %v3190
        %3443 = vmatpush.bf16.msra.mxu0 %v3188
        %3444 = vmatpush.bf16.msra.mxu0 %v3186
        %3445 = vmatpush.bf16.msra.mxu0 %v3184
        %3446 = vmatmul.bf16.gmra.mxu0 %v2649
        %v3447 = vpop.f32.mrf.mxu0
        %v3448 = vadd.f32 %v3434, %v3447
        %v3449 = vpop.f32.mrf.mxu0
        %v3450 = vadd.f32 %v3436, %v3449
        %3451 = vdwg.mxu0
        %3452 = vmatpush.bf16.msra.mxu0 %v3214
        %3453 = vmatpush.bf16.msra.mxu0 %v3212
        %3454 = vmatpush.bf16.msra.mxu0 %v3210
        %3455 = vmatpush.bf16.msra.mxu0 %v3208
        %3456 = vmatpush.bf16.msra.mxu0 %v3206
        %3457 = vmatpush.bf16.msra.mxu0 %v3204
        %3458 = vmatpush.bf16.msra.mxu0 %v3202
        %3459 = vmatpush.bf16.msra.mxu0 %v3200
        %3460 = vmatmul.bf16.gmra.mxu0 %v2650
        %v3461 = vpop.f32.mrf.mxu0
        %v3462 = vadd.f32 %v3448, %v3461
        %v3463 = vpop.f32.mrf.mxu0
        %v3464 = vadd.f32 %v3450, %v3463
        %3465 = vdwg.mxu0
        %3466 = vmatpush.bf16.msra.mxu0 %v3230
        %3467 = vmatpush.bf16.msra.mxu0 %v3228
        %3468 = vmatpush.bf16.msra.mxu0 %v3226
        %3469 = vmatpush.bf16.msra.mxu0 %v3224
        %3470 = vmatpush.bf16.msra.mxu0 %v3222
        %3471 = vmatpush.bf16.msra.mxu0 %v3220
        %3472 = vmatpush.bf16.msra.mxu0 %v3218
        %3473 = vmatpush.bf16.msra.mxu0 %v3216
        %3474 = vmatmul.bf16.gmra.mxu0 %v2651
        %v3475 = vpop.f32.mrf.mxu0
        %v3476 = vadd.f32 %v3462, %v3475
        %v3477 = vpop.f32.mrf.mxu0
        %v3478 = vadd.f32 %v3464, %v3477
        %3479 = vdwg.mxu0
        %3480 = vmatpush.bf16.msra.mxu0 %v3246
        %3481 = vmatpush.bf16.msra.mxu0 %v3244
        %3482 = vmatpush.bf16.msra.mxu0 %v3242
        %3483 = vmatpush.bf16.msra.mxu0 %v3240
        %3484 = vmatpush.bf16.msra.mxu0 %v3238
        %3485 = vmatpush.bf16.msra.mxu0 %v3236
        %3486 = vmatpush.bf16.msra.mxu0 %v3234
        %3487 = vmatpush.bf16.msra.mxu0 %v3232
        %3488 = vmatmul.bf16.gmra.mxu0 %v2652
        %v3489 = vpop.f32.mrf.mxu0
        %v3490 = vadd.f32 %v3476, %v3489
        %v3491 = vpop.f32.mrf.mxu0
        %v3492 = vadd.f32 %v3478, %v3491
        %3493 = vdwg.mxu0
        %3494 = vmatpush.bf16.msra.mxu0 %v3262
        %3495 = vmatpush.bf16.msra.mxu0 %v3260
        %3496 = vmatpush.bf16.msra.mxu0 %v3258
        %3497 = vmatpush.bf16.msra.mxu0 %v3256
        %3498 = vmatpush.bf16.msra.mxu0 %v3254
        %3499 = vmatpush.bf16.msra.mxu0 %v3252
        %3500 = vmatpush.bf16.msra.mxu0 %v3250
        %3501 = vmatpush.bf16.msra.mxu0 %v3248
        %3502 = vmatmul.bf16.gmra.mxu0 %v2653
        %v3503 = vpop.f32.mrf.mxu0
        %v3504 = vadd.f32 %v3490, %v3503
        %v3505 = vpop.f32.mrf.mxu0
        %v3506 = vadd.f32 %v3492, %v3505
        %3507 = vdwg.mxu0
        %3508 = vmatpush.bf16.msra.mxu0 %v3278
        %3509 = vmatpush.bf16.msra.mxu0 %v3276
        %3510 = vmatpush.bf16.msra.mxu0 %v3274
        %3511 = vmatpush.bf16.msra.mxu0 %v3272
        %3512 = vmatpush.bf16.msra.mxu0 %v3270
        %3513 = vmatpush.bf16.msra.mxu0 %v3268
        %3514 = vmatpush.bf16.msra.mxu0 %v3266
        %3515 = vmatpush.bf16.msra.mxu0 %v3264
        %3516 = vmatmul.bf16.gmra.mxu0 %v2654
        %v3517 = vpop.f32.mrf.mxu0
        %v3518 = vadd.f32 %v3504, %v3517
        %v3519 = vpop.f32.mrf.mxu0
        %v3520 = vadd.f32 %v3506, %v3519
        %3521 = vdwg.mxu0
        %3522 = vmatpush.bf16.msra.mxu0 %v3294
        %3523 = vmatpush.bf16.msra.mxu0 %v3292
        %3524 = vmatpush.bf16.msra.mxu0 %v3290
        %3525 = vmatpush.bf16.msra.mxu0 %v3288
        %3526 = vmatpush.bf16.msra.mxu0 %v3286
        %3527 = vmatpush.bf16.msra.mxu0 %v3284
        %3528 = vmatpush.bf16.msra.mxu0 %v3282
        %3529 = vmatpush.bf16.msra.mxu0 %v3280
        %3530 = vmatmul.bf16.gmra.mxu0 %v2655
        %v3531 = vpop.f32.mrf.mxu0
        %v3532 = vadd.f32 %v3518, %v3531
        %v3533 = vpop.f32.mrf.mxu0
        %v3534 = vadd.f32 %v3520, %v3533
        %3535 = vdwg.mxu0
        %3536 = vmatpush.bf16.msra.mxu0 %v3183
        %3537 = vmatpush.bf16.msra.mxu0 %v3181
        %3538 = vmatpush.bf16.msra.mxu0 %v3179
        %3539 = vmatpush.bf16.msra.mxu0 %v3177
        %3540 = vmatpush.bf16.msra.mxu0 %v3175
        %3541 = vmatpush.bf16.msra.mxu0 %v3173
        %3542 = vmatpush.bf16.msra.mxu0 %v3171
        %3543 = vmatpush.bf16.msra.mxu0 %v3169
        %3544 = vmatmul.bf16.gmra.mxu0 %v2648
        %v3545 = vpop.f32.mrf.mxu0
        %v3546 = vadd.f32 0.0, %v3545
        %v3547 = vpop.f32.mrf.mxu0
        %v3548 = vadd.f32 0.0, %v3547
        %3549 = vdwg.mxu0
        %3550 = vmatpush.bf16.msra.mxu0 %v3199
        %3551 = vmatpush.bf16.msra.mxu0 %v3197
        %3552 = vmatpush.bf16.msra.mxu0 %v3195
        %3553 = vmatpush.bf16.msra.mxu0 %v3193
        %3554 = vmatpush.bf16.msra.mxu0 %v3191
        %3555 = vmatpush.bf16.msra.mxu0 %v3189
        %3556 = vmatpush.bf16.msra.mxu0 %v3187
        %3557 = vmatpush.bf16.msra.mxu0 %v3185
        %3558 = vmatmul.bf16.gmra.mxu0 %v2649
        %v3559 = vpop.f32.mrf.mxu0
        %v3560 = vadd.f32 %v3546, %v3559
        %v3561 = vpop.f32.mrf.mxu0
        %v3562 = vadd.f32 %v3548, %v3561
        %3563 = vdwg.mxu0
        %3564 = vmatpush.bf16.msra.mxu0 %v3215
        %3565 = vmatpush.bf16.msra.mxu0 %v3213
        %3566 = vmatpush.bf16.msra.mxu0 %v3211
        %3567 = vmatpush.bf16.msra.mxu0 %v3209
        %3568 = vmatpush.bf16.msra.mxu0 %v3207
        %3569 = vmatpush.bf16.msra.mxu0 %v3205
        %3570 = vmatpush.bf16.msra.mxu0 %v3203
        %3571 = vmatpush.bf16.msra.mxu0 %v3201
        %3572 = vmatmul.bf16.gmra.mxu0 %v2650
        %v3573 = vpop.f32.mrf.mxu0
        %v3574 = vadd.f32 %v3560, %v3573
        %v3575 = vpop.f32.mrf.mxu0
        %v3576 = vadd.f32 %v3562, %v3575
        %3577 = vdwg.mxu0
        %3578 = vmatpush.bf16.msra.mxu0 %v3231
        %3579 = vmatpush.bf16.msra.mxu0 %v3229
        %3580 = vmatpush.bf16.msra.mxu0 %v3227
        %3581 = vmatpush.bf16.msra.mxu0 %v3225
        %3582 = vmatpush.bf16.msra.mxu0 %v3223
        %3583 = vmatpush.bf16.msra.mxu0 %v3221
        %3584 = vmatpush.bf16.msra.mxu0 %v3219
        %3585 = vmatpush.bf16.msra.mxu0 %v3217
        %3586 = vmatmul.bf16.gmra.mxu0 %v2651
        %v3587 = vpop.f32.mrf.mxu0
        %v3588 = vadd.f32 %v3574, %v3587
        %v3589 = vpop.f32.mrf.mxu0
        %v3590 = vadd.f32 %v3576, %v3589
        %3591 = vdwg.mxu0
        %3592 = vmatpush.bf16.msra.mxu0 %v3247
        %3593 = vmatpush.bf16.msra.mxu0 %v3245
        %3594 = vmatpush.bf16.msra.mxu0 %v3243
        %3595 = vmatpush.bf16.msra.mxu0 %v3241
        %3596 = vmatpush.bf16.msra.mxu0 %v3239
        %3597 = vmatpush.bf16.msra.mxu0 %v3237
        %3598 = vmatpush.bf16.msra.mxu0 %v3235
        %3599 = vmatpush.bf16.msra.mxu0 %v3233
        %3600 = vmatmul.bf16.gmra.mxu0 %v2652
        %v3601 = vpop.f32.mrf.mxu0
        %v3602 = vadd.f32 %v3588, %v3601
        %v3603 = vpop.f32.mrf.mxu0
        %v3604 = vadd.f32 %v3590, %v3603
        %3605 = vdwg.mxu0
        %3606 = vmatpush.bf16.msra.mxu0 %v3263
        %3607 = vmatpush.bf16.msra.mxu0 %v3261
        %3608 = vmatpush.bf16.msra.mxu0 %v3259
        %3609 = vmatpush.bf16.msra.mxu0 %v3257
        %3610 = vmatpush.bf16.msra.mxu0 %v3255
        %3611 = vmatpush.bf16.msra.mxu0 %v3253
        %3612 = vmatpush.bf16.msra.mxu0 %v3251
        %3613 = vmatpush.bf16.msra.mxu0 %v3249
        %3614 = vmatmul.bf16.gmra.mxu0 %v2653
        %v3615 = vpop.f32.mrf.mxu0
        %v3616 = vadd.f32 %v3602, %v3615
        %v3617 = vpop.f32.mrf.mxu0
        %v3618 = vadd.f32 %v3604, %v3617
        %3619 = vdwg.mxu0
        %3620 = vmatpush.bf16.msra.mxu0 %v3279
        %3621 = vmatpush.bf16.msra.mxu0 %v3277
        %3622 = vmatpush.bf16.msra.mxu0 %v3275
        %3623 = vmatpush.bf16.msra.mxu0 %v3273
        %3624 = vmatpush.bf16.msra.mxu0 %v3271
        %3625 = vmatpush.bf16.msra.mxu0 %v3269
        %3626 = vmatpush.bf16.msra.mxu0 %v3267
        %3627 = vmatpush.bf16.msra.mxu0 %v3265
        %3628 = vmatmul.bf16.gmra.mxu0 %v2654
        %v3629 = vpop.f32.mrf.mxu0
        %v3630 = vadd.f32 %v3616, %v3629
        %v3631 = vpop.f32.mrf.mxu0
        %v3632 = vadd.f32 %v3618, %v3631
        %3633 = vdwg.mxu0
        %3634 = vmatpush.bf16.msra.mxu0 %v3295
        %3635 = vmatpush.bf16.msra.mxu0 %v3293
        %3636 = vmatpush.bf16.msra.mxu0 %v3291
        %3637 = vmatpush.bf16.msra.mxu0 %v3289
        %3638 = vmatpush.bf16.msra.mxu0 %v3287
        %3639 = vmatpush.bf16.msra.mxu0 %v3285
        %3640 = vmatpush.bf16.msra.mxu0 %v3283
        %3641 = vmatpush.bf16.msra.mxu0 %v3281
        %3642 = vmatmul.bf16.gmra.mxu0 %v2655
        %v3643 = vpop.f32.mrf.mxu0
        %v3644 = vadd.f32 %v3630, %v3643
        %v3645 = vpop.f32.mrf.mxu0
        %v3646 = vadd.f32 %v3632, %v3645
        %3647 = vdwg.mxu0
        %v3648 = vadd.f32 %v2644, %v3532
        %v3649 = vadd.f32 %v2645, %v3644
        %v3650 = vadd.f32 %v2646, %v3534
        %v3651 = vadd.f32 %v2647, %v3646
        %3652 = vst [vmem:[%s421] sm:$0xff] %v3648
        %3653 = vst [vmem:[%s421 + $0x8] sm:$0xff] %v3649
        %3654 = vst [vmem:[%s421 + $0x10] sm:$0xff] %v3650
        %3655 = vst [vmem:[%s421 + $0x18] sm:$0xff] %v3651
        // Predicated region
        $region61: #{predictor_forward.1} parent=47 // pred_check
          %p3656 = pneg %p455
        $region62: #{predictor_forward.1} parent=47 // pred_check_branch
          %3658 = sbr.rel (%p3656) target = $region64
        $region63: #{predictor_forward.1} parent=47 // pred_region
          %v3659 = vld [vmem:[%s421] sm:$0xff]
          %v3660 = vld [vmem:[%s421 + $0x8] sm:$0xff]
          %v3661 = vld [vmem:[%s421 + $0x10] sm:$0xff]
          %v3662 = vld [vmem:[%s421 + $0x18] sm:$0xff]
          %v3663 = vld [vmem:[%s451] sm:$0x3]
          %v3665 = vperm.slane %v3663, 0
          %v3666 = vperm.slane %v3663, 1
          %v3669 = vadd.f32 %v3659, %v3665
          %v3670 = vadd.f32 %v3660, %v3666
          %v3671 = vadd.f32 %v3661, %v3665
          %v3672 = vadd.f32 %v3662, %v3666
          %3673 = vst [vmem:[%s421] sm:$0xff] %v3669
          %3674 = vst [vmem:[%s421 + $0x8] sm:$0xff] %v3670
          %3675 = vst [vmem:[%s421 + $0x10] sm:$0xff] %v3671
          %3676 = vst [vmem:[%s421 + $0x18] sm:$0xff] %v3672
        $region64: #{predictor_forward.1} parent=47 // pred_fallthru
          _
        %s3677 = sand.u32 %s235, 1
        %s3678 = sand.u32 %s235, 1
        %s3679 = smul.addr %s3678, 32
        %s3680 = scalar_lea.vmem [#allocation6], %s3679
        // Predicated region
        $region65: #{predictor_forward.1} parent=47 // pred_check
          %p3681 = pneg %p245
        $region66: #{predictor_forward.1} parent=47 // pred_check_branch
          %3683 = sbr.rel (%p3681) target = $region68
        $region67: #{predictor_forward.1} parent=47 // pred_region
          %s3684 = smul.u32 2, %s27
          %s3685 = smul.u32 2, %s28
          %s3686 = smul.addr %s3684, 4
          %s3687 = sadd.s32 %s3685, %s3686
          %s3688 = smul.addr %s3687, 8
          %s3689 = scalar_lea.vmem %s7, %s3688
          // Predicated region
          $region69: #{predictor_forward.1} parent=67 // pred_check
            _
          $region70: #{predictor_forward.1} parent=67 // pred_check_branch
            %3691 = sbr.rel (0) target = $region72
          $region71: #{predictor_forward.1} parent=67 // pred_region
            // Predicated region
            $region73: #{predictor_forward.1} parent=71 // pred_check
              _
            $region74: #{predictor_forward.1} parent=71 // pred_check_branch
              %3693 = sbr.rel (0) target = $region76
            $region75: #{predictor_forward.1} parent=71 // pred_region
              loop: start=0, step=1, limit=1
              $region77: #{predictor_forward.1} parent=75 // loop_pre_header
                _
              $region78: #{predictor_forward.1} parent=75 // loop_header
                %s3695 = sphi 0, %s3699
                %p3696 = scmp.ge.s32.totalorder %s3695, 1
                %s3700 = sphi %s3680, %s3680
                %s3701 = sphi %s3689, %s3689
              $region79: #{predictor_forward.1} parent=75 // loop_header_branch
                %3698 = sbr.rel (%p3696) target = $region83
              $region80: #{predictor_forward.1} parent=75 // loop_body
                %v3702 = vld [vmem:[%s3700] sm:$0xff]
                %3703 = vst [vmem:[%s3701] sm:$0xff] %v3702
                %v3704 = vld [vmem:[%s3700 + $0x8] sm:$0xff]
                %3705 = vst [vmem:[%s3701 + $0x8] sm:$0xff] %v3704
                %v3706 = vld [vmem:[%s3700 + $0x10] sm:$0xff]
                %3707 = vst [vmem:[%s3701 + $0x20] sm:$0xff] %v3706
                %v3708 = vld [vmem:[%s3700 + $0x18] sm:$0xff]
                %3709 = vst [vmem:[%s3701 + $0x28] sm:$0xff] %v3708
              $region81: #{predictor_forward.1} parent=75 // loop_footer
                %s3699 = sadd.s32 1, %s3695
              $region82: #{predictor_forward.1} parent=75 // loop_footer_branch
                %3694 = sbr.rel target = $region78
              $region83: #{predictor_forward.1} parent=75 // loop_exit
                _
            $region76: #{predictor_forward.1} parent=71 // pred_fallthru
              _
            // Predicated region
            $region84: #{predictor_forward.1} parent=71 // pred_check
              _
            $region85: #{predictor_forward.1} parent=71 // pred_check_branch
              %3711 = sbr.rel target = $region87
            $region86: #{predictor_forward.1} parent=71 // pred_region
              _
            $region87: #{predictor_forward.1} parent=71 // pred_fallthru
              _
          $region72: #{predictor_forward.1} parent=67 // pred_fallthru
            _
          %3712 = vnop
        $region68: #{predictor_forward.1} parent=47 // pred_fallthru
          _
      $region48: #{predictor_forward.1} parent=5 // pred_fallthru
        _
      %p3713 = scmp.le.s32.totalorder 2, %s17
      // Predicated region
      $region88: #{predictor_forward.1} parent=5 // pred_check
        %p3714 = pneg %p3713
      $region89: #{predictor_forward.1} parent=5 // pred_check_branch
        %3716 = sbr.rel (%p3714) target = $region91
      $region90: #{predictor_forward.1} parent=5 // pred_region
        %s3717 = ssub.s32 %s17, 2
        // Predicated region
        $region92: #{predictor_forward.1} parent=90 // pred_check
          %p3718 = pneg %p251
        $region93: #{predictor_forward.1} parent=90 // pred_check_branch
          %3720 = sbr.rel (%p3718) target = $region95
        $region94: #{predictor_forward.1} parent=90 // pred_region
          %s3721 = sand.u32 %s236, 1
          %s3722 = sand.u32 %s236, 1
          %s3723 = smul.addr %s3722, 32
          %s3724 = scalar_lea.vmem [#allocation6], %s3723
        $region95: #{predictor_forward.1} parent=90 // pred_fallthru
          _
      $region91: #{predictor_forward.1} parent=5 // pred_fallthru
        _
    $region6: #{predictor_forward.1} parent=1 // loop_footer
      %s21 = sadd.s32 1, %s17
    $region7: #{predictor_forward.1} parent=1 // loop_footer_branch
      %16 = sbr.rel target = $region3
    $region8: #{predictor_forward.1} parent=1 // loop_exit
      _
    %3725 = vsyncpa [#allocation3], 1
    %s3726 = scalar_lea.sflag [#allocation3], 1
    %3727 = vsyncpa %s3726, 1
    %3728 = vsyncpa [#allocation5], 1
    %s3729 = scalar_lea.sflag [#allocation5], 1
    %3730 = vsyncpa %s3729, 1

</llo_original>
